<compile_context>
chip_gen: v7x
topology: tpu7x:2x2x1
jax: 0.10.0
libtpu: 0.0.40
codegen_flags: <defaults>
</compile_context>

<pallas_src>
import functools

import jax
import jax.numpy as jnp
from jax.experimental import pallas as pl
from jax.experimental.pallas import tpu as pltpu  # noqa: F401  (TPU backend)


# -----------------------------------------------------------------------------
# Fused kernel: 2-layer bidirectional LSTM (both sentences) + classification head
# -----------------------------------------------------------------------------
def siagru_kernel(x_ref, wih0_ref, b0_ref, whh0_ref,
                  wih1_ref, b1_ref, whh1_ref,
                  w1_ref, hb1_ref, w2_ref, hb2_ref,
                  out_ref, *, seq_len):
    # x_ref:    (L*Bp, E)  time-major flattened embeddings, row = t*Bp + j
    #           rows j in [0,B): sentence a, [B,2B): sentence b, rest padding.
    # wih{l}:   (D_in, 8H) = [W_ih_fwd^T | W_ih_bwd^T]   (gate order i,f,g,o)
    # b{l}:     (1, 8H)    = [b_ih+b_hh fwd | bwd]
    # whh{l}:   (2H, 8H)   block-diag: [h_fwd | h_bwd] @ whh -> both directions
    # w1/hb1:   (16H, H) / (1, H)   head Linear1 (pre-transposed)
    # w2/hb2:   (H, C)   / (1, C)   head Linear2 (pre-transposed)
    # out_ref:  (B, C)     softmax probabilities
    f32 = jnp.float32
    L = seq_len
    B = out_ref.shape[0]
    Bp = x_ref.shape[0] // L           # padded stacked batch (multiple of 8)
    H = whh0_ref.shape[0] // 2

    def run_layer(x_flat, wih_ref_l, b_ref_l, whh_ref_l):
        """One bidirectional LSTM layer over the whole padded batch.

        Returns list of per-time-step outputs out[t] = [h_fwd(t) | h_bwd(t)],
        each of shape (Bp, 2H).
        """
        # Hoisted input projection: one large MXU matmul covering every time
        # step and both directions.
        gin = jnp.dot(x_flat, wih_ref_l[...],
                      preferred_element_type=f32) + b_ref_l[...]   # (L*Bp, 8H)
        whh = whh_ref_l[...]                                       # (2H, 8H)

        h_both = jnp.zeros((Bp, 2 * H), f32)   # [h_fwd | h_bwd]
        c_f = jnp.zeros((Bp, H), f32)
        c_b = jnp.zeros((Bp, H), f32)
        h_fwd = [None] * L
        h_bwd = [None] * L

        def cell(g4, c_prev):
            # PyTorch LSTM gate order [i, f, g, o].
            i_g = jax.nn.sigmoid(g4[:, 0 * H:1 * H])
            f_g = jax.nn.sigmoid(g4[:, 1 * H:2 * H])
            g_g = jnp.tanh(g4[:, 2 * H:3 * H])
            o_g = jax.nn.sigmoid(g4[:, 3 * H:4 * H])
            c_new = f_g * c_prev + i_g * g_g
            return o_g * jnp.tanh(c_new), c_new

        # Fully unrolled recurrence: only the single 256-wide recurrent matmul
        # sits on the serial dependence chain.
        for t in range(L):
            tr = L - 1 - t
            rec = jnp.dot(h_both, whh, preferred_element_type=f32)  # (Bp, 8H)
            g_f = gin[t * Bp:(t + 1) * Bp, 0:4 * H] + rec[:, 0:4 * H]
            g_b = gin[tr * Bp:(tr + 1) * Bp, 4 * H:8 * H] + rec[:, 4 * H:8 * H]
            h_f, c_f = cell(g_f, c_f)
            h_b, c_b = cell(g_b, c_b)
            h_fwd[t] = h_f            # forward hidden for position t
            h_bwd[tr] = h_b           # backward hidden for position L-1-t
            h_both = jnp.concatenate([h_f, h_b], axis=1)
        return [jnp.concatenate([h_fwd[s], h_bwd[s]], axis=1) for s in range(L)]

    # ---- 2-layer bidirectional LSTM on [sentence_a ; sentence_b ; pad] ------
    x0 = x_ref[...].astype(f32)
    out0 = run_layer(x0, wih0_ref, b0_ref, whh0_ref)     # list of (Bp, 2H)
    x1 = jnp.concatenate(out0, axis=0)                   # (L*Bp, 2H)
    out1 = run_layer(x1, wih1_ref, b1_ref, whh1_ref)

    # ---- head: feature enhancement + max/avg pooling over the sequence ------
    # Pool each enhancement piece separately; concatenate only pooled results.
    zero = jnp.zeros((B, 2 * H), f32)
    ninf = jnp.full((B, 2 * H), -jnp.inf, f32)
    sum_a = sum_b = sum_p = zero
    max_a = max_b = max_d = max_p = ninf
    for s in range(L):
        blk = out1[s]                 # (Bp, 2H)
        oa = blk[0:B, :]
        ob = blk[B:2 * B, :]
        prod = oa * ob
        sum_a = sum_a + oa
        sum_b = sum_b + ob
        sum_p = sum_p + prod
        max_a = jnp.maximum(max_a, oa)
        max_b = jnp.maximum(max_b, ob)
        max_d = jnp.maximum(max_d, oa - ob)
        max_p = jnp.maximum(max_p, prod)
    inv_l = 1.0 / L
    mean_a = sum_a * inv_l
    mean_b = sum_b * inv_l
    # feat order matches torch.cat([p1(avg), p2(max)], 1) with pieces
    # [oa, ob, oa-ob, oa*ob] each.
    feat = jnp.concatenate(
        [mean_a, mean_b, mean_a - mean_b, sum_p * inv_l,
         max_a, max_b, max_d, max_p], axis=1)            # (B, 16H)

    hidden = jnp.tanh(
        jnp.dot(feat, w1_ref[...], preferred_element_type=f32) + hb1_ref[...])
    # TODO(synk): Dropout(0.5) is identity here (inference semantics).
    logits = jnp.dot(hidden, w2_ref[...], preferred_element_type=f32) + hb2_ref[...]

    m = jnp.max(logits, axis=-1, keepdims=True)
    e = jnp.exp(logits - m)
    denom = jnp.sum(e, axis=-1, keepdims=True)
    out_ref[...] = (e * pl.reciprocal(denom, approx=True)).astype(out_ref.dtype)


def _vmem_spec(shape):
    zeros = (0,) * len(shape)
    return pl.BlockSpec(shape, lambda: zeros)


# -----------------------------------------------------------------------------
# Parameters (PyTorch-shaped weights, pre-fused for the kernel)
# -----------------------------------------------------------------------------
def init_params(key, vocab_size, emb_size, hidden_size, class_num):
    keys = iter(jax.random.split(key, 32))
    scale = 0.1
    H = hidden_size

    def lstm_dir(d_in):
        # nn.LSTM parameter shapes, gate order [i, f, g, o].
        w_ih = scale * jax.random.normal(next(keys), (4 * H, d_in), jnp.float32)
        w_hh = scale * jax.random.normal(next(keys), (4 * H, H), jnp.float32)
        b_ih = scale * jax.random.normal(next(keys), (4 * H,), jnp.float32)
        b_hh = scale * jax.random.normal(next(keys), (4 * H,), jnp.float32)
        return w_ih, w_hh, b_ih + b_hh

    params = {
        "embedding": scale * jax.random.normal(
            next(keys), (vocab_size, emb_size), jnp.float32),
    }
    for layer, d_in in ((0, emb_size), (1, 2 * H)):
        wif, whf, bf = lstm_dir(d_in)    # forward direction
        wib, whb, bb = lstm_dir(d_in)    # reverse direction
        # Block-diagonal recurrent weight: [h_fwd | h_bwd] @ whh gives both
        # directions' recurrent projections in a single 8H(=256)-wide matmul.
        whh = jnp.zeros((2 * H, 8 * H), jnp.float32)
        whh = whh.at[0:H, 0:4 * H].set(whf.T)
        whh = whh.at[H:2 * H, 4 * H:8 * H].set(whb.T)
        params[f"wih{layer}"] = jnp.concatenate([wif.T, wib.T], axis=1)   # (d_in, 8H)
        params[f"b{layer}"] = jnp.concatenate([bf, bb])[None, :]          # (1, 8H)
        params[f"whh{layer}"] = whh                                       # (2H, 8H)

    in_feat = 2 * 2 * 4 * H
    w1 = scale * jax.random.normal(next(keys), (H, in_feat), jnp.float32)
    b1 = scale * jax.random.normal(next(keys), (H,), jnp.float32)
    w2 = scale * jax.random.normal(next(keys), (class_num, H), jnp.float32)
    b2 = scale * jax.random.normal(next(keys), (class_num,), jnp.float32)
    params["w1_t"] = w1.T                 # (16H, H)
    params["hb1"] = b1[None, :]           # (1, H)
    params["w2_t"] = w2.T                 # (H, C)
    params["hb2"] = b2[None, :]           # (1, C)
    return params


# -----------------------------------------------------------------------------
# Forward pass
# -----------------------------------------------------------------------------
@jax.jit
def sia_gru_forward(params, text_a, text_b):
    """text_a / text_b: (B, L) int32 token ids (batch_first, like PyTorch)."""
    emb = params["embedding"]
    B, L = text_a.shape
    E = emb.shape[1]
    H = params["whh0"].shape[0] // 2
    C = params["w2_t"].shape[1]

    # XLA glue: embedding gather, sentence stacking, padding, time-major flatten.
    tok = jnp.concatenate([text_a, text_b], axis=0)            # (2B, L)
    x = jnp.take(emb, tok, axis=0)                             # (2B, L, E)
    # Pad the stacked batch to a multiple of 8 rows so all in-kernel tiles are
    # sublane-aligned and the vreg sublanes are fully used.
    Bp = ((2 * B + 7) // 8) * 8
    x = jnp.pad(x, ((0, Bp - 2 * B), (0, 0), (0, 0)))
    x_flat = jnp.transpose(x, (1, 0, 2)).reshape(L * Bp, E)    # row = t*Bp + j

    kernel = functools.partial(siagru_kernel, seq_len=L)
    return pl.pallas_call(
        kernel,
        out_shape=jax.ShapeDtypeStruct((B, C), jnp.float32),
        in_specs=[
            _vmem_spec((L * Bp, E)),
            _vmem_spec((E, 8 * H)),
            _vmem_spec((1, 8 * H)),
            _vmem_spec((2 * H, 8 * H)),
            _vmem_spec((2 * H, 8 * H)),
            _vmem_spec((1, 8 * H)),
            _vmem_spec((2 * H, 8 * H)),
            _vmem_spec((16 * H, H)),
            _vmem_spec((1, H)),
            _vmem_spec((H, C)),
            _vmem_spec((1, C)),
        ],
        out_specs=_vmem_spec((B, C)),
    )(x_flat, params["wih0"], params["b0"], params["whh0"],
      params["wih1"], params["b1"], params["whh1"],
      params["w1_t"], params["hb1"], params["w2_t"], params["hb2"])


if __name__ == "__main__":
    # config (small shapes consistent with the module)
    vocab_size = 100
    embedding_size = 32
    hidden_size = 32
    class_num = 3
    batch = 2
    seq_len = 8

    key = jax.random.PRNGKey(0)
    k_param, k_a, k_b = jax.random.split(key, 3)

    params = init_params(k_param, vocab_size, embedding_size, hidden_size, class_num)
    text_a = jax.random.randint(k_a, (batch, seq_len), 0, vocab_size, dtype=jnp.int32)
    text_b = jax.random.randint(k_b, (batch, seq_len), 0, vocab_size, dtype=jnp.int32)

    probs = sia_gru_forward(params, text_a, text_b)
    probs = jax.block_until_ready(probs)

    assert probs.shape == (batch, class_num)
    assert bool(jnp.all(jnp.isfinite(probs)))
    # rows of a softmax must sum to ~1 (approx reciprocal in the kernel)
    assert bool(jnp.allclose(jnp.sum(probs, axis=-1), 1.0, atol=5e-3))
    print("KERNEL_OK")
</pallas_src>

<mosaic_0001>
module attributes {stable_mosaic.version = 11 : i64} {
  func.func @siagru_kernel(%arg0: memref<64x32xf32, #tpu.memory_space<vmem>>, %arg1: memref<32x256xf32, #tpu.memory_space<vmem>>, %arg2: memref<1x256xf32, #tpu.memory_space<vmem>>, %arg3: memref<64x256xf32, #tpu.memory_space<vmem>>, %arg4: memref<64x256xf32, #tpu.memory_space<vmem>>, %arg5: memref<1x256xf32, #tpu.memory_space<vmem>>, %arg6: memref<64x256xf32, #tpu.memory_space<vmem>>, %arg7: memref<512x32xf32, #tpu.memory_space<vmem>>, %arg8: memref<1x32xf32, #tpu.memory_space<vmem>>, %arg9: memref<32x3xf32, #tpu.memory_space<vmem>>, %arg10: memref<1x3xf32, #tpu.memory_space<vmem>>, %arg11: memref<2x3xf32, #tpu.memory_space<vmem>>) attributes {dimension_semantics = [], scalar_prefetch = 0 : i64, scratch_operands = 0 : i64, tpu.core_type = #tpu.core_type<tc>} {
    %c0 = arith.constant 0 : index
    %c0_0 = arith.constant 0 : index
    %0 = vector.load %arg0[%c0, %c0_0] : memref<64x32xf32, #tpu.memory_space<vmem>>, vector<64x32xf32>
    %c0_1 = arith.constant 0 : index
    %c0_2 = arith.constant 0 : index
    %1 = vector.load %arg1[%c0_1, %c0_2] : memref<32x256xf32, #tpu.memory_space<vmem>>, vector<32x256xf32>
    %cst = arith.constant dense<0.000000e+00> : vector<64x256xf32>
    %2 = tpu.matmul %0, %1, %cst {dimension_numbers = #tpu.dot_dimension_numbers<[1], [0], [0], [1], [0, 0, 1, 1], [], []>} : vector<64x32xf32>, vector<32x256xf32>, vector<64x256xf32> -> vector<64x256xf32>
    %c0_3 = arith.constant 0 : index
    %c0_4 = arith.constant 0 : index
    %3 = vector.load %arg2[%c0_3, %c0_4] : memref<1x256xf32, #tpu.memory_space<vmem>>, vector<1x256xf32>
    %4 = vector.broadcast %3 : vector<1x256xf32> to vector<64x256xf32>
    %5 = arith.addf %2, %4 : vector<64x256xf32>
    %c0_5 = arith.constant 0 : index
    %c0_6 = arith.constant 0 : index
    %6 = vector.load %arg3[%c0_5, %c0_6] : memref<64x256xf32, #tpu.memory_space<vmem>>, vector<64x256xf32>
    %cst_7 = arith.constant 0.000000e+00 : f32
    %7 = vector.broadcast %cst_7 : f32 to vector<8x64xf32>
    %cst_8 = arith.constant 0.000000e+00 : f32
    %8 = vector.broadcast %cst_8 : f32 to vector<8x32xf32>
    %cst_9 = arith.constant 0.000000e+00 : f32
    %9 = vector.broadcast %cst_9 : f32 to vector<8x32xf32>
    %cst_10 = arith.constant dense<0.000000e+00> : vector<8x256xf32>
    %10 = tpu.matmul %7, %6, %cst_10 {dimension_numbers = #tpu.dot_dimension_numbers<[1], [0], [0], [1], [0, 0, 1, 1], [], []>} : vector<8x64xf32>, vector<64x256xf32>, vector<8x256xf32> -> vector<8x256xf32>
    %11 = vector.extract_strided_slice %5 {offsets = [0, 0], sizes = [8, 128], strides = [1, 1]} : vector<64x256xf32> to vector<8x128xf32>
    %12 = vector.extract_strided_slice %10 {offsets = [0, 0], sizes = [8, 128], strides = [1, 1]} : vector<8x256xf32> to vector<8x128xf32>
    %13 = arith.addf %11, %12 : vector<8x128xf32>
    %14 = vector.extract_strided_slice %5 {offsets = [56, 128], sizes = [8, 128], strides = [1, 1]} : vector<64x256xf32> to vector<8x128xf32>
    %15 = vector.extract_strided_slice %10 {offsets = [0, 128], sizes = [8, 128], strides = [1, 1]} : vector<8x256xf32> to vector<8x128xf32>
    %16 = arith.addf %14, %15 : vector<8x128xf32>
    %17 = vector.extract_strided_slice %13 {offsets = [0, 0], sizes = [8, 32], strides = [1, 1]} : vector<8x128xf32> to vector<8x32xf32>
    %18 = arith.negf %17 : vector<8x32xf32>
    %19 = math.exp %18 : vector<8x32xf32>
    %cst_11 = arith.constant 1.000000e+00 : f32
    %20 = vector.broadcast %cst_11 : f32 to vector<8x32xf32>
    %21 = arith.addf %20, %19 : vector<8x32xf32>
    %22 = arith.divf %20, %21 : vector<8x32xf32>
    %23 = vector.extract_strided_slice %13 {offsets = [0, 32], sizes = [8, 32], strides = [1, 1]} : vector<8x128xf32> to vector<8x32xf32>
    %24 = arith.negf %23 : vector<8x32xf32>
    %25 = math.exp %24 : vector<8x32xf32>
    %cst_12 = arith.constant 1.000000e+00 : f32
    %26 = vector.broadcast %cst_12 : f32 to vector<8x32xf32>
    %27 = arith.addf %26, %25 : vector<8x32xf32>
    %28 = arith.divf %26, %27 : vector<8x32xf32>
    %29 = vector.extract_strided_slice %13 {offsets = [0, 64], sizes = [8, 32], strides = [1, 1]} : vector<8x128xf32> to vector<8x32xf32>
    %30 = math.tanh %29 : vector<8x32xf32>
    %31 = vector.extract_strided_slice %13 {offsets = [0, 96], sizes = [8, 32], strides = [1, 1]} : vector<8x128xf32> to vector<8x32xf32>
    %32 = arith.negf %31 : vector<8x32xf32>
    %33 = math.exp %32 : vector<8x32xf32>
    %cst_13 = arith.constant 1.000000e+00 : f32
    %34 = vector.broadcast %cst_13 : f32 to vector<8x32xf32>
    %35 = arith.addf %34, %33 : vector<8x32xf32>
    %36 = arith.divf %34, %35 : vector<8x32xf32>
    %37 = arith.mulf %28, %8 : vector<8x32xf32>
    %38 = arith.mulf %22, %30 : vector<8x32xf32>
    %39 = arith.addf %37, %38 : vector<8x32xf32>
    %40 = math.tanh %39 : vector<8x32xf32>
    %41 = arith.mulf %36, %40 : vector<8x32xf32>
    %42 = vector.extract_strided_slice %16 {offsets = [0, 0], sizes = [8, 32], strides = [1, 1]} : vector<8x128xf32> to vector<8x32xf32>
    %43 = arith.negf %42 : vector<8x32xf32>
    %44 = math.exp %43 : vector<8x32xf32>
    %cst_14 = arith.constant 1.000000e+00 : f32
    %45 = vector.broadcast %cst_14 : f32 to vector<8x32xf32>
    %46 = arith.addf %45, %44 : vector<8x32xf32>
    %47 = arith.divf %45, %46 : vector<8x32xf32>
    %48 = vector.extract_strided_slice %16 {offsets = [0, 32], sizes = [8, 32], strides = [1, 1]} : vector<8x128xf32> to vector<8x32xf32>
    %49 = arith.negf %48 : vector<8x32xf32>
    %50 = math.exp %49 : vector<8x32xf32>
    %cst_15 = arith.constant 1.000000e+00 : f32
    %51 = vector.broadcast %cst_15 : f32 to vector<8x32xf32>
    %52 = arith.addf %51, %50 : vector<8x32xf32>
    %53 = arith.divf %51, %52 : vector<8x32xf32>
    %54 = vector.extract_strided_slice %16 {offsets = [0, 64], sizes = [8, 32], strides = [1, 1]} : vector<8x128xf32> to vector<8x32xf32>
    %55 = math.tanh %54 : vector<8x32xf32>
    %56 = vector.extract_strided_slice %16 {offsets = [0, 96], sizes = [8, 32], strides = [1, 1]} : vector<8x128xf32> to vector<8x32xf32>
    %57 = arith.negf %56 : vector<8x32xf32>
    %58 = math.exp %57 : vector<8x32xf32>
    %cst_16 = arith.constant 1.000000e+00 : f32
    %59 = vector.broadcast %cst_16 : f32 to vector<8x32xf32>
    %60 = arith.addf %59, %58 : vector<8x32xf32>
    %61 = arith.divf %59, %60 : vector<8x32xf32>
    %62 = arith.mulf %53, %9 : vector<8x32xf32>
    %63 = arith.mulf %47, %55 : vector<8x32xf32>
    %64 = arith.addf %62, %63 : vector<8x32xf32>
    %65 = math.tanh %64 : vector<8x32xf32>
    %66 = arith.mulf %61, %65 : vector<8x32xf32>
    %67 = tpu.concatenate %41, %66 in 1 : vector<8x32xf32>, vector<8x32xf32> -> vector<8x64xf32>
    %cst_17 = arith.constant dense<0.000000e+00> : vector<8x256xf32>
    %68 = tpu.matmul %67, %6, %cst_17 {dimension_numbers = #tpu.dot_dimension_numbers<[1], [0], [0], [1], [0, 0, 1, 1], [], []>} : vector<8x64xf32>, vector<64x256xf32>, vector<8x256xf32> -> vector<8x256xf32>
    %69 = vector.extract_strided_slice %5 {offsets = [8, 0], sizes = [8, 128], strides = [1, 1]} : vector<64x256xf32> to vector<8x128xf32>
    %70 = vector.extract_strided_slice %68 {offsets = [0, 0], sizes = [8, 128], strides = [1, 1]} : vector<8x256xf32> to vector<8x128xf32>
    %71 = arith.addf %69, %70 : vector<8x128xf32>
    %72 = vector.extract_strided_slice %5 {offsets = [48, 128], sizes = [8, 128], strides = [1, 1]} : vector<64x256xf32> to vector<8x128xf32>
    %73 = vector.extract_strided_slice %68 {offsets = [0, 128], sizes = [8, 128], strides = [1, 1]} : vector<8x256xf32> to vector<8x128xf32>
    %74 = arith.addf %72, %73 : vector<8x128xf32>
    %75 = vector.extract_strided_slice %71 {offsets = [0, 0], sizes = [8, 32], strides = [1, 1]} : vector<8x128xf32> to vector<8x32xf32>
    %76 = arith.negf %75 : vector<8x32xf32>
    %77 = math.exp %76 : vector<8x32xf32>
    %cst_18 = arith.constant 1.000000e+00 : f32
    %78 = vector.broadcast %cst_18 : f32 to vector<8x32xf32>
    %79 = arith.addf %78, %77 : vector<8x32xf32>
    %80 = arith.divf %78, %79 : vector<8x32xf32>
    %81 = vector.extract_strided_slice %71 {offsets = [0, 32], sizes = [8, 32], strides = [1, 1]} : vector<8x128xf32> to vector<8x32xf32>
    %82 = arith.negf %81 : vector<8x32xf32>
    %83 = math.exp %82 : vector<8x32xf32>
    %cst_19 = arith.constant 1.000000e+00 : f32
    %84 = vector.broadcast %cst_19 : f32 to vector<8x32xf32>
    %85 = arith.addf %84, %83 : vector<8x32xf32>
    %86 = arith.divf %84, %85 : vector<8x32xf32>
    %87 = vector.extract_strided_slice %71 {offsets = [0, 64], sizes = [8, 32], strides = [1, 1]} : vector<8x128xf32> to vector<8x32xf32>
    %88 = math.tanh %87 : vector<8x32xf32>
    %89 = vector.extract_strided_slice %71 {offsets = [0, 96], sizes = [8, 32], strides = [1, 1]} : vector<8x128xf32> to vector<8x32xf32>
    %90 = arith.negf %89 : vector<8x32xf32>
    %91 = math.exp %90 : vector<8x32xf32>
    %cst_20 = arith.constant 1.000000e+00 : f32
    %92 = vector.broadcast %cst_20 : f32 to vector<8x32xf32>
    %93 = arith.addf %92, %91 : vector<8x32xf32>
    %94 = arith.divf %92, %93 : vector<8x32xf32>
    %95 = arith.mulf %86, %39 : vector<8x32xf32>
    %96 = arith.mulf %80, %88 : vector<8x32xf32>
    %97 = arith.addf %95, %96 : vector<8x32xf32>
    %98 = math.tanh %97 : vector<8x32xf32>
    %99 = arith.mulf %94, %98 : vector<8x32xf32>
    %100 = vector.extract_strided_slice %74 {offsets = [0, 0], sizes = [8, 32], strides = [1, 1]} : vector<8x128xf32> to vector<8x32xf32>
    %101 = arith.negf %100 : vector<8x32xf32>
    %102 = math.exp %101 : vector<8x32xf32>
    %cst_21 = arith.constant 1.000000e+00 : f32
    %103 = vector.broadcast %cst_21 : f32 to vector<8x32xf32>
    %104 = arith.addf %103, %102 : vector<8x32xf32>
    %105 = arith.divf %103, %104 : vector<8x32xf32>
    %106 = vector.extract_strided_slice %74 {offsets = [0, 32], sizes = [8, 32], strides = [1, 1]} : vector<8x128xf32> to vector<8x32xf32>
    %107 = arith.negf %106 : vector<8x32xf32>
    %108 = math.exp %107 : vector<8x32xf32>
    %cst_22 = arith.constant 1.000000e+00 : f32
    %109 = vector.broadcast %cst_22 : f32 to vector<8x32xf32>
    %110 = arith.addf %109, %108 : vector<8x32xf32>
    %111 = arith.divf %109, %110 : vector<8x32xf32>
    %112 = vector.extract_strided_slice %74 {offsets = [0, 64], sizes = [8, 32], strides = [1, 1]} : vector<8x128xf32> to vector<8x32xf32>
    %113 = math.tanh %112 : vector<8x32xf32>
    %114 = vector.extract_strided_slice %74 {offsets = [0, 96], sizes = [8, 32], strides = [1, 1]} : vector<8x128xf32> to vector<8x32xf32>
    %115 = arith.negf %114 : vector<8x32xf32>
    %116 = math.exp %115 : vector<8x32xf32>
    %cst_23 = arith.constant 1.000000e+00 : f32
    %117 = vector.broadcast %cst_23 : f32 to vector<8x32xf32>
    %118 = arith.addf %117, %116 : vector<8x32xf32>
    %119 = arith.divf %117, %118 : vector<8x32xf32>
    %120 = arith.mulf %111, %64 : vector<8x32xf32>
    %121 = arith.mulf %105, %113 : vector<8x32xf32>
    %122 = arith.addf %120, %121 : vector<8x32xf32>
    %123 = math.tanh %122 : vector<8x32xf32>
    %124 = arith.mulf %119, %123 : vector<8x32xf32>
    %125 = tpu.concatenate %99, %124 in 1 : vector<8x32xf32>, vector<8x32xf32> -> vector<8x64xf32>
    %cst_24 = arith.constant dense<0.000000e+00> : vector<8x256xf32>
    %126 = tpu.matmul %125, %6, %cst_24 {dimension_numbers = #tpu.dot_dimension_numbers<[1], [0], [0], [1], [0, 0, 1, 1], [], []>} : vector<8x64xf32>, vector<64x256xf32>, vector<8x256xf32> -> vector<8x256xf32>
    %127 = vector.extract_strided_slice %5 {offsets = [16, 0], sizes = [8, 128], strides = [1, 1]} : vector<64x256xf32> to vector<8x128xf32>
    %128 = vector.extract_strided_slice %126 {offsets = [0, 0], sizes = [8, 128], strides = [1, 1]} : vector<8x256xf32> to vector<8x128xf32>
    %129 = arith.addf %127, %128 : vector<8x128xf32>
    %130 = vector.extract_strided_slice %5 {offsets = [40, 128], sizes = [8, 128], strides = [1, 1]} : vector<64x256xf32> to vector<8x128xf32>
    %131 = vector.extract_strided_slice %126 {offsets = [0, 128], sizes = [8, 128], strides = [1, 1]} : vector<8x256xf32> to vector<8x128xf32>
    %132 = arith.addf %130, %131 : vector<8x128xf32>
    %133 = vector.extract_strided_slice %129 {offsets = [0, 0], sizes = [8, 32], strides = [1, 1]} : vector<8x128xf32> to vector<8x32xf32>
    %134 = arith.negf %133 : vector<8x32xf32>
    %135 = math.exp %134 : vector<8x32xf32>
    %cst_25 = arith.constant 1.000000e+00 : f32
    %136 = vector.broadcast %cst_25 : f32 to vector<8x32xf32>
    %137 = arith.addf %136, %135 : vector<8x32xf32>
    %138 = arith.divf %136, %137 : vector<8x32xf32>
    %139 = vector.extract_strided_slice %129 {offsets = [0, 32], sizes = [8, 32], strides = [1, 1]} : vector<8x128xf32> to vector<8x32xf32>
    %140 = arith.negf %139 : vector<8x32xf32>
    %141 = math.exp %140 : vector<8x32xf32>
    %cst_26 = arith.constant 1.000000e+00 : f32
    %142 = vector.broadcast %cst_26 : f32 to vector<8x32xf32>
    %143 = arith.addf %142, %141 : vector<8x32xf32>
    %144 = arith.divf %142, %143 : vector<8x32xf32>
    %145 = vector.extract_strided_slice %129 {offsets = [0, 64], sizes = [8, 32], strides = [1, 1]} : vector<8x128xf32> to vector<8x32xf32>
    %146 = math.tanh %145 : vector<8x32xf32>
    %147 = vector.extract_strided_slice %129 {offsets = [0, 96], sizes = [8, 32], strides = [1, 1]} : vector<8x128xf32> to vector<8x32xf32>
    %148 = arith.negf %147 : vector<8x32xf32>
    %149 = math.exp %148 : vector<8x32xf32>
    %cst_27 = arith.constant 1.000000e+00 : f32
    %150 = vector.broadcast %cst_27 : f32 to vector<8x32xf32>
    %151 = arith.addf %150, %149 : vector<8x32xf32>
    %152 = arith.divf %150, %151 : vector<8x32xf32>
    %153 = arith.mulf %144, %97 : vector<8x32xf32>
    %154 = arith.mulf %138, %146 : vector<8x32xf32>
    %155 = arith.addf %153, %154 : vector<8x32xf32>
    %156 = math.tanh %155 : vector<8x32xf32>
    %157 = arith.mulf %152, %156 : vector<8x32xf32>
    %158 = vector.extract_strided_slice %132 {offsets = [0, 0], sizes = [8, 32], strides = [1, 1]} : vector<8x128xf32> to vector<8x32xf32>
    %159 = arith.negf %158 : vector<8x32xf32>
    %160 = math.exp %159 : vector<8x32xf32>
    %cst_28 = arith.constant 1.000000e+00 : f32
    %161 = vector.broadcast %cst_28 : f32 to vector<8x32xf32>
    %162 = arith.addf %161, %160 : vector<8x32xf32>
    %163 = arith.divf %161, %162 : vector<8x32xf32>
    %164 = vector.extract_strided_slice %132 {offsets = [0, 32], sizes = [8, 32], strides = [1, 1]} : vector<8x128xf32> to vector<8x32xf32>
    %165 = arith.negf %164 : vector<8x32xf32>
    %166 = math.exp %165 : vector<8x32xf32>
    %cst_29 = arith.constant 1.000000e+00 : f32
    %167 = vector.broadcast %cst_29 : f32 to vector<8x32xf32>
    %168 = arith.addf %167, %166 : vector<8x32xf32>
    %169 = arith.divf %167, %168 : vector<8x32xf32>
    %170 = vector.extract_strided_slice %132 {offsets = [0, 64], sizes = [8, 32], strides = [1, 1]} : vector<8x128xf32> to vector<8x32xf32>
    %171 = math.tanh %170 : vector<8x32xf32>
    %172 = vector.extract_strided_slice %132 {offsets = [0, 96], sizes = [8, 32], strides = [1, 1]} : vector<8x128xf32> to vector<8x32xf32>
    %173 = arith.negf %172 : vector<8x32xf32>
    %174 = math.exp %173 : vector<8x32xf32>
    %cst_30 = arith.constant 1.000000e+00 : f32
    %175 = vector.broadcast %cst_30 : f32 to vector<8x32xf32>
    %176 = arith.addf %175, %174 : vector<8x32xf32>
    %177 = arith.divf %175, %176 : vector<8x32xf32>
    %178 = arith.mulf %169, %122 : vector<8x32xf32>
    %179 = arith.mulf %163, %171 : vector<8x32xf32>
    %180 = arith.addf %178, %179 : vector<8x32xf32>
    %181 = math.tanh %180 : vector<8x32xf32>
    %182 = arith.mulf %177, %181 : vector<8x32xf32>
    %183 = tpu.concatenate %157, %182 in 1 : vector<8x32xf32>, vector<8x32xf32> -> vector<8x64xf32>
    %cst_31 = arith.constant dense<0.000000e+00> : vector<8x256xf32>
    %184 = tpu.matmul %183, %6, %cst_31 {dimension_numbers = #tpu.dot_dimension_numbers<[1], [0], [0], [1], [0, 0, 1, 1], [], []>} : vector<8x64xf32>, vector<64x256xf32>, vector<8x256xf32> -> vector<8x256xf32>
    %185 = vector.extract_strided_slice %5 {offsets = [24, 0], sizes = [8, 128], strides = [1, 1]} : vector<64x256xf32> to vector<8x128xf32>
    %186 = vector.extract_strided_slice %184 {offsets = [0, 0], sizes = [8, 128], strides = [1, 1]} : vector<8x256xf32> to vector<8x128xf32>
    %187 = arith.addf %185, %186 : vector<8x128xf32>
    %188 = vector.extract_strided_slice %5 {offsets = [32, 128], sizes = [8, 128], strides = [1, 1]} : vector<64x256xf32> to vector<8x128xf32>
    %189 = vector.extract_strided_slice %184 {offsets = [0, 128], sizes = [8, 128], strides = [1, 1]} : vector<8x256xf32> to vector<8x128xf32>
    %190 = arith.addf %188, %189 : vector<8x128xf32>
    %191 = vector.extract_strided_slice %187 {offsets = [0, 0], sizes = [8, 32], strides = [1, 1]} : vector<8x128xf32> to vector<8x32xf32>
    %192 = arith.negf %191 : vector<8x32xf32>
    %193 = math.exp %192 : vector<8x32xf32>
    %cst_32 = arith.constant 1.000000e+00 : f32
    %194 = vector.broadcast %cst_32 : f32 to vector<8x32xf32>
    %195 = arith.addf %194, %193 : vector<8x32xf32>
    %196 = arith.divf %194, %195 : vector<8x32xf32>
    %197 = vector.extract_strided_slice %187 {offsets = [0, 32], sizes = [8, 32], strides = [1, 1]} : vector<8x128xf32> to vector<8x32xf32>
    %198 = arith.negf %197 : vector<8x32xf32>
    %199 = math.exp %198 : vector<8x32xf32>
    %cst_33 = arith.constant 1.000000e+00 : f32
    %200 = vector.broadcast %cst_33 : f32 to vector<8x32xf32>
    %201 = arith.addf %200, %199 : vector<8x32xf32>
    %202 = arith.divf %200, %201 : vector<8x32xf32>
    %203 = vector.extract_strided_slice %187 {offsets = [0, 64], sizes = [8, 32], strides = [1, 1]} : vector<8x128xf32> to vector<8x32xf32>
    %204 = math.tanh %203 : vector<8x32xf32>
    %205 = vector.extract_strided_slice %187 {offsets = [0, 96], sizes = [8, 32], strides = [1, 1]} : vector<8x128xf32> to vector<8x32xf32>
    %206 = arith.negf %205 : vector<8x32xf32>
    %207 = math.exp %206 : vector<8x32xf32>
    %cst_34 = arith.constant 1.000000e+00 : f32
    %208 = vector.broadcast %cst_34 : f32 to vector<8x32xf32>
    %209 = arith.addf %208, %207 : vector<8x32xf32>
    %210 = arith.divf %208, %209 : vector<8x32xf32>
    %211 = arith.mulf %202, %155 : vector<8x32xf32>
    %212 = arith.mulf %196, %204 : vector<8x32xf32>
    %213 = arith.addf %211, %212 : vector<8x32xf32>
    %214 = math.tanh %213 : vector<8x32xf32>
    %215 = arith.mulf %210, %214 : vector<8x32xf32>
    %216 = vector.extract_strided_slice %190 {offsets = [0, 0], sizes = [8, 32], strides = [1, 1]} : vector<8x128xf32> to vector<8x32xf32>
    %217 = arith.negf %216 : vector<8x32xf32>
    %218 = math.exp %217 : vector<8x32xf32>
    %cst_35 = arith.constant 1.000000e+00 : f32
    %219 = vector.broadcast %cst_35 : f32 to vector<8x32xf32>
    %220 = arith.addf %219, %218 : vector<8x32xf32>
    %221 = arith.divf %219, %220 : vector<8x32xf32>
    %222 = vector.extract_strided_slice %190 {offsets = [0, 32], sizes = [8, 32], strides = [1, 1]} : vector<8x128xf32> to vector<8x32xf32>
    %223 = arith.negf %222 : vector<8x32xf32>
    %224 = math.exp %223 : vector<8x32xf32>
    %cst_36 = arith.constant 1.000000e+00 : f32
    %225 = vector.broadcast %cst_36 : f32 to vector<8x32xf32>
    %226 = arith.addf %225, %224 : vector<8x32xf32>
    %227 = arith.divf %225, %226 : vector<8x32xf32>
    %228 = vector.extract_strided_slice %190 {offsets = [0, 64], sizes = [8, 32], strides = [1, 1]} : vector<8x128xf32> to vector<8x32xf32>
    %229 = math.tanh %228 : vector<8x32xf32>
    %230 = vector.extract_strided_slice %190 {offsets = [0, 96], sizes = [8, 32], strides = [1, 1]} : vector<8x128xf32> to vector<8x32xf32>
    %231 = arith.negf %230 : vector<8x32xf32>
    %232 = math.exp %231 : vector<8x32xf32>
    %cst_37 = arith.constant 1.000000e+00 : f32
    %233 = vector.broadcast %cst_37 : f32 to vector<8x32xf32>
    %234 = arith.addf %233, %232 : vector<8x32xf32>
    %235 = arith.divf %233, %234 : vector<8x32xf32>
    %236 = arith.mulf %227, %180 : vector<8x32xf32>
    %237 = arith.mulf %221, %229 : vector<8x32xf32>
    %238 = arith.addf %236, %237 : vector<8x32xf32>
    %239 = math.tanh %238 : vector<8x32xf32>
    %240 = arith.mulf %235, %239 : vector<8x32xf32>
    %241 = tpu.concatenate %215, %240 in 1 : vector<8x32xf32>, vector<8x32xf32> -> vector<8x64xf32>
    %cst_38 = arith.constant dense<0.000000e+00> : vector<8x256xf32>
    %242 = tpu.matmul %241, %6, %cst_38 {dimension_numbers = #tpu.dot_dimension_numbers<[1], [0], [0], [1], [0, 0, 1, 1], [], []>} : vector<8x64xf32>, vector<64x256xf32>, vector<8x256xf32> -> vector<8x256xf32>
    %243 = vector.extract_strided_slice %5 {offsets = [32, 0], sizes = [8, 128], strides = [1, 1]} : vector<64x256xf32> to vector<8x128xf32>
    %244 = vector.extract_strided_slice %242 {offsets = [0, 0], sizes = [8, 128], strides = [1, 1]} : vector<8x256xf32> to vector<8x128xf32>
    %245 = arith.addf %243, %244 : vector<8x128xf32>
    %246 = vector.extract_strided_slice %5 {offsets = [24, 128], sizes = [8, 128], strides = [1, 1]} : vector<64x256xf32> to vector<8x128xf32>
    %247 = vector.extract_strided_slice %242 {offsets = [0, 128], sizes = [8, 128], strides = [1, 1]} : vector<8x256xf32> to vector<8x128xf32>
    %248 = arith.addf %246, %247 : vector<8x128xf32>
    %249 = vector.extract_strided_slice %245 {offsets = [0, 0], sizes = [8, 32], strides = [1, 1]} : vector<8x128xf32> to vector<8x32xf32>
    %250 = arith.negf %249 : vector<8x32xf32>
    %251 = math.exp %250 : vector<8x32xf32>
    %cst_39 = arith.constant 1.000000e+00 : f32
    %252 = vector.broadcast %cst_39 : f32 to vector<8x32xf32>
    %253 = arith.addf %252, %251 : vector<8x32xf32>
    %254 = arith.divf %252, %253 : vector<8x32xf32>
    %255 = vector.extract_strided_slice %245 {offsets = [0, 32], sizes = [8, 32], strides = [1, 1]} : vector<8x128xf32> to vector<8x32xf32>
    %256 = arith.negf %255 : vector<8x32xf32>
    %257 = math.exp %256 : vector<8x32xf32>
    %cst_40 = arith.constant 1.000000e+00 : f32
    %258 = vector.broadcast %cst_40 : f32 to vector<8x32xf32>
    %259 = arith.addf %258, %257 : vector<8x32xf32>
    %260 = arith.divf %258, %259 : vector<8x32xf32>
    %261 = vector.extract_strided_slice %245 {offsets = [0, 64], sizes = [8, 32], strides = [1, 1]} : vector<8x128xf32> to vector<8x32xf32>
    %262 = math.tanh %261 : vector<8x32xf32>
    %263 = vector.extract_strided_slice %245 {offsets = [0, 96], sizes = [8, 32], strides = [1, 1]} : vector<8x128xf32> to vector<8x32xf32>
    %264 = arith.negf %263 : vector<8x32xf32>
    %265 = math.exp %264 : vector<8x32xf32>
    %cst_41 = arith.constant 1.000000e+00 : f32
    %266 = vector.broadcast %cst_41 : f32 to vector<8x32xf32>
    %267 = arith.addf %266, %265 : vector<8x32xf32>
    %268 = arith.divf %266, %267 : vector<8x32xf32>
    %269 = arith.mulf %260, %213 : vector<8x32xf32>
    %270 = arith.mulf %254, %262 : vector<8x32xf32>
    %271 = arith.addf %269, %270 : vector<8x32xf32>
    %272 = math.tanh %271 : vector<8x32xf32>
    %273 = arith.mulf %268, %272 : vector<8x32xf32>
    %274 = vector.extract_strided_slice %248 {offsets = [0, 0], sizes = [8, 32], strides = [1, 1]} : vector<8x128xf32> to vector<8x32xf32>
    %275 = arith.negf %274 : vector<8x32xf32>
    %276 = math.exp %275 : vector<8x32xf32>
    %cst_42 = arith.constant 1.000000e+00 : f32
    %277 = vector.broadcast %cst_42 : f32 to vector<8x32xf32>
    %278 = arith.addf %277, %276 : vector<8x32xf32>
    %279 = arith.divf %277, %278 : vector<8x32xf32>
    %280 = vector.extract_strided_slice %248 {offsets = [0, 32], sizes = [8, 32], strides = [1, 1]} : vector<8x128xf32> to vector<8x32xf32>
    %281 = arith.negf %280 : vector<8x32xf32>
    %282 = math.exp %281 : vector<8x32xf32>
    %cst_43 = arith.constant 1.000000e+00 : f32
    %283 = vector.broadcast %cst_43 : f32 to vector<8x32xf32>
    %284 = arith.addf %283, %282 : vector<8x32xf32>
    %285 = arith.divf %283, %284 : vector<8x32xf32>
    %286 = vector.extract_strided_slice %248 {offsets = [0, 64], sizes = [8, 32], strides = [1, 1]} : vector<8x128xf32> to vector<8x32xf32>
    %287 = math.tanh %286 : vector<8x32xf32>
    %288 = vector.extract_strided_slice %248 {offsets = [0, 96], sizes = [8, 32], strides = [1, 1]} : vector<8x128xf32> to vector<8x32xf32>
    %289 = arith.negf %288 : vector<8x32xf32>
    %290 = math.exp %289 : vector<8x32xf32>
    %cst_44 = arith.constant 1.000000e+00 : f32
    %291 = vector.broadcast %cst_44 : f32 to vector<8x32xf32>
    %292 = arith.addf %291, %290 : vector<8x32xf32>
    %293 = arith.divf %291, %292 : vector<8x32xf32>
    %294 = arith.mulf %285, %238 : vector<8x32xf32>
    %295 = arith.mulf %279, %287 : vector<8x32xf32>
    %296 = arith.addf %294, %295 : vector<8x32xf32>
    %297 = math.tanh %296 : vector<8x32xf32>
    %298 = arith.mulf %293, %297 : vector<8x32xf32>
    %299 = tpu.concatenate %273, %298 in 1 : vector<8x32xf32>, vector<8x32xf32> -> vector<8x64xf32>
    %cst_45 = arith.constant dense<0.000000e+00> : vector<8x256xf32>
    %300 = tpu.matmul %299, %6, %cst_45 {dimension_numbers = #tpu.dot_dimension_numbers<[1], [0], [0], [1], [0, 0, 1, 1], [], []>} : vector<8x64xf32>, vector<64x256xf32>, vector<8x256xf32> -> vector<8x256xf32>
    %301 = vector.extract_strided_slice %5 {offsets = [40, 0], sizes = [8, 128], strides = [1, 1]} : vector<64x256xf32> to vector<8x128xf32>
    %302 = vector.extract_strided_slice %300 {offsets = [0, 0], sizes = [8, 128], strides = [1, 1]} : vector<8x256xf32> to vector<8x128xf32>
    %303 = arith.addf %301, %302 : vector<8x128xf32>
    %304 = vector.extract_strided_slice %5 {offsets = [16, 128], sizes = [8, 128], strides = [1, 1]} : vector<64x256xf32> to vector<8x128xf32>
    %305 = vector.extract_strided_slice %300 {offsets = [0, 128], sizes = [8, 128], strides = [1, 1]} : vector<8x256xf32> to vector<8x128xf32>
    %306 = arith.addf %304, %305 : vector<8x128xf32>
    %307 = vector.extract_strided_slice %303 {offsets = [0, 0], sizes = [8, 32], strides = [1, 1]} : vector<8x128xf32> to vector<8x32xf32>
    %308 = arith.negf %307 : vector<8x32xf32>
    %309 = math.exp %308 : vector<8x32xf32>
    %cst_46 = arith.constant 1.000000e+00 : f32
    %310 = vector.broadcast %cst_46 : f32 to vector<8x32xf32>
    %311 = arith.addf %310, %309 : vector<8x32xf32>
    %312 = arith.divf %310, %311 : vector<8x32xf32>
    %313 = vector.extract_strided_slice %303 {offsets = [0, 32], sizes = [8, 32], strides = [1, 1]} : vector<8x128xf32> to vector<8x32xf32>
    %314 = arith.negf %313 : vector<8x32xf32>
    %315 = math.exp %314 : vector<8x32xf32>
    %cst_47 = arith.constant 1.000000e+00 : f32
    %316 = vector.broadcast %cst_47 : f32 to vector<8x32xf32>
    %317 = arith.addf %316, %315 : vector<8x32xf32>
    %318 = arith.divf %316, %317 : vector<8x32xf32>
    %319 = vector.extract_strided_slice %303 {offsets = [0, 64], sizes = [8, 32], strides = [1, 1]} : vector<8x128xf32> to vector<8x32xf32>
    %320 = math.tanh %319 : vector<8x32xf32>
    %321 = vector.extract_strided_slice %303 {offsets = [0, 96], sizes = [8, 32], strides = [1, 1]} : vector<8x128xf32> to vector<8x32xf32>
    %322 = arith.negf %321 : vector<8x32xf32>
    %323 = math.exp %322 : vector<8x32xf32>
    %cst_48 = arith.constant 1.000000e+00 : f32
    %324 = vector.broadcast %cst_48 : f32 to vector<8x32xf32>
    %325 = arith.addf %324, %323 : vector<8x32xf32>
    %326 = arith.divf %324, %325 : vector<8x32xf32>
    %327 = arith.mulf %318, %271 : vector<8x32xf32>
    %328 = arith.mulf %312, %320 : vector<8x32xf32>
    %329 = arith.addf %327, %328 : vector<8x32xf32>
    %330 = math.tanh %329 : vector<8x32xf32>
    %331 = arith.mulf %326, %330 : vector<8x32xf32>
    %332 = vector.extract_strided_slice %306 {offsets = [0, 0], sizes = [8, 32], strides = [1, 1]} : vector<8x128xf32> to vector<8x32xf32>
    %333 = arith.negf %332 : vector<8x32xf32>
    %334 = math.exp %333 : vector<8x32xf32>
    %cst_49 = arith.constant 1.000000e+00 : f32
    %335 = vector.broadcast %cst_49 : f32 to vector<8x32xf32>
    %336 = arith.addf %335, %334 : vector<8x32xf32>
    %337 = arith.divf %335, %336 : vector<8x32xf32>
    %338 = vector.extract_strided_slice %306 {offsets = [0, 32], sizes = [8, 32], strides = [1, 1]} : vector<8x128xf32> to vector<8x32xf32>
    %339 = arith.negf %338 : vector<8x32xf32>
    %340 = math.exp %339 : vector<8x32xf32>
    %cst_50 = arith.constant 1.000000e+00 : f32
    %341 = vector.broadcast %cst_50 : f32 to vector<8x32xf32>
    %342 = arith.addf %341, %340 : vector<8x32xf32>
    %343 = arith.divf %341, %342 : vector<8x32xf32>
    %344 = vector.extract_strided_slice %306 {offsets = [0, 64], sizes = [8, 32], strides = [1, 1]} : vector<8x128xf32> to vector<8x32xf32>
    %345 = math.tanh %344 : vector<8x32xf32>
    %346 = vector.extract_strided_slice %306 {offsets = [0, 96], sizes = [8, 32], strides = [1, 1]} : vector<8x128xf32> to vector<8x32xf32>
    %347 = arith.negf %346 : vector<8x32xf32>
    %348 = math.exp %347 : vector<8x32xf32>
    %cst_51 = arith.constant 1.000000e+00 : f32
    %349 = vector.broadcast %cst_51 : f32 to vector<8x32xf32>
    %350 = arith.addf %349, %348 : vector<8x32xf32>
    %351 = arith.divf %349, %350 : vector<8x32xf32>
    %352 = arith.mulf %343, %296 : vector<8x32xf32>
    %353 = arith.mulf %337, %345 : vector<8x32xf32>
    %354 = arith.addf %352, %353 : vector<8x32xf32>
    %355 = math.tanh %354 : vector<8x32xf32>
    %356 = arith.mulf %351, %355 : vector<8x32xf32>
    %357 = tpu.concatenate %331, %356 in 1 : vector<8x32xf32>, vector<8x32xf32> -> vector<8x64xf32>
    %cst_52 = arith.constant dense<0.000000e+00> : vector<8x256xf32>
    %358 = tpu.matmul %357, %6, %cst_52 {dimension_numbers = #tpu.dot_dimension_numbers<[1], [0], [0], [1], [0, 0, 1, 1], [], []>} : vector<8x64xf32>, vector<64x256xf32>, vector<8x256xf32> -> vector<8x256xf32>
    %359 = vector.extract_strided_slice %5 {offsets = [48, 0], sizes = [8, 128], strides = [1, 1]} : vector<64x256xf32> to vector<8x128xf32>
    %360 = vector.extract_strided_slice %358 {offsets = [0, 0], sizes = [8, 128], strides = [1, 1]} : vector<8x256xf32> to vector<8x128xf32>
    %361 = arith.addf %359, %360 : vector<8x128xf32>
    %362 = vector.extract_strided_slice %5 {offsets = [8, 128], sizes = [8, 128], strides = [1, 1]} : vector<64x256xf32> to vector<8x128xf32>
    %363 = vector.extract_strided_slice %358 {offsets = [0, 128], sizes = [8, 128], strides = [1, 1]} : vector<8x256xf32> to vector<8x128xf32>
    %364 = arith.addf %362, %363 : vector<8x128xf32>
    %365 = vector.extract_strided_slice %361 {offsets = [0, 0], sizes = [8, 32], strides = [1, 1]} : vector<8x128xf32> to vector<8x32xf32>
    %366 = arith.negf %365 : vector<8x32xf32>
    %367 = math.exp %366 : vector<8x32xf32>
    %cst_53 = arith.constant 1.000000e+00 : f32
    %368 = vector.broadcast %cst_53 : f32 to vector<8x32xf32>
    %369 = arith.addf %368, %367 : vector<8x32xf32>
    %370 = arith.divf %368, %369 : vector<8x32xf32>
    %371 = vector.extract_strided_slice %361 {offsets = [0, 32], sizes = [8, 32], strides = [1, 1]} : vector<8x128xf32> to vector<8x32xf32>
    %372 = arith.negf %371 : vector<8x32xf32>
    %373 = math.exp %372 : vector<8x32xf32>
    %cst_54 = arith.constant 1.000000e+00 : f32
    %374 = vector.broadcast %cst_54 : f32 to vector<8x32xf32>
    %375 = arith.addf %374, %373 : vector<8x32xf32>
    %376 = arith.divf %374, %375 : vector<8x32xf32>
    %377 = vector.extract_strided_slice %361 {offsets = [0, 64], sizes = [8, 32], strides = [1, 1]} : vector<8x128xf32> to vector<8x32xf32>
    %378 = math.tanh %377 : vector<8x32xf32>
    %379 = vector.extract_strided_slice %361 {offsets = [0, 96], sizes = [8, 32], strides = [1, 1]} : vector<8x128xf32> to vector<8x32xf32>
    %380 = arith.negf %379 : vector<8x32xf32>
    %381 = math.exp %380 : vector<8x32xf32>
    %cst_55 = arith.constant 1.000000e+00 : f32
    %382 = vector.broadcast %cst_55 : f32 to vector<8x32xf32>
    %383 = arith.addf %382, %381 : vector<8x32xf32>
    %384 = arith.divf %382, %383 : vector<8x32xf32>
    %385 = arith.mulf %376, %329 : vector<8x32xf32>
    %386 = arith.mulf %370, %378 : vector<8x32xf32>
    %387 = arith.addf %385, %386 : vector<8x32xf32>
    %388 = math.tanh %387 : vector<8x32xf32>
    %389 = arith.mulf %384, %388 : vector<8x32xf32>
    %390 = vector.extract_strided_slice %364 {offsets = [0, 0], sizes = [8, 32], strides = [1, 1]} : vector<8x128xf32> to vector<8x32xf32>
    %391 = arith.negf %390 : vector<8x32xf32>
    %392 = math.exp %391 : vector<8x32xf32>
    %cst_56 = arith.constant 1.000000e+00 : f32
    %393 = vector.broadcast %cst_56 : f32 to vector<8x32xf32>
    %394 = arith.addf %393, %392 : vector<8x32xf32>
    %395 = arith.divf %393, %394 : vector<8x32xf32>
    %396 = vector.extract_strided_slice %364 {offsets = [0, 32], sizes = [8, 32], strides = [1, 1]} : vector<8x128xf32> to vector<8x32xf32>
    %397 = arith.negf %396 : vector<8x32xf32>
    %398 = math.exp %397 : vector<8x32xf32>
    %cst_57 = arith.constant 1.000000e+00 : f32
    %399 = vector.broadcast %cst_57 : f32 to vector<8x32xf32>
    %400 = arith.addf %399, %398 : vector<8x32xf32>
    %401 = arith.divf %399, %400 : vector<8x32xf32>
    %402 = vector.extract_strided_slice %364 {offsets = [0, 64], sizes = [8, 32], strides = [1, 1]} : vector<8x128xf32> to vector<8x32xf32>
    %403 = math.tanh %402 : vector<8x32xf32>
    %404 = vector.extract_strided_slice %364 {offsets = [0, 96], sizes = [8, 32], strides = [1, 1]} : vector<8x128xf32> to vector<8x32xf32>
    %405 = arith.negf %404 : vector<8x32xf32>
    %406 = math.exp %405 : vector<8x32xf32>
    %cst_58 = arith.constant 1.000000e+00 : f32
    %407 = vector.broadcast %cst_58 : f32 to vector<8x32xf32>
    %408 = arith.addf %407, %406 : vector<8x32xf32>
    %409 = arith.divf %407, %408 : vector<8x32xf32>
    %410 = arith.mulf %401, %354 : vector<8x32xf32>
    %411 = arith.mulf %395, %403 : vector<8x32xf32>
    %412 = arith.addf %410, %411 : vector<8x32xf32>
    %413 = math.tanh %412 : vector<8x32xf32>
    %414 = arith.mulf %409, %413 : vector<8x32xf32>
    %415 = tpu.concatenate %389, %414 in 1 : vector<8x32xf32>, vector<8x32xf32> -> vector<8x64xf32>
    %cst_59 = arith.constant dense<0.000000e+00> : vector<8x256xf32>
    %416 = tpu.matmul %415, %6, %cst_59 {dimension_numbers = #tpu.dot_dimension_numbers<[1], [0], [0], [1], [0, 0, 1, 1], [], []>} : vector<8x64xf32>, vector<64x256xf32>, vector<8x256xf32> -> vector<8x256xf32>
    %417 = vector.extract_strided_slice %5 {offsets = [56, 0], sizes = [8, 128], strides = [1, 1]} : vector<64x256xf32> to vector<8x128xf32>
    %418 = vector.extract_strided_slice %416 {offsets = [0, 0], sizes = [8, 128], strides = [1, 1]} : vector<8x256xf32> to vector<8x128xf32>
    %419 = arith.addf %417, %418 : vector<8x128xf32>
    %420 = vector.extract_strided_slice %5 {offsets = [0, 128], sizes = [8, 128], strides = [1, 1]} : vector<64x256xf32> to vector<8x128xf32>
    %421 = vector.extract_strided_slice %416 {offsets = [0, 128], sizes = [8, 128], strides = [1, 1]} : vector<8x256xf32> to vector<8x128xf32>
    %422 = arith.addf %420, %421 : vector<8x128xf32>
    %423 = vector.extract_strided_slice %419 {offsets = [0, 0], sizes = [8, 32], strides = [1, 1]} : vector<8x128xf32> to vector<8x32xf32>
    %424 = arith.negf %423 : vector<8x32xf32>
    %425 = math.exp %424 : vector<8x32xf32>
    %cst_60 = arith.constant 1.000000e+00 : f32
    %426 = vector.broadcast %cst_60 : f32 to vector<8x32xf32>
    %427 = arith.addf %426, %425 : vector<8x32xf32>
    %428 = arith.divf %426, %427 : vector<8x32xf32>
    %429 = vector.extract_strided_slice %419 {offsets = [0, 32], sizes = [8, 32], strides = [1, 1]} : vector<8x128xf32> to vector<8x32xf32>
    %430 = arith.negf %429 : vector<8x32xf32>
    %431 = math.exp %430 : vector<8x32xf32>
    %cst_61 = arith.constant 1.000000e+00 : f32
    %432 = vector.broadcast %cst_61 : f32 to vector<8x32xf32>
    %433 = arith.addf %432, %431 : vector<8x32xf32>
    %434 = arith.divf %432, %433 : vector<8x32xf32>
    %435 = vector.extract_strided_slice %419 {offsets = [0, 64], sizes = [8, 32], strides = [1, 1]} : vector<8x128xf32> to vector<8x32xf32>
    %436 = math.tanh %435 : vector<8x32xf32>
    %437 = vector.extract_strided_slice %419 {offsets = [0, 96], sizes = [8, 32], strides = [1, 1]} : vector<8x128xf32> to vector<8x32xf32>
    %438 = arith.negf %437 : vector<8x32xf32>
    %439 = math.exp %438 : vector<8x32xf32>
    %cst_62 = arith.constant 1.000000e+00 : f32
    %440 = vector.broadcast %cst_62 : f32 to vector<8x32xf32>
    %441 = arith.addf %440, %439 : vector<8x32xf32>
    %442 = arith.divf %440, %441 : vector<8x32xf32>
    %443 = arith.mulf %434, %387 : vector<8x32xf32>
    %444 = arith.mulf %428, %436 : vector<8x32xf32>
    %445 = arith.addf %443, %444 : vector<8x32xf32>
    %446 = math.tanh %445 : vector<8x32xf32>
    %447 = arith.mulf %442, %446 : vector<8x32xf32>
    %448 = vector.extract_strided_slice %422 {offsets = [0, 0], sizes = [8, 32], strides = [1, 1]} : vector<8x128xf32> to vector<8x32xf32>
    %449 = arith.negf %448 : vector<8x32xf32>
    %450 = math.exp %449 : vector<8x32xf32>
    %cst_63 = arith.constant 1.000000e+00 : f32
    %451 = vector.broadcast %cst_63 : f32 to vector<8x32xf32>
    %452 = arith.addf %451, %450 : vector<8x32xf32>
    %453 = arith.divf %451, %452 : vector<8x32xf32>
    %454 = vector.extract_strided_slice %422 {offsets = [0, 32], sizes = [8, 32], strides = [1, 1]} : vector<8x128xf32> to vector<8x32xf32>
    %455 = arith.negf %454 : vector<8x32xf32>
    %456 = math.exp %455 : vector<8x32xf32>
    %cst_64 = arith.constant 1.000000e+00 : f32
    %457 = vector.broadcast %cst_64 : f32 to vector<8x32xf32>
    %458 = arith.addf %457, %456 : vector<8x32xf32>
    %459 = arith.divf %457, %458 : vector<8x32xf32>
    %460 = vector.extract_strided_slice %422 {offsets = [0, 64], sizes = [8, 32], strides = [1, 1]} : vector<8x128xf32> to vector<8x32xf32>
    %461 = math.tanh %460 : vector<8x32xf32>
    %462 = vector.extract_strided_slice %422 {offsets = [0, 96], sizes = [8, 32], strides = [1, 1]} : vector<8x128xf32> to vector<8x32xf32>
    %463 = arith.negf %462 : vector<8x32xf32>
    %464 = math.exp %463 : vector<8x32xf32>
    %cst_65 = arith.constant 1.000000e+00 : f32
    %465 = vector.broadcast %cst_65 : f32 to vector<8x32xf32>
    %466 = arith.addf %465, %464 : vector<8x32xf32>
    %467 = arith.divf %465, %466 : vector<8x32xf32>
    %468 = arith.mulf %459, %412 : vector<8x32xf32>
    %469 = arith.mulf %453, %461 : vector<8x32xf32>
    %470 = arith.addf %468, %469 : vector<8x32xf32>
    %471 = math.tanh %470 : vector<8x32xf32>
    %472 = arith.mulf %467, %471 : vector<8x32xf32>
    %473 = tpu.concatenate %41, %472 in 1 : vector<8x32xf32>, vector<8x32xf32> -> vector<8x64xf32>
    %474 = tpu.concatenate %99, %414 in 1 : vector<8x32xf32>, vector<8x32xf32> -> vector<8x64xf32>
    %475 = tpu.concatenate %157, %356 in 1 : vector<8x32xf32>, vector<8x32xf32> -> vector<8x64xf32>
    %476 = tpu.concatenate %215, %298 in 1 : vector<8x32xf32>, vector<8x32xf32> -> vector<8x64xf32>
    %477 = tpu.concatenate %273, %240 in 1 : vector<8x32xf32>, vector<8x32xf32> -> vector<8x64xf32>
    %478 = tpu.concatenate %331, %182 in 1 : vector<8x32xf32>, vector<8x32xf32> -> vector<8x64xf32>
    %479 = tpu.concatenate %389, %124 in 1 : vector<8x32xf32>, vector<8x32xf32> -> vector<8x64xf32>
    %480 = tpu.concatenate %447, %66 in 1 : vector<8x32xf32>, vector<8x32xf32> -> vector<8x64xf32>
    %481 = tpu.concatenate %473, %474, %475, %476, %477, %478, %479, %480 in 0 : vector<8x64xf32>, vector<8x64xf32>, vector<8x64xf32>, vector<8x64xf32>, vector<8x64xf32>, vector<8x64xf32>, vector<8x64xf32>, vector<8x64xf32> -> vector<64x64xf32>
    %c0_66 = arith.constant 0 : index
    %c0_67 = arith.constant 0 : index
    %482 = vector.load %arg4[%c0_66, %c0_67] : memref<64x256xf32, #tpu.memory_space<vmem>>, vector<64x256xf32>
    %cst_68 = arith.constant dense<0.000000e+00> : vector<64x256xf32>
    %483 = tpu.matmul %481, %482, %cst_68 {dimension_numbers = #tpu.dot_dimension_numbers<[1], [0], [0], [1], [0, 0, 1, 1], [], []>} : vector<64x64xf32>, vector<64x256xf32>, vector<64x256xf32> -> vector<64x256xf32>
    %c0_69 = arith.constant 0 : index
    %c0_70 = arith.constant 0 : index
    %484 = vector.load %arg5[%c0_69, %c0_70] : memref<1x256xf32, #tpu.memory_space<vmem>>, vector<1x256xf32>
    %485 = vector.broadcast %484 : vector<1x256xf32> to vector<64x256xf32>
    %486 = arith.addf %483, %485 : vector<64x256xf32>
    %c0_71 = arith.constant 0 : index
    %c0_72 = arith.constant 0 : index
    %487 = vector.load %arg6[%c0_71, %c0_72] : memref<64x256xf32, #tpu.memory_space<vmem>>, vector<64x256xf32>
    %cst_73 = arith.constant 0.000000e+00 : f32
    %488 = vector.broadcast %cst_73 : f32 to vector<8x64xf32>
    %cst_74 = arith.constant 0.000000e+00 : f32
    %489 = vector.broadcast %cst_74 : f32 to vector<8x32xf32>
    %cst_75 = arith.constant 0.000000e+00 : f32
    %490 = vector.broadcast %cst_75 : f32 to vector<8x32xf32>
    %cst_76 = arith.constant dense<0.000000e+00> : vector<8x256xf32>
    %491 = tpu.matmul %488, %487, %cst_76 {dimension_numbers = #tpu.dot_dimension_numbers<[1], [0], [0], [1], [0, 0, 1, 1], [], []>} : vector<8x64xf32>, vector<64x256xf32>, vector<8x256xf32> -> vector<8x256xf32>
    %492 = vector.extract_strided_slice %486 {offsets = [0, 0], sizes = [8, 128], strides = [1, 1]} : vector<64x256xf32> to vector<8x128xf32>
    %493 = vector.extract_strided_slice %491 {offsets = [0, 0], sizes = [8, 128], strides = [1, 1]} : vector<8x256xf32> to vector<8x128xf32>
    %494 = arith.addf %492, %493 : vector<8x128xf32>
    %495 = vector.extract_strided_slice %486 {offsets = [56, 128], sizes = [8, 128], strides = [1, 1]} : vector<64x256xf32> to vector<8x128xf32>
    %496 = vector.extract_strided_slice %491 {offsets = [0, 128], sizes = [8, 128], strides = [1, 1]} : vector<8x256xf32> to vector<8x128xf32>
    %497 = arith.addf %495, %496 : vector<8x128xf32>
    %498 = vector.extract_strided_slice %494 {offsets = [0, 0], sizes = [8, 32], strides = [1, 1]} : vector<8x128xf32> to vector<8x32xf32>
    %499 = arith.negf %498 : vector<8x32xf32>
    %500 = math.exp %499 : vector<8x32xf32>
    %cst_77 = arith.constant 1.000000e+00 : f32
    %501 = vector.broadcast %cst_77 : f32 to vector<8x32xf32>
    %502 = arith.addf %501, %500 : vector<8x32xf32>
    %503 = arith.divf %501, %502 : vector<8x32xf32>
    %504 = vector.extract_strided_slice %494 {offsets = [0, 32], sizes = [8, 32], strides = [1, 1]} : vector<8x128xf32> to vector<8x32xf32>
    %505 = arith.negf %504 : vector<8x32xf32>
    %506 = math.exp %505 : vector<8x32xf32>
    %cst_78 = arith.constant 1.000000e+00 : f32
    %507 = vector.broadcast %cst_78 : f32 to vector<8x32xf32>
    %508 = arith.addf %507, %506 : vector<8x32xf32>
    %509 = arith.divf %507, %508 : vector<8x32xf32>
    %510 = vector.extract_strided_slice %494 {offsets = [0, 64], sizes = [8, 32], strides = [1, 1]} : vector<8x128xf32> to vector<8x32xf32>
    %511 = math.tanh %510 : vector<8x32xf32>
    %512 = vector.extract_strided_slice %494 {offsets = [0, 96], sizes = [8, 32], strides = [1, 1]} : vector<8x128xf32> to vector<8x32xf32>
    %513 = arith.negf %512 : vector<8x32xf32>
    %514 = math.exp %513 : vector<8x32xf32>
    %cst_79 = arith.constant 1.000000e+00 : f32
    %515 = vector.broadcast %cst_79 : f32 to vector<8x32xf32>
    %516 = arith.addf %515, %514 : vector<8x32xf32>
    %517 = arith.divf %515, %516 : vector<8x32xf32>
    %518 = arith.mulf %509, %489 : vector<8x32xf32>
    %519 = arith.mulf %503, %511 : vector<8x32xf32>
    %520 = arith.addf %518, %519 : vector<8x32xf32>
    %521 = math.tanh %520 : vector<8x32xf32>
    %522 = arith.mulf %517, %521 : vector<8x32xf32>
    %523 = vector.extract_strided_slice %497 {offsets = [0, 0], sizes = [8, 32], strides = [1, 1]} : vector<8x128xf32> to vector<8x32xf32>
    %524 = arith.negf %523 : vector<8x32xf32>
    %525 = math.exp %524 : vector<8x32xf32>
    %cst_80 = arith.constant 1.000000e+00 : f32
    %526 = vector.broadcast %cst_80 : f32 to vector<8x32xf32>
    %527 = arith.addf %526, %525 : vector<8x32xf32>
    %528 = arith.divf %526, %527 : vector<8x32xf32>
    %529 = vector.extract_strided_slice %497 {offsets = [0, 32], sizes = [8, 32], strides = [1, 1]} : vector<8x128xf32> to vector<8x32xf32>
    %530 = arith.negf %529 : vector<8x32xf32>
    %531 = math.exp %530 : vector<8x32xf32>
    %cst_81 = arith.constant 1.000000e+00 : f32
    %532 = vector.broadcast %cst_81 : f32 to vector<8x32xf32>
    %533 = arith.addf %532, %531 : vector<8x32xf32>
    %534 = arith.divf %532, %533 : vector<8x32xf32>
    %535 = vector.extract_strided_slice %497 {offsets = [0, 64], sizes = [8, 32], strides = [1, 1]} : vector<8x128xf32> to vector<8x32xf32>
    %536 = math.tanh %535 : vector<8x32xf32>
    %537 = vector.extract_strided_slice %497 {offsets = [0, 96], sizes = [8, 32], strides = [1, 1]} : vector<8x128xf32> to vector<8x32xf32>
    %538 = arith.negf %537 : vector<8x32xf32>
    %539 = math.exp %538 : vector<8x32xf32>
    %cst_82 = arith.constant 1.000000e+00 : f32
    %540 = vector.broadcast %cst_82 : f32 to vector<8x32xf32>
    %541 = arith.addf %540, %539 : vector<8x32xf32>
    %542 = arith.divf %540, %541 : vector<8x32xf32>
    %543 = arith.mulf %534, %490 : vector<8x32xf32>
    %544 = arith.mulf %528, %536 : vector<8x32xf32>
    %545 = arith.addf %543, %544 : vector<8x32xf32>
    %546 = math.tanh %545 : vector<8x32xf32>
    %547 = arith.mulf %542, %546 : vector<8x32xf32>
    %548 = tpu.concatenate %522, %547 in 1 : vector<8x32xf32>, vector<8x32xf32> -> vector<8x64xf32>
    %cst_83 = arith.constant dense<0.000000e+00> : vector<8x256xf32>
    %549 = tpu.matmul %548, %487, %cst_83 {dimension_numbers = #tpu.dot_dimension_numbers<[1], [0], [0], [1], [0, 0, 1, 1], [], []>} : vector<8x64xf32>, vector<64x256xf32>, vector<8x256xf32> -> vector<8x256xf32>
    %550 = vector.extract_strided_slice %486 {offsets = [8, 0], sizes = [8, 128], strides = [1, 1]} : vector<64x256xf32> to vector<8x128xf32>
    %551 = vector.extract_strided_slice %549 {offsets = [0, 0], sizes = [8, 128], strides = [1, 1]} : vector<8x256xf32> to vector<8x128xf32>
    %552 = arith.addf %550, %551 : vector<8x128xf32>
    %553 = vector.extract_strided_slice %486 {offsets = [48, 128], sizes = [8, 128], strides = [1, 1]} : vector<64x256xf32> to vector<8x128xf32>
    %554 = vector.extract_strided_slice %549 {offsets = [0, 128], sizes = [8, 128], strides = [1, 1]} : vector<8x256xf32> to vector<8x128xf32>
    %555 = arith.addf %553, %554 : vector<8x128xf32>
    %556 = vector.extract_strided_slice %552 {offsets = [0, 0], sizes = [8, 32], strides = [1, 1]} : vector<8x128xf32> to vector<8x32xf32>
    %557 = arith.negf %556 : vector<8x32xf32>
    %558 = math.exp %557 : vector<8x32xf32>
    %cst_84 = arith.constant 1.000000e+00 : f32
    %559 = vector.broadcast %cst_84 : f32 to vector<8x32xf32>
    %560 = arith.addf %559, %558 : vector<8x32xf32>
    %561 = arith.divf %559, %560 : vector<8x32xf32>
    %562 = vector.extract_strided_slice %552 {offsets = [0, 32], sizes = [8, 32], strides = [1, 1]} : vector<8x128xf32> to vector<8x32xf32>
    %563 = arith.negf %562 : vector<8x32xf32>
    %564 = math.exp %563 : vector<8x32xf32>
    %cst_85 = arith.constant 1.000000e+00 : f32
    %565 = vector.broadcast %cst_85 : f32 to vector<8x32xf32>
    %566 = arith.addf %565, %564 : vector<8x32xf32>
    %567 = arith.divf %565, %566 : vector<8x32xf32>
    %568 = vector.extract_strided_slice %552 {offsets = [0, 64], sizes = [8, 32], strides = [1, 1]} : vector<8x128xf32> to vector<8x32xf32>
    %569 = math.tanh %568 : vector<8x32xf32>
    %570 = vector.extract_strided_slice %552 {offsets = [0, 96], sizes = [8, 32], strides = [1, 1]} : vector<8x128xf32> to vector<8x32xf32>
    %571 = arith.negf %570 : vector<8x32xf32>
    %572 = math.exp %571 : vector<8x32xf32>
    %cst_86 = arith.constant 1.000000e+00 : f32
    %573 = vector.broadcast %cst_86 : f32 to vector<8x32xf32>
    %574 = arith.addf %573, %572 : vector<8x32xf32>
    %575 = arith.divf %573, %574 : vector<8x32xf32>
    %576 = arith.mulf %567, %520 : vector<8x32xf32>
    %577 = arith.mulf %561, %569 : vector<8x32xf32>
    %578 = arith.addf %576, %577 : vector<8x32xf32>
    %579 = math.tanh %578 : vector<8x32xf32>
    %580 = arith.mulf %575, %579 : vector<8x32xf32>
    %581 = vector.extract_strided_slice %555 {offsets = [0, 0], sizes = [8, 32], strides = [1, 1]} : vector<8x128xf32> to vector<8x32xf32>
    %582 = arith.negf %581 : vector<8x32xf32>
    %583 = math.exp %582 : vector<8x32xf32>
    %cst_87 = arith.constant 1.000000e+00 : f32
    %584 = vector.broadcast %cst_87 : f32 to vector<8x32xf32>
    %585 = arith.addf %584, %583 : vector<8x32xf32>
    %586 = arith.divf %584, %585 : vector<8x32xf32>
    %587 = vector.extract_strided_slice %555 {offsets = [0, 32], sizes = [8, 32], strides = [1, 1]} : vector<8x128xf32> to vector<8x32xf32>
    %588 = arith.negf %587 : vector<8x32xf32>
    %589 = math.exp %588 : vector<8x32xf32>
    %cst_88 = arith.constant 1.000000e+00 : f32
    %590 = vector.broadcast %cst_88 : f32 to vector<8x32xf32>
    %591 = arith.addf %590, %589 : vector<8x32xf32>
    %592 = arith.divf %590, %591 : vector<8x32xf32>
    %593 = vector.extract_strided_slice %555 {offsets = [0, 64], sizes = [8, 32], strides = [1, 1]} : vector<8x128xf32> to vector<8x32xf32>
    %594 = math.tanh %593 : vector<8x32xf32>
    %595 = vector.extract_strided_slice %555 {offsets = [0, 96], sizes = [8, 32], strides = [1, 1]} : vector<8x128xf32> to vector<8x32xf32>
    %596 = arith.negf %595 : vector<8x32xf32>
    %597 = math.exp %596 : vector<8x32xf32>
    %cst_89 = arith.constant 1.000000e+00 : f32
    %598 = vector.broadcast %cst_89 : f32 to vector<8x32xf32>
    %599 = arith.addf %598, %597 : vector<8x32xf32>
    %600 = arith.divf %598, %599 : vector<8x32xf32>
    %601 = arith.mulf %592, %545 : vector<8x32xf32>
    %602 = arith.mulf %586, %594 : vector<8x32xf32>
    %603 = arith.addf %601, %602 : vector<8x32xf32>
    %604 = math.tanh %603 : vector<8x32xf32>
    %605 = arith.mulf %600, %604 : vector<8x32xf32>
    %606 = tpu.concatenate %580, %605 in 1 : vector<8x32xf32>, vector<8x32xf32> -> vector<8x64xf32>
    %cst_90 = arith.constant dense<0.000000e+00> : vector<8x256xf32>
    %607 = tpu.matmul %606, %487, %cst_90 {dimension_numbers = #tpu.dot_dimension_numbers<[1], [0], [0], [1], [0, 0, 1, 1], [], []>} : vector<8x64xf32>, vector<64x256xf32>, vector<8x256xf32> -> vector<8x256xf32>
    %608 = vector.extract_strided_slice %486 {offsets = [16, 0], sizes = [8, 128], strides = [1, 1]} : vector<64x256xf32> to vector<8x128xf32>
    %609 = vector.extract_strided_slice %607 {offsets = [0, 0], sizes = [8, 128], strides = [1, 1]} : vector<8x256xf32> to vector<8x128xf32>
    %610 = arith.addf %608, %609 : vector<8x128xf32>
    %611 = vector.extract_strided_slice %486 {offsets = [40, 128], sizes = [8, 128], strides = [1, 1]} : vector<64x256xf32> to vector<8x128xf32>
    %612 = vector.extract_strided_slice %607 {offsets = [0, 128], sizes = [8, 128], strides = [1, 1]} : vector<8x256xf32> to vector<8x128xf32>
    %613 = arith.addf %611, %612 : vector<8x128xf32>
    %614 = vector.extract_strided_slice %610 {offsets = [0, 0], sizes = [8, 32], strides = [1, 1]} : vector<8x128xf32> to vector<8x32xf32>
    %615 = arith.negf %614 : vector<8x32xf32>
    %616 = math.exp %615 : vector<8x32xf32>
    %cst_91 = arith.constant 1.000000e+00 : f32
    %617 = vector.broadcast %cst_91 : f32 to vector<8x32xf32>
    %618 = arith.addf %617, %616 : vector<8x32xf32>
    %619 = arith.divf %617, %618 : vector<8x32xf32>
    %620 = vector.extract_strided_slice %610 {offsets = [0, 32], sizes = [8, 32], strides = [1, 1]} : vector<8x128xf32> to vector<8x32xf32>
    %621 = arith.negf %620 : vector<8x32xf32>
    %622 = math.exp %621 : vector<8x32xf32>
    %cst_92 = arith.constant 1.000000e+00 : f32
    %623 = vector.broadcast %cst_92 : f32 to vector<8x32xf32>
    %624 = arith.addf %623, %622 : vector<8x32xf32>
    %625 = arith.divf %623, %624 : vector<8x32xf32>
    %626 = vector.extract_strided_slice %610 {offsets = [0, 64], sizes = [8, 32], strides = [1, 1]} : vector<8x128xf32> to vector<8x32xf32>
    %627 = math.tanh %626 : vector<8x32xf32>
    %628 = vector.extract_strided_slice %610 {offsets = [0, 96], sizes = [8, 32], strides = [1, 1]} : vector<8x128xf32> to vector<8x32xf32>
    %629 = arith.negf %628 : vector<8x32xf32>
    %630 = math.exp %629 : vector<8x32xf32>
    %cst_93 = arith.constant 1.000000e+00 : f32
    %631 = vector.broadcast %cst_93 : f32 to vector<8x32xf32>
    %632 = arith.addf %631, %630 : vector<8x32xf32>
    %633 = arith.divf %631, %632 : vector<8x32xf32>
    %634 = arith.mulf %625, %578 : vector<8x32xf32>
    %635 = arith.mulf %619, %627 : vector<8x32xf32>
    %636 = arith.addf %634, %635 : vector<8x32xf32>
    %637 = math.tanh %636 : vector<8x32xf32>
    %638 = arith.mulf %633, %637 : vector<8x32xf32>
    %639 = vector.extract_strided_slice %613 {offsets = [0, 0], sizes = [8, 32], strides = [1, 1]} : vector<8x128xf32> to vector<8x32xf32>
    %640 = arith.negf %639 : vector<8x32xf32>
    %641 = math.exp %640 : vector<8x32xf32>
    %cst_94 = arith.constant 1.000000e+00 : f32
    %642 = vector.broadcast %cst_94 : f32 to vector<8x32xf32>
    %643 = arith.addf %642, %641 : vector<8x32xf32>
    %644 = arith.divf %642, %643 : vector<8x32xf32>
    %645 = vector.extract_strided_slice %613 {offsets = [0, 32], sizes = [8, 32], strides = [1, 1]} : vector<8x128xf32> to vector<8x32xf32>
    %646 = arith.negf %645 : vector<8x32xf32>
    %647 = math.exp %646 : vector<8x32xf32>
    %cst_95 = arith.constant 1.000000e+00 : f32
    %648 = vector.broadcast %cst_95 : f32 to vector<8x32xf32>
    %649 = arith.addf %648, %647 : vector<8x32xf32>
    %650 = arith.divf %648, %649 : vector<8x32xf32>
    %651 = vector.extract_strided_slice %613 {offsets = [0, 64], sizes = [8, 32], strides = [1, 1]} : vector<8x128xf32> to vector<8x32xf32>
    %652 = math.tanh %651 : vector<8x32xf32>
    %653 = vector.extract_strided_slice %613 {offsets = [0, 96], sizes = [8, 32], strides = [1, 1]} : vector<8x128xf32> to vector<8x32xf32>
    %654 = arith.negf %653 : vector<8x32xf32>
    %655 = math.exp %654 : vector<8x32xf32>
    %cst_96 = arith.constant 1.000000e+00 : f32
    %656 = vector.broadcast %cst_96 : f32 to vector<8x32xf32>
    %657 = arith.addf %656, %655 : vector<8x32xf32>
    %658 = arith.divf %656, %657 : vector<8x32xf32>
    %659 = arith.mulf %650, %603 : vector<8x32xf32>
    %660 = arith.mulf %644, %652 : vector<8x32xf32>
    %661 = arith.addf %659, %660 : vector<8x32xf32>
    %662 = math.tanh %661 : vector<8x32xf32>
    %663 = arith.mulf %658, %662 : vector<8x32xf32>
    %664 = tpu.concatenate %638, %663 in 1 : vector<8x32xf32>, vector<8x32xf32> -> vector<8x64xf32>
    %cst_97 = arith.constant dense<0.000000e+00> : vector<8x256xf32>
    %665 = tpu.matmul %664, %487, %cst_97 {dimension_numbers = #tpu.dot_dimension_numbers<[1], [0], [0], [1], [0, 0, 1, 1], [], []>} : vector<8x64xf32>, vector<64x256xf32>, vector<8x256xf32> -> vector<8x256xf32>
    %666 = vector.extract_strided_slice %486 {offsets = [24, 0], sizes = [8, 128], strides = [1, 1]} : vector<64x256xf32> to vector<8x128xf32>
    %667 = vector.extract_strided_slice %665 {offsets = [0, 0], sizes = [8, 128], strides = [1, 1]} : vector<8x256xf32> to vector<8x128xf32>
    %668 = arith.addf %666, %667 : vector<8x128xf32>
    %669 = vector.extract_strided_slice %486 {offsets = [32, 128], sizes = [8, 128], strides = [1, 1]} : vector<64x256xf32> to vector<8x128xf32>
    %670 = vector.extract_strided_slice %665 {offsets = [0, 128], sizes = [8, 128], strides = [1, 1]} : vector<8x256xf32> to vector<8x128xf32>
    %671 = arith.addf %669, %670 : vector<8x128xf32>
    %672 = vector.extract_strided_slice %668 {offsets = [0, 0], sizes = [8, 32], strides = [1, 1]} : vector<8x128xf32> to vector<8x32xf32>
    %673 = arith.negf %672 : vector<8x32xf32>
    %674 = math.exp %673 : vector<8x32xf32>
    %cst_98 = arith.constant 1.000000e+00 : f32
    %675 = vector.broadcast %cst_98 : f32 to vector<8x32xf32>
    %676 = arith.addf %675, %674 : vector<8x32xf32>
    %677 = arith.divf %675, %676 : vector<8x32xf32>
    %678 = vector.extract_strided_slice %668 {offsets = [0, 32], sizes = [8, 32], strides = [1, 1]} : vector<8x128xf32> to vector<8x32xf32>
    %679 = arith.negf %678 : vector<8x32xf32>
    %680 = math.exp %679 : vector<8x32xf32>
    %cst_99 = arith.constant 1.000000e+00 : f32
    %681 = vector.broadcast %cst_99 : f32 to vector<8x32xf32>
    %682 = arith.addf %681, %680 : vector<8x32xf32>
    %683 = arith.divf %681, %682 : vector<8x32xf32>
    %684 = vector.extract_strided_slice %668 {offsets = [0, 64], sizes = [8, 32], strides = [1, 1]} : vector<8x128xf32> to vector<8x32xf32>
    %685 = math.tanh %684 : vector<8x32xf32>
    %686 = vector.extract_strided_slice %668 {offsets = [0, 96], sizes = [8, 32], strides = [1, 1]} : vector<8x128xf32> to vector<8x32xf32>
    %687 = arith.negf %686 : vector<8x32xf32>
    %688 = math.exp %687 : vector<8x32xf32>
    %cst_100 = arith.constant 1.000000e+00 : f32
    %689 = vector.broadcast %cst_100 : f32 to vector<8x32xf32>
    %690 = arith.addf %689, %688 : vector<8x32xf32>
    %691 = arith.divf %689, %690 : vector<8x32xf32>
    %692 = arith.mulf %683, %636 : vector<8x32xf32>
    %693 = arith.mulf %677, %685 : vector<8x32xf32>
    %694 = arith.addf %692, %693 : vector<8x32xf32>
    %695 = math.tanh %694 : vector<8x32xf32>
    %696 = arith.mulf %691, %695 : vector<8x32xf32>
    %697 = vector.extract_strided_slice %671 {offsets = [0, 0], sizes = [8, 32], strides = [1, 1]} : vector<8x128xf32> to vector<8x32xf32>
    %698 = arith.negf %697 : vector<8x32xf32>
    %699 = math.exp %698 : vector<8x32xf32>
    %cst_101 = arith.constant 1.000000e+00 : f32
    %700 = vector.broadcast %cst_101 : f32 to vector<8x32xf32>
    %701 = arith.addf %700, %699 : vector<8x32xf32>
    %702 = arith.divf %700, %701 : vector<8x32xf32>
    %703 = vector.extract_strided_slice %671 {offsets = [0, 32], sizes = [8, 32], strides = [1, 1]} : vector<8x128xf32> to vector<8x32xf32>
    %704 = arith.negf %703 : vector<8x32xf32>
    %705 = math.exp %704 : vector<8x32xf32>
    %cst_102 = arith.constant 1.000000e+00 : f32
    %706 = vector.broadcast %cst_102 : f32 to vector<8x32xf32>
    %707 = arith.addf %706, %705 : vector<8x32xf32>
    %708 = arith.divf %706, %707 : vector<8x32xf32>
    %709 = vector.extract_strided_slice %671 {offsets = [0, 64], sizes = [8, 32], strides = [1, 1]} : vector<8x128xf32> to vector<8x32xf32>
    %710 = math.tanh %709 : vector<8x32xf32>
    %711 = vector.extract_strided_slice %671 {offsets = [0, 96], sizes = [8, 32], strides = [1, 1]} : vector<8x128xf32> to vector<8x32xf32>
    %712 = arith.negf %711 : vector<8x32xf32>
    %713 = math.exp %712 : vector<8x32xf32>
    %cst_103 = arith.constant 1.000000e+00 : f32
    %714 = vector.broadcast %cst_103 : f32 to vector<8x32xf32>
    %715 = arith.addf %714, %713 : vector<8x32xf32>
    %716 = arith.divf %714, %715 : vector<8x32xf32>
    %717 = arith.mulf %708, %661 : vector<8x32xf32>
    %718 = arith.mulf %702, %710 : vector<8x32xf32>
    %719 = arith.addf %717, %718 : vector<8x32xf32>
    %720 = math.tanh %719 : vector<8x32xf32>
    %721 = arith.mulf %716, %720 : vector<8x32xf32>
    %722 = tpu.concatenate %696, %721 in 1 : vector<8x32xf32>, vector<8x32xf32> -> vector<8x64xf32>
    %cst_104 = arith.constant dense<0.000000e+00> : vector<8x256xf32>
    %723 = tpu.matmul %722, %487, %cst_104 {dimension_numbers = #tpu.dot_dimension_numbers<[1], [0], [0], [1], [0, 0, 1, 1], [], []>} : vector<8x64xf32>, vector<64x256xf32>, vector<8x256xf32> -> vector<8x256xf32>
    %724 = vector.extract_strided_slice %486 {offsets = [32, 0], sizes = [8, 128], strides = [1, 1]} : vector<64x256xf32> to vector<8x128xf32>
    %725 = vector.extract_strided_slice %723 {offsets = [0, 0], sizes = [8, 128], strides = [1, 1]} : vector<8x256xf32> to vector<8x128xf32>
    %726 = arith.addf %724, %725 : vector<8x128xf32>
    %727 = vector.extract_strided_slice %486 {offsets = [24, 128], sizes = [8, 128], strides = [1, 1]} : vector<64x256xf32> to vector<8x128xf32>
    %728 = vector.extract_strided_slice %723 {offsets = [0, 128], sizes = [8, 128], strides = [1, 1]} : vector<8x256xf32> to vector<8x128xf32>
    %729 = arith.addf %727, %728 : vector<8x128xf32>
    %730 = vector.extract_strided_slice %726 {offsets = [0, 0], sizes = [8, 32], strides = [1, 1]} : vector<8x128xf32> to vector<8x32xf32>
    %731 = arith.negf %730 : vector<8x32xf32>
    %732 = math.exp %731 : vector<8x32xf32>
    %cst_105 = arith.constant 1.000000e+00 : f32
    %733 = vector.broadcast %cst_105 : f32 to vector<8x32xf32>
    %734 = arith.addf %733, %732 : vector<8x32xf32>
    %735 = arith.divf %733, %734 : vector<8x32xf32>
    %736 = vector.extract_strided_slice %726 {offsets = [0, 32], sizes = [8, 32], strides = [1, 1]} : vector<8x128xf32> to vector<8x32xf32>
    %737 = arith.negf %736 : vector<8x32xf32>
    %738 = math.exp %737 : vector<8x32xf32>
    %cst_106 = arith.constant 1.000000e+00 : f32
    %739 = vector.broadcast %cst_106 : f32 to vector<8x32xf32>
    %740 = arith.addf %739, %738 : vector<8x32xf32>
    %741 = arith.divf %739, %740 : vector<8x32xf32>
    %742 = vector.extract_strided_slice %726 {offsets = [0, 64], sizes = [8, 32], strides = [1, 1]} : vector<8x128xf32> to vector<8x32xf32>
    %743 = math.tanh %742 : vector<8x32xf32>
    %744 = vector.extract_strided_slice %726 {offsets = [0, 96], sizes = [8, 32], strides = [1, 1]} : vector<8x128xf32> to vector<8x32xf32>
    %745 = arith.negf %744 : vector<8x32xf32>
    %746 = math.exp %745 : vector<8x32xf32>
    %cst_107 = arith.constant 1.000000e+00 : f32
    %747 = vector.broadcast %cst_107 : f32 to vector<8x32xf32>
    %748 = arith.addf %747, %746 : vector<8x32xf32>
    %749 = arith.divf %747, %748 : vector<8x32xf32>
    %750 = arith.mulf %741, %694 : vector<8x32xf32>
    %751 = arith.mulf %735, %743 : vector<8x32xf32>
    %752 = arith.addf %750, %751 : vector<8x32xf32>
    %753 = math.tanh %752 : vector<8x32xf32>
    %754 = arith.mulf %749, %753 : vector<8x32xf32>
    %755 = vector.extract_strided_slice %729 {offsets = [0, 0], sizes = [8, 32], strides = [1, 1]} : vector<8x128xf32> to vector<8x32xf32>
    %756 = arith.negf %755 : vector<8x32xf32>
    %757 = math.exp %756 : vector<8x32xf32>
    %cst_108 = arith.constant 1.000000e+00 : f32
    %758 = vector.broadcast %cst_108 : f32 to vector<8x32xf32>
    %759 = arith.addf %758, %757 : vector<8x32xf32>
    %760 = arith.divf %758, %759 : vector<8x32xf32>
    %761 = vector.extract_strided_slice %729 {offsets = [0, 32], sizes = [8, 32], strides = [1, 1]} : vector<8x128xf32> to vector<8x32xf32>
    %762 = arith.negf %761 : vector<8x32xf32>
    %763 = math.exp %762 : vector<8x32xf32>
    %cst_109 = arith.constant 1.000000e+00 : f32
    %764 = vector.broadcast %cst_109 : f32 to vector<8x32xf32>
    %765 = arith.addf %764, %763 : vector<8x32xf32>
    %766 = arith.divf %764, %765 : vector<8x32xf32>
    %767 = vector.extract_strided_slice %729 {offsets = [0, 64], sizes = [8, 32], strides = [1, 1]} : vector<8x128xf32> to vector<8x32xf32>
    %768 = math.tanh %767 : vector<8x32xf32>
    %769 = vector.extract_strided_slice %729 {offsets = [0, 96], sizes = [8, 32], strides = [1, 1]} : vector<8x128xf32> to vector<8x32xf32>
    %770 = arith.negf %769 : vector<8x32xf32>
    %771 = math.exp %770 : vector<8x32xf32>
    %cst_110 = arith.constant 1.000000e+00 : f32
    %772 = vector.broadcast %cst_110 : f32 to vector<8x32xf32>
    %773 = arith.addf %772, %771 : vector<8x32xf32>
    %774 = arith.divf %772, %773 : vector<8x32xf32>
    %775 = arith.mulf %766, %719 : vector<8x32xf32>
    %776 = arith.mulf %760, %768 : vector<8x32xf32>
    %777 = arith.addf %775, %776 : vector<8x32xf32>
    %778 = math.tanh %777 : vector<8x32xf32>
    %779 = arith.mulf %774, %778 : vector<8x32xf32>
    %780 = tpu.concatenate %754, %779 in 1 : vector<8x32xf32>, vector<8x32xf32> -> vector<8x64xf32>
    %cst_111 = arith.constant dense<0.000000e+00> : vector<8x256xf32>
    %781 = tpu.matmul %780, %487, %cst_111 {dimension_numbers = #tpu.dot_dimension_numbers<[1], [0], [0], [1], [0, 0, 1, 1], [], []>} : vector<8x64xf32>, vector<64x256xf32>, vector<8x256xf32> -> vector<8x256xf32>
    %782 = vector.extract_strided_slice %486 {offsets = [40, 0], sizes = [8, 128], strides = [1, 1]} : vector<64x256xf32> to vector<8x128xf32>
    %783 = vector.extract_strided_slice %781 {offsets = [0, 0], sizes = [8, 128], strides = [1, 1]} : vector<8x256xf32> to vector<8x128xf32>
    %784 = arith.addf %782, %783 : vector<8x128xf32>
    %785 = vector.extract_strided_slice %486 {offsets = [16, 128], sizes = [8, 128], strides = [1, 1]} : vector<64x256xf32> to vector<8x128xf32>
    %786 = vector.extract_strided_slice %781 {offsets = [0, 128], sizes = [8, 128], strides = [1, 1]} : vector<8x256xf32> to vector<8x128xf32>
    %787 = arith.addf %785, %786 : vector<8x128xf32>
    %788 = vector.extract_strided_slice %784 {offsets = [0, 0], sizes = [8, 32], strides = [1, 1]} : vector<8x128xf32> to vector<8x32xf32>
    %789 = arith.negf %788 : vector<8x32xf32>
    %790 = math.exp %789 : vector<8x32xf32>
    %cst_112 = arith.constant 1.000000e+00 : f32
    %791 = vector.broadcast %cst_112 : f32 to vector<8x32xf32>
    %792 = arith.addf %791, %790 : vector<8x32xf32>
    %793 = arith.divf %791, %792 : vector<8x32xf32>
    %794 = vector.extract_strided_slice %784 {offsets = [0, 32], sizes = [8, 32], strides = [1, 1]} : vector<8x128xf32> to vector<8x32xf32>
    %795 = arith.negf %794 : vector<8x32xf32>
    %796 = math.exp %795 : vector<8x32xf32>
    %cst_113 = arith.constant 1.000000e+00 : f32
    %797 = vector.broadcast %cst_113 : f32 to vector<8x32xf32>
    %798 = arith.addf %797, %796 : vector<8x32xf32>
    %799 = arith.divf %797, %798 : vector<8x32xf32>
    %800 = vector.extract_strided_slice %784 {offsets = [0, 64], sizes = [8, 32], strides = [1, 1]} : vector<8x128xf32> to vector<8x32xf32>
    %801 = math.tanh %800 : vector<8x32xf32>
    %802 = vector.extract_strided_slice %784 {offsets = [0, 96], sizes = [8, 32], strides = [1, 1]} : vector<8x128xf32> to vector<8x32xf32>
    %803 = arith.negf %802 : vector<8x32xf32>
    %804 = math.exp %803 : vector<8x32xf32>
    %cst_114 = arith.constant 1.000000e+00 : f32
    %805 = vector.broadcast %cst_114 : f32 to vector<8x32xf32>
    %806 = arith.addf %805, %804 : vector<8x32xf32>
    %807 = arith.divf %805, %806 : vector<8x32xf32>
    %808 = arith.mulf %799, %752 : vector<8x32xf32>
    %809 = arith.mulf %793, %801 : vector<8x32xf32>
    %810 = arith.addf %808, %809 : vector<8x32xf32>
    %811 = math.tanh %810 : vector<8x32xf32>
    %812 = arith.mulf %807, %811 : vector<8x32xf32>
    %813 = vector.extract_strided_slice %787 {offsets = [0, 0], sizes = [8, 32], strides = [1, 1]} : vector<8x128xf32> to vector<8x32xf32>
    %814 = arith.negf %813 : vector<8x32xf32>
    %815 = math.exp %814 : vector<8x32xf32>
    %cst_115 = arith.constant 1.000000e+00 : f32
    %816 = vector.broadcast %cst_115 : f32 to vector<8x32xf32>
    %817 = arith.addf %816, %815 : vector<8x32xf32>
    %818 = arith.divf %816, %817 : vector<8x32xf32>
    %819 = vector.extract_strided_slice %787 {offsets = [0, 32], sizes = [8, 32], strides = [1, 1]} : vector<8x128xf32> to vector<8x32xf32>
    %820 = arith.negf %819 : vector<8x32xf32>
    %821 = math.exp %820 : vector<8x32xf32>
    %cst_116 = arith.constant 1.000000e+00 : f32
    %822 = vector.broadcast %cst_116 : f32 to vector<8x32xf32>
    %823 = arith.addf %822, %821 : vector<8x32xf32>
    %824 = arith.divf %822, %823 : vector<8x32xf32>
    %825 = vector.extract_strided_slice %787 {offsets = [0, 64], sizes = [8, 32], strides = [1, 1]} : vector<8x128xf32> to vector<8x32xf32>
    %826 = math.tanh %825 : vector<8x32xf32>
    %827 = vector.extract_strided_slice %787 {offsets = [0, 96], sizes = [8, 32], strides = [1, 1]} : vector<8x128xf32> to vector<8x32xf32>
    %828 = arith.negf %827 : vector<8x32xf32>
    %829 = math.exp %828 : vector<8x32xf32>
    %cst_117 = arith.constant 1.000000e+00 : f32
    %830 = vector.broadcast %cst_117 : f32 to vector<8x32xf32>
    %831 = arith.addf %830, %829 : vector<8x32xf32>
    %832 = arith.divf %830, %831 : vector<8x32xf32>
    %833 = arith.mulf %824, %777 : vector<8x32xf32>
    %834 = arith.mulf %818, %826 : vector<8x32xf32>
    %835 = arith.addf %833, %834 : vector<8x32xf32>
    %836 = math.tanh %835 : vector<8x32xf32>
    %837 = arith.mulf %832, %836 : vector<8x32xf32>
    %838 = tpu.concatenate %812, %837 in 1 : vector<8x32xf32>, vector<8x32xf32> -> vector<8x64xf32>
    %cst_118 = arith.constant dense<0.000000e+00> : vector<8x256xf32>
    %839 = tpu.matmul %838, %487, %cst_118 {dimension_numbers = #tpu.dot_dimension_numbers<[1], [0], [0], [1], [0, 0, 1, 1], [], []>} : vector<8x64xf32>, vector<64x256xf32>, vector<8x256xf32> -> vector<8x256xf32>
    %840 = vector.extract_strided_slice %486 {offsets = [48, 0], sizes = [8, 128], strides = [1, 1]} : vector<64x256xf32> to vector<8x128xf32>
    %841 = vector.extract_strided_slice %839 {offsets = [0, 0], sizes = [8, 128], strides = [1, 1]} : vector<8x256xf32> to vector<8x128xf32>
    %842 = arith.addf %840, %841 : vector<8x128xf32>
    %843 = vector.extract_strided_slice %486 {offsets = [8, 128], sizes = [8, 128], strides = [1, 1]} : vector<64x256xf32> to vector<8x128xf32>
    %844 = vector.extract_strided_slice %839 {offsets = [0, 128], sizes = [8, 128], strides = [1, 1]} : vector<8x256xf32> to vector<8x128xf32>
    %845 = arith.addf %843, %844 : vector<8x128xf32>
    %846 = vector.extract_strided_slice %842 {offsets = [0, 0], sizes = [8, 32], strides = [1, 1]} : vector<8x128xf32> to vector<8x32xf32>
    %847 = arith.negf %846 : vector<8x32xf32>
    %848 = math.exp %847 : vector<8x32xf32>
    %cst_119 = arith.constant 1.000000e+00 : f32
    %849 = vector.broadcast %cst_119 : f32 to vector<8x32xf32>
    %850 = arith.addf %849, %848 : vector<8x32xf32>
    %851 = arith.divf %849, %850 : vector<8x32xf32>
    %852 = vector.extract_strided_slice %842 {offsets = [0, 32], sizes = [8, 32], strides = [1, 1]} : vector<8x128xf32> to vector<8x32xf32>
    %853 = arith.negf %852 : vector<8x32xf32>
    %854 = math.exp %853 : vector<8x32xf32>
    %cst_120 = arith.constant 1.000000e+00 : f32
    %855 = vector.broadcast %cst_120 : f32 to vector<8x32xf32>
    %856 = arith.addf %855, %854 : vector<8x32xf32>
    %857 = arith.divf %855, %856 : vector<8x32xf32>
    %858 = vector.extract_strided_slice %842 {offsets = [0, 64], sizes = [8, 32], strides = [1, 1]} : vector<8x128xf32> to vector<8x32xf32>
    %859 = math.tanh %858 : vector<8x32xf32>
    %860 = vector.extract_strided_slice %842 {offsets = [0, 96], sizes = [8, 32], strides = [1, 1]} : vector<8x128xf32> to vector<8x32xf32>
    %861 = arith.negf %860 : vector<8x32xf32>
    %862 = math.exp %861 : vector<8x32xf32>
    %cst_121 = arith.constant 1.000000e+00 : f32
    %863 = vector.broadcast %cst_121 : f32 to vector<8x32xf32>
    %864 = arith.addf %863, %862 : vector<8x32xf32>
    %865 = arith.divf %863, %864 : vector<8x32xf32>
    %866 = arith.mulf %857, %810 : vector<8x32xf32>
    %867 = arith.mulf %851, %859 : vector<8x32xf32>
    %868 = arith.addf %866, %867 : vector<8x32xf32>
    %869 = math.tanh %868 : vector<8x32xf32>
    %870 = arith.mulf %865, %869 : vector<8x32xf32>
    %871 = vector.extract_strided_slice %845 {offsets = [0, 0], sizes = [8, 32], strides = [1, 1]} : vector<8x128xf32> to vector<8x32xf32>
    %872 = arith.negf %871 : vector<8x32xf32>
    %873 = math.exp %872 : vector<8x32xf32>
    %cst_122 = arith.constant 1.000000e+00 : f32
    %874 = vector.broadcast %cst_122 : f32 to vector<8x32xf32>
    %875 = arith.addf %874, %873 : vector<8x32xf32>
    %876 = arith.divf %874, %875 : vector<8x32xf32>
    %877 = vector.extract_strided_slice %845 {offsets = [0, 32], sizes = [8, 32], strides = [1, 1]} : vector<8x128xf32> to vector<8x32xf32>
    %878 = arith.negf %877 : vector<8x32xf32>
    %879 = math.exp %878 : vector<8x32xf32>
    %cst_123 = arith.constant 1.000000e+00 : f32
    %880 = vector.broadcast %cst_123 : f32 to vector<8x32xf32>
    %881 = arith.addf %880, %879 : vector<8x32xf32>
    %882 = arith.divf %880, %881 : vector<8x32xf32>
    %883 = vector.extract_strided_slice %845 {offsets = [0, 64], sizes = [8, 32], strides = [1, 1]} : vector<8x128xf32> to vector<8x32xf32>
    %884 = math.tanh %883 : vector<8x32xf32>
    %885 = vector.extract_strided_slice %845 {offsets = [0, 96], sizes = [8, 32], strides = [1, 1]} : vector<8x128xf32> to vector<8x32xf32>
    %886 = arith.negf %885 : vector<8x32xf32>
    %887 = math.exp %886 : vector<8x32xf32>
    %cst_124 = arith.constant 1.000000e+00 : f32
    %888 = vector.broadcast %cst_124 : f32 to vector<8x32xf32>
    %889 = arith.addf %888, %887 : vector<8x32xf32>
    %890 = arith.divf %888, %889 : vector<8x32xf32>
    %891 = arith.mulf %882, %835 : vector<8x32xf32>
    %892 = arith.mulf %876, %884 : vector<8x32xf32>
    %893 = arith.addf %891, %892 : vector<8x32xf32>
    %894 = math.tanh %893 : vector<8x32xf32>
    %895 = arith.mulf %890, %894 : vector<8x32xf32>
    %896 = tpu.concatenate %870, %895 in 1 : vector<8x32xf32>, vector<8x32xf32> -> vector<8x64xf32>
    %cst_125 = arith.constant dense<0.000000e+00> : vector<8x256xf32>
    %897 = tpu.matmul %896, %487, %cst_125 {dimension_numbers = #tpu.dot_dimension_numbers<[1], [0], [0], [1], [0, 0, 1, 1], [], []>} : vector<8x64xf32>, vector<64x256xf32>, vector<8x256xf32> -> vector<8x256xf32>
    %898 = vector.extract_strided_slice %486 {offsets = [56, 0], sizes = [8, 128], strides = [1, 1]} : vector<64x256xf32> to vector<8x128xf32>
    %899 = vector.extract_strided_slice %897 {offsets = [0, 0], sizes = [8, 128], strides = [1, 1]} : vector<8x256xf32> to vector<8x128xf32>
    %900 = arith.addf %898, %899 : vector<8x128xf32>
    %901 = vector.extract_strided_slice %486 {offsets = [0, 128], sizes = [8, 128], strides = [1, 1]} : vector<64x256xf32> to vector<8x128xf32>
    %902 = vector.extract_strided_slice %897 {offsets = [0, 128], sizes = [8, 128], strides = [1, 1]} : vector<8x256xf32> to vector<8x128xf32>
    %903 = arith.addf %901, %902 : vector<8x128xf32>
    %904 = vector.extract_strided_slice %900 {offsets = [0, 0], sizes = [8, 32], strides = [1, 1]} : vector<8x128xf32> to vector<8x32xf32>
    %905 = arith.negf %904 : vector<8x32xf32>
    %906 = math.exp %905 : vector<8x32xf32>
    %cst_126 = arith.constant 1.000000e+00 : f32
    %907 = vector.broadcast %cst_126 : f32 to vector<8x32xf32>
    %908 = arith.addf %907, %906 : vector<8x32xf32>
    %909 = arith.divf %907, %908 : vector<8x32xf32>
    %910 = vector.extract_strided_slice %900 {offsets = [0, 32], sizes = [8, 32], strides = [1, 1]} : vector<8x128xf32> to vector<8x32xf32>
    %911 = arith.negf %910 : vector<8x32xf32>
    %912 = math.exp %911 : vector<8x32xf32>
    %cst_127 = arith.constant 1.000000e+00 : f32
    %913 = vector.broadcast %cst_127 : f32 to vector<8x32xf32>
    %914 = arith.addf %913, %912 : vector<8x32xf32>
    %915 = arith.divf %913, %914 : vector<8x32xf32>
    %916 = vector.extract_strided_slice %900 {offsets = [0, 64], sizes = [8, 32], strides = [1, 1]} : vector<8x128xf32> to vector<8x32xf32>
    %917 = math.tanh %916 : vector<8x32xf32>
    %918 = vector.extract_strided_slice %900 {offsets = [0, 96], sizes = [8, 32], strides = [1, 1]} : vector<8x128xf32> to vector<8x32xf32>
    %919 = arith.negf %918 : vector<8x32xf32>
    %920 = math.exp %919 : vector<8x32xf32>
    %cst_128 = arith.constant 1.000000e+00 : f32
    %921 = vector.broadcast %cst_128 : f32 to vector<8x32xf32>
    %922 = arith.addf %921, %920 : vector<8x32xf32>
    %923 = arith.divf %921, %922 : vector<8x32xf32>
    %924 = arith.mulf %915, %868 : vector<8x32xf32>
    %925 = arith.mulf %909, %917 : vector<8x32xf32>
    %926 = arith.addf %924, %925 : vector<8x32xf32>
    %927 = math.tanh %926 : vector<8x32xf32>
    %928 = arith.mulf %923, %927 : vector<8x32xf32>
    %929 = vector.extract_strided_slice %903 {offsets = [0, 0], sizes = [8, 32], strides = [1, 1]} : vector<8x128xf32> to vector<8x32xf32>
    %930 = arith.negf %929 : vector<8x32xf32>
    %931 = math.exp %930 : vector<8x32xf32>
    %cst_129 = arith.constant 1.000000e+00 : f32
    %932 = vector.broadcast %cst_129 : f32 to vector<8x32xf32>
    %933 = arith.addf %932, %931 : vector<8x32xf32>
    %934 = arith.divf %932, %933 : vector<8x32xf32>
    %935 = vector.extract_strided_slice %903 {offsets = [0, 32], sizes = [8, 32], strides = [1, 1]} : vector<8x128xf32> to vector<8x32xf32>
    %936 = arith.negf %935 : vector<8x32xf32>
    %937 = math.exp %936 : vector<8x32xf32>
    %cst_130 = arith.constant 1.000000e+00 : f32
    %938 = vector.broadcast %cst_130 : f32 to vector<8x32xf32>
    %939 = arith.addf %938, %937 : vector<8x32xf32>
    %940 = arith.divf %938, %939 : vector<8x32xf32>
    %941 = vector.extract_strided_slice %903 {offsets = [0, 64], sizes = [8, 32], strides = [1, 1]} : vector<8x128xf32> to vector<8x32xf32>
    %942 = math.tanh %941 : vector<8x32xf32>
    %943 = vector.extract_strided_slice %903 {offsets = [0, 96], sizes = [8, 32], strides = [1, 1]} : vector<8x128xf32> to vector<8x32xf32>
    %944 = arith.negf %943 : vector<8x32xf32>
    %945 = math.exp %944 : vector<8x32xf32>
    %cst_131 = arith.constant 1.000000e+00 : f32
    %946 = vector.broadcast %cst_131 : f32 to vector<8x32xf32>
    %947 = arith.addf %946, %945 : vector<8x32xf32>
    %948 = arith.divf %946, %947 : vector<8x32xf32>
    %949 = arith.mulf %940, %893 : vector<8x32xf32>
    %950 = arith.mulf %934, %942 : vector<8x32xf32>
    %951 = arith.addf %949, %950 : vector<8x32xf32>
    %952 = math.tanh %951 : vector<8x32xf32>
    %953 = arith.mulf %948, %952 : vector<8x32xf32>
    %954 = tpu.concatenate %522, %953 in 1 : vector<8x32xf32>, vector<8x32xf32> -> vector<8x64xf32>
    %955 = tpu.concatenate %580, %895 in 1 : vector<8x32xf32>, vector<8x32xf32> -> vector<8x64xf32>
    %956 = tpu.concatenate %638, %837 in 1 : vector<8x32xf32>, vector<8x32xf32> -> vector<8x64xf32>
    %957 = tpu.concatenate %696, %779 in 1 : vector<8x32xf32>, vector<8x32xf32> -> vector<8x64xf32>
    %958 = tpu.concatenate %754, %721 in 1 : vector<8x32xf32>, vector<8x32xf32> -> vector<8x64xf32>
    %959 = tpu.concatenate %812, %663 in 1 : vector<8x32xf32>, vector<8x32xf32> -> vector<8x64xf32>
    %960 = tpu.concatenate %870, %605 in 1 : vector<8x32xf32>, vector<8x32xf32> -> vector<8x64xf32>
    %961 = tpu.concatenate %928, %547 in 1 : vector<8x32xf32>, vector<8x32xf32> -> vector<8x64xf32>
    %cst_132 = arith.constant 0.000000e+00 : f32
    %962 = vector.broadcast %cst_132 : f32 to vector<2x64xf32>
    %cst_133 = arith.constant 0xFF800000 : f32
    %963 = vector.broadcast %cst_133 : f32 to vector<2x64xf32>
    %964 = vector.extract_strided_slice %954 {offsets = [0, 0], sizes = [2, 64], strides = [1, 1]} : vector<8x64xf32> to vector<2x64xf32>
    %965 = vector.extract_strided_slice %954 {offsets = [2, 0], sizes = [2, 64], strides = [1, 1]} : vector<8x64xf32> to vector<2x64xf32>
    %966 = arith.mulf %964, %965 : vector<2x64xf32>
    %967 = arith.addf %962, %964 : vector<2x64xf32>
    %968 = arith.addf %962, %965 : vector<2x64xf32>
    %969 = arith.addf %962, %966 : vector<2x64xf32>
    %970 = arith.maximumf %963, %964 : vector<2x64xf32>
    %971 = arith.maximumf %963, %965 : vector<2x64xf32>
    %972 = arith.subf %964, %965 : vector<2x64xf32>
    %973 = arith.maximumf %963, %972 : vector<2x64xf32>
    %974 = arith.maximumf %963, %966 : vector<2x64xf32>
    %975 = vector.extract_strided_slice %955 {offsets = [0, 0], sizes = [2, 64], strides = [1, 1]} : vector<8x64xf32> to vector<2x64xf32>
    %976 = vector.extract_strided_slice %955 {offsets = [2, 0], sizes = [2, 64], strides = [1, 1]} : vector<8x64xf32> to vector<2x64xf32>
    %977 = arith.mulf %975, %976 : vector<2x64xf32>
    %978 = arith.addf %967, %975 : vector<2x64xf32>
    %979 = arith.addf %968, %976 : vector<2x64xf32>
    %980 = arith.addf %969, %977 : vector<2x64xf32>
    %981 = arith.maximumf %970, %975 : vector<2x64xf32>
    %982 = arith.maximumf %971, %976 : vector<2x64xf32>
    %983 = arith.subf %975, %976 : vector<2x64xf32>
    %984 = arith.maximumf %973, %983 : vector<2x64xf32>
    %985 = arith.maximumf %974, %977 : vector<2x64xf32>
    %986 = vector.extract_strided_slice %956 {offsets = [0, 0], sizes = [2, 64], strides = [1, 1]} : vector<8x64xf32> to vector<2x64xf32>
    %987 = vector.extract_strided_slice %956 {offsets = [2, 0], sizes = [2, 64], strides = [1, 1]} : vector<8x64xf32> to vector<2x64xf32>
    %988 = arith.mulf %986, %987 : vector<2x64xf32>
    %989 = arith.addf %978, %986 : vector<2x64xf32>
    %990 = arith.addf %979, %987 : vector<2x64xf32>
    %991 = arith.addf %980, %988 : vector<2x64xf32>
    %992 = arith.maximumf %981, %986 : vector<2x64xf32>
    %993 = arith.maximumf %982, %987 : vector<2x64xf32>
    %994 = arith.subf %986, %987 : vector<2x64xf32>
    %995 = arith.maximumf %984, %994 : vector<2x64xf32>
    %996 = arith.maximumf %985, %988 : vector<2x64xf32>
    %997 = vector.extract_strided_slice %957 {offsets = [0, 0], sizes = [2, 64], strides = [1, 1]} : vector<8x64xf32> to vector<2x64xf32>
    %998 = vector.extract_strided_slice %957 {offsets = [2, 0], sizes = [2, 64], strides = [1, 1]} : vector<8x64xf32> to vector<2x64xf32>
    %999 = arith.mulf %997, %998 : vector<2x64xf32>
    %1000 = arith.addf %989, %997 : vector<2x64xf32>
    %1001 = arith.addf %990, %998 : vector<2x64xf32>
    %1002 = arith.addf %991, %999 : vector<2x64xf32>
    %1003 = arith.maximumf %992, %997 : vector<2x64xf32>
    %1004 = arith.maximumf %993, %998 : vector<2x64xf32>
    %1005 = arith.subf %997, %998 : vector<2x64xf32>
    %1006 = arith.maximumf %995, %1005 : vector<2x64xf32>
    %1007 = arith.maximumf %996, %999 : vector<2x64xf32>
    %1008 = vector.extract_strided_slice %958 {offsets = [0, 0], sizes = [2, 64], strides = [1, 1]} : vector<8x64xf32> to vector<2x64xf32>
    %1009 = vector.extract_strided_slice %958 {offsets = [2, 0], sizes = [2, 64], strides = [1, 1]} : vector<8x64xf32> to vector<2x64xf32>
    %1010 = arith.mulf %1008, %1009 : vector<2x64xf32>
    %1011 = arith.addf %1000, %1008 : vector<2x64xf32>
    %1012 = arith.addf %1001, %1009 : vector<2x64xf32>
    %1013 = arith.addf %1002, %1010 : vector<2x64xf32>
    %1014 = arith.maximumf %1003, %1008 : vector<2x64xf32>
    %1015 = arith.maximumf %1004, %1009 : vector<2x64xf32>
    %1016 = arith.subf %1008, %1009 : vector<2x64xf32>
    %1017 = arith.maximumf %1006, %1016 : vector<2x64xf32>
    %1018 = arith.maximumf %1007, %1010 : vector<2x64xf32>
    %1019 = vector.extract_strided_slice %959 {offsets = [0, 0], sizes = [2, 64], strides = [1, 1]} : vector<8x64xf32> to vector<2x64xf32>
    %1020 = vector.extract_strided_slice %959 {offsets = [2, 0], sizes = [2, 64], strides = [1, 1]} : vector<8x64xf32> to vector<2x64xf32>
    %1021 = arith.mulf %1019, %1020 : vector<2x64xf32>
    %1022 = arith.addf %1011, %1019 : vector<2x64xf32>
    %1023 = arith.addf %1012, %1020 : vector<2x64xf32>
    %1024 = arith.addf %1013, %1021 : vector<2x64xf32>
    %1025 = arith.maximumf %1014, %1019 : vector<2x64xf32>
    %1026 = arith.maximumf %1015, %1020 : vector<2x64xf32>
    %1027 = arith.subf %1019, %1020 : vector<2x64xf32>
    %1028 = arith.maximumf %1017, %1027 : vector<2x64xf32>
    %1029 = arith.maximumf %1018, %1021 : vector<2x64xf32>
    %1030 = vector.extract_strided_slice %960 {offsets = [0, 0], sizes = [2, 64], strides = [1, 1]} : vector<8x64xf32> to vector<2x64xf32>
    %1031 = vector.extract_strided_slice %960 {offsets = [2, 0], sizes = [2, 64], strides = [1, 1]} : vector<8x64xf32> to vector<2x64xf32>
    %1032 = arith.mulf %1030, %1031 : vector<2x64xf32>
    %1033 = arith.addf %1022, %1030 : vector<2x64xf32>
    %1034 = arith.addf %1023, %1031 : vector<2x64xf32>
    %1035 = arith.addf %1024, %1032 : vector<2x64xf32>
    %1036 = arith.maximumf %1025, %1030 : vector<2x64xf32>
    %1037 = arith.maximumf %1026, %1031 : vector<2x64xf32>
    %1038 = arith.subf %1030, %1031 : vector<2x64xf32>
    %1039 = arith.maximumf %1028, %1038 : vector<2x64xf32>
    %1040 = arith.maximumf %1029, %1032 : vector<2x64xf32>
    %1041 = vector.extract_strided_slice %961 {offsets = [0, 0], sizes = [2, 64], strides = [1, 1]} : vector<8x64xf32> to vector<2x64xf32>
    %1042 = vector.extract_strided_slice %961 {offsets = [2, 0], sizes = [2, 64], strides = [1, 1]} : vector<8x64xf32> to vector<2x64xf32>
    %1043 = arith.mulf %1041, %1042 : vector<2x64xf32>
    %1044 = arith.addf %1033, %1041 : vector<2x64xf32>
    %1045 = arith.addf %1034, %1042 : vector<2x64xf32>
    %1046 = arith.addf %1035, %1043 : vector<2x64xf32>
    %1047 = arith.maximumf %1036, %1041 : vector<2x64xf32>
    %1048 = arith.maximumf %1037, %1042 : vector<2x64xf32>
    %1049 = arith.subf %1041, %1042 : vector<2x64xf32>
    %1050 = arith.maximumf %1039, %1049 : vector<2x64xf32>
    %1051 = arith.maximumf %1040, %1043 : vector<2x64xf32>
    %cst_134 = arith.constant 1.250000e-01 : f32
    %1052 = vector.broadcast %cst_134 : f32 to vector<2x64xf32>
    %1053 = arith.mulf %1044, %1052 : vector<2x64xf32>
    %cst_135 = arith.constant 1.250000e-01 : f32
    %1054 = vector.broadcast %cst_135 : f32 to vector<2x64xf32>
    %1055 = arith.mulf %1045, %1054 : vector<2x64xf32>
    %1056 = arith.subf %1053, %1055 : vector<2x64xf32>
    %cst_136 = arith.constant 1.250000e-01 : f32
    %1057 = vector.broadcast %cst_136 : f32 to vector<2x64xf32>
    %1058 = arith.mulf %1046, %1057 : vector<2x64xf32>
    %1059 = tpu.concatenate %1053, %1055, %1056, %1058, %1047, %1048, %1050, %1051 in 1 : vector<2x64xf32>, vector<2x64xf32>, vector<2x64xf32>, vector<2x64xf32>, vector<2x64xf32>, vector<2x64xf32>, vector<2x64xf32>, vector<2x64xf32> -> vector<2x512xf32>
    %c0_137 = arith.constant 0 : index
    %c0_138 = arith.constant 0 : index
    %1060 = vector.load %arg7[%c0_137, %c0_138] : memref<512x32xf32, #tpu.memory_space<vmem>>, vector<512x32xf32>
    %cst_139 = arith.constant dense<0.000000e+00> : vector<2x32xf32>
    %1061 = tpu.matmul %1059, %1060, %cst_139 {dimension_numbers = #tpu.dot_dimension_numbers<[1], [0], [0], [1], [0, 0, 1, 1], [], []>} : vector<2x512xf32>, vector<512x32xf32>, vector<2x32xf32> -> vector<2x32xf32>
    %c0_140 = arith.constant 0 : index
    %c0_141 = arith.constant 0 : index
    %1062 = vector.load %arg8[%c0_140, %c0_141] : memref<1x32xf32, #tpu.memory_space<vmem>>, vector<1x32xf32>
    %1063 = vector.broadcast %1062 : vector<1x32xf32> to vector<2x32xf32>
    %1064 = arith.addf %1061, %1063 : vector<2x32xf32>
    %1065 = math.tanh %1064 : vector<2x32xf32>
    %c0_142 = arith.constant 0 : index
    %c0_143 = arith.constant 0 : index
    %1066 = vector.load %arg9[%c0_142, %c0_143] : memref<32x3xf32, #tpu.memory_space<vmem>>, vector<32x3xf32>
    %cst_144 = arith.constant dense<0.000000e+00> : vector<2x3xf32>
    %1067 = tpu.matmul %1065, %1066, %cst_144 {dimension_numbers = #tpu.dot_dimension_numbers<[1], [0], [0], [1], [0, 0, 1, 1], [], []>} : vector<2x32xf32>, vector<32x3xf32>, vector<2x3xf32> -> vector<2x3xf32>
    %c0_145 = arith.constant 0 : index
    %c0_146 = arith.constant 0 : index
    %1068 = vector.load %arg10[%c0_145, %c0_146] : memref<1x3xf32, #tpu.memory_space<vmem>>, vector<1x3xf32>
    %1069 = vector.broadcast %1068 : vector<1x3xf32> to vector<2x3xf32>
    %1070 = arith.addf %1067, %1069 : vector<2x3xf32>
    %cst_147 = arith.constant dense<0xFF800000> : vector<2xf32>
    %1071 = vector.multi_reduction <maximumf>, %1070, %cst_147 [1] : vector<2x3xf32> to vector<2xf32>
    %1072 = vector.shape_cast %1071 : vector<2xf32> to vector<2x1xf32>
    %1073 = vector.broadcast %1072 : vector<2x1xf32> to vector<2x3xf32>
    %1074 = arith.subf %1070, %1073 : vector<2x3xf32>
    %1075 = math.exp %1074 : vector<2x3xf32>
    %cst_148 = arith.constant dense<0.000000e+00> : vector<2xf32>
    %1076 = vector.multi_reduction <add>, %1075, %cst_148 [1] : vector<2x3xf32> to vector<2xf32>
    %1077 = vector.shape_cast %1076 : vector<2xf32> to vector<2x1xf32>
    %1078 = tpu.reciprocal %1077 {approx = true} : vector<2x1xf32> -> vector<2x1xf32>
    %1079 = vector.broadcast %1078 : vector<2x1xf32> to vector<2x3xf32>
    %1080 = arith.mulf %1075, %1079 : vector<2x3xf32>
    %c0_149 = arith.constant 0 : index
    %c0_150 = arith.constant 0 : index
    %1081 = vector.load %arg11[%c0_149, %c0_150] : memref<2x3xf32, #tpu.memory_space<vmem>>, vector<2x3xf32>
    tpu.vector_store %arg11[%c0_149, %c0_150], %1080 {strides = array<i32>} : memref<2x3xf32, #tpu.memory_space<vmem>>, vector<2x3xf32>,
    return
  }
}

</mosaic_0001>

<llo_original>
// kernel: sia_gru_forward.1
$region0: #{sia_gru_forward.1}
  #allocation0 [shape = 'u32[]', space=smem, size = 0x4, offset = 0x4, fixed_abs, tag = 'smem constant byte address 0x4 - core index']
  #allocation1 [shape = 'u32[144,128]{1,0:T(1,128)}', space=vmem, size = 0x12000, scoped, tag = 'internal scratch']
  %s0 = inlined_call_operand.vmem [shape: f32[64,32], index: 0, kind: input, shape index: {}]
  %s1 = inlined_call_operand.vmem [shape: f32[32,256], index: 1, kind: input, shape index: {}]
  %s2 = inlined_call_operand.vmem [shape: f32[1,256], index: 2, kind: input, shape index: {}]
  %s3 = inlined_call_operand.vmem [shape: f32[64,256], index: 3, kind: input, shape index: {}]
  %s4 = inlined_call_operand.vmem [shape: f32[64,256], index: 4, kind: input, shape index: {}]
  %s5 = inlined_call_operand.vmem [shape: f32[1,256], index: 5, kind: input, shape index: {}]
  %s6 = inlined_call_operand.vmem [shape: f32[64,256], index: 6, kind: input, shape index: {}]
  %s7 = inlined_call_operand.vmem [shape: f32[512,32], index: 7, kind: input, shape index: {}]
  %s8 = inlined_call_operand.vmem [shape: f32[1,32], index: 8, kind: input, shape index: {}]
  %s9 = inlined_call_operand.vmem [shape: f32[32,3], index: 9, kind: input, shape index: {}]
  %s10 = inlined_call_operand.vmem [shape: f32[1,3], index: 10, kind: input, shape index: {}]
  %s11 = inlined_call_operand.hbm [shape: f32[2,3], index: 11, kind: output, shape index: {}]
  %s12 = sld [smem:[#allocation0]]
  $region54: #{sia_gru_forward.1} parent=0
    _
  %s14 = ssub.s32 1, %s12
  %s15 = scalar_select 0, %s14, %s12
  $region1: #{sia_gru_forward.1} parent=0
    #allocation2 [shape = 'u8[1024]{0}', space=vmem, size = 0x400, scoped, tag = 'output window, operand 0, single buffered']
    #allocation3 [shape = 's32[1]{0}', space=sflag, size = 0x4, scoped, tag = 'scoped memory for sia_gru_forward.1']
    %16 = vsyncpa [#allocation3], 0
    // Predicated region
    $region2: #{sia_gru_forward.1} parent=1 // pred_check
      _
    $region3: #{sia_gru_forward.1} parent=1 // pred_check_branch
      %18 = sbr.rel (0) target = $region5
    $region4: #{sia_gru_forward.1} parent=1 // pred_region
      _
    $region5: #{sia_gru_forward.1} parent=1 // pred_fallthru
      _
    // Predicated region
    $region6: #{sia_gru_forward.1} parent=1 // pred_check
      _
    $region7: #{sia_gru_forward.1} parent=1 // pred_check_branch
      %20 = sbr.rel (0) target = $region9
    $region8: #{sia_gru_forward.1} parent=1 // pred_region
      _
    $region9: #{sia_gru_forward.1} parent=1 // pred_fallthru
      _
    // Predicated region
    $region10: #{sia_gru_forward.1} parent=1 // pred_check
      _
    $region11: #{sia_gru_forward.1} parent=1 // pred_check_branch
      %22 = sbr.rel (0) target = $region13
    $region12: #{sia_gru_forward.1} parent=1 // pred_region
      _
    $region13: #{sia_gru_forward.1} parent=1 // pred_fallthru
      _
    // Predicated region
    $region14: #{sia_gru_forward.1} parent=1 // pred_check
      _
    $region15: #{sia_gru_forward.1} parent=1 // pred_check_branch
      %24 = sbr.rel (0) target = $region17
    $region16: #{sia_gru_forward.1} parent=1 // pred_region
      _
    $region17: #{sia_gru_forward.1} parent=1 // pred_fallthru
      _
    // Predicated region
    $region18: #{sia_gru_forward.1} parent=1 // pred_check
      _
    $region19: #{sia_gru_forward.1} parent=1 // pred_check_branch
      %26 = sbr.rel (0) target = $region21
    $region20: #{sia_gru_forward.1} parent=1 // pred_region
      _
    $region21: #{sia_gru_forward.1} parent=1 // pred_fallthru
      _
    // Predicated region
    $region22: #{sia_gru_forward.1} parent=1 // pred_check
      _
    $region23: #{sia_gru_forward.1} parent=1 // pred_check_branch
      %28 = sbr.rel (0) target = $region25
    $region24: #{sia_gru_forward.1} parent=1 // pred_region
      _
    $region25: #{sia_gru_forward.1} parent=1 // pred_fallthru
      _
    // Predicated region
    $region26: #{sia_gru_forward.1} parent=1 // pred_check
      _
    $region27: #{sia_gru_forward.1} parent=1 // pred_check_branch
      %30 = sbr.rel (0) target = $region29
    $region28: #{sia_gru_forward.1} parent=1 // pred_region
      _
    $region29: #{sia_gru_forward.1} parent=1 // pred_fallthru
      _
    // Predicated region
    $region30: #{sia_gru_forward.1} parent=1 // pred_check
      _
    $region31: #{sia_gru_forward.1} parent=1 // pred_check_branch
      %32 = sbr.rel (0) target = $region33
    $region32: #{sia_gru_forward.1} parent=1 // pred_region
      _
    $region33: #{sia_gru_forward.1} parent=1 // pred_fallthru
      _
    // Predicated region
    $region34: #{sia_gru_forward.1} parent=1 // pred_check
      _
    $region35: #{sia_gru_forward.1} parent=1 // pred_check_branch
      %34 = sbr.rel (0) target = $region37
    $region36: #{sia_gru_forward.1} parent=1 // pred_region
      _
    $region37: #{sia_gru_forward.1} parent=1 // pred_fallthru
      _
    // Predicated region
    $region38: #{sia_gru_forward.1} parent=1 // pred_check
      _
    $region39: #{sia_gru_forward.1} parent=1 // pred_check_branch
      %36 = sbr.rel (0) target = $region41
    $region40: #{sia_gru_forward.1} parent=1 // pred_region
      _
    $region41: #{sia_gru_forward.1} parent=1 // pred_fallthru
      _
    // Predicated region
    $region42: #{sia_gru_forward.1} parent=1 // pred_check
      _
    $region43: #{sia_gru_forward.1} parent=1 // pred_check_branch
      %38 = sbr.rel (0) target = $region45
    $region44: #{sia_gru_forward.1} parent=1 // pred_region
      _
    $region45: #{sia_gru_forward.1} parent=1 // pred_fallthru
      _
    %v39 = vld [vmem:[%s0] sm:$0xff]
    %v40 = vld [vmem:[%s0 + $0x8] sm:$0xff]
    %v41 = vld [vmem:[%s0 + $0x10] sm:$0xff]
    %v42 = vld [vmem:[%s0 + $0x18] sm:$0xff]
    %v43 = vld [vmem:[%s0 + $0x20] sm:$0xff]
    %v44 = vld [vmem:[%s0 + $0x28] sm:$0xff]
    %v45 = vld [vmem:[%s0 + $0x30] sm:$0xff]
    %v46 = vld [vmem:[%s0 + $0x38] sm:$0xff]
    %v47 = vld [vmem:[%s1] sm:$0xff]
    %v48 = vld [vmem:[%s1 + $0x8] sm:$0xff]
    %v49 = vld [vmem:[%s1 + $0x10] sm:$0xff]
    %v50 = vld [vmem:[%s1 + $0x18] sm:$0xff]
    %v51 = vld [vmem:[%s1 + $0x20] sm:$0xff]
    %v52 = vld [vmem:[%s1 + $0x28] sm:$0xff]
    %v53 = vld [vmem:[%s1 + $0x30] sm:$0xff]
    %v54 = vld [vmem:[%s1 + $0x38] sm:$0xff]
    %v55 = vld [vmem:[%s2] sm:$0x3]
    %v57 = vlaneseq
    %v58 = vshrl.u32 %v57, 7
    %v59 = vsub.s32 0, %v58
    %v60 = vrot.slane %v55, %v59
    %v61 = vlaneseq
    %v62 = vshrl.u32 %v61, 7
    %v63 = vsub.s32 1, %v62
    %v64 = vrot.slane %v55, %v63
    %vm67 = vcmask 261120
    %v69 = vsel %vm67, %v39, 0
    %v72 = vsel %vm67, %v40, 0
    %v75 = vsel %vm67, %v41, 0
    %v78 = vsel %vm67, %v42, 0
    %v81 = vsel %vm67, %v43, 0
    %v84 = vsel %vm67, %v44, 0
    %v87 = vsel %vm67, %v45, 0
    %v90 = vsel %vm67, %v46, 0
    %92 = vmatprep.subr.mxu0 %v48
    %93 = vmatpush1.msra.mxu0 %v47
    %94 = vmatprep.subr.mxu0 %v50
    %95 = vmatpush1.msra.mxu0 %v49
    %96 = vmatprep.subr.mxu0 %v52
    %97 = vmatpush1.msra.mxu0 %v51
    %98 = vmatprep.subr.mxu0 %v54
    %99 = vmatpush1.msra.mxu0 %v53
    %100 = vmatprep.subr.mxu0 0.0
    %101 = vmatpush1.msra.mxu0 0.0
    %102 = vmatprep.subr.mxu0 0.0
    %103 = vmatpush1.msra.mxu0 0.0
    %104 = vmatprep.subr.mxu0 0.0
    %105 = vmatpush1.msra.mxu0 0.0
    %106 = vmatprep.subr.mxu0 0.0
    %107 = vmatpush1.msra.mxu0 0.0
    %108 = vmatprep.subr.mxu0 0.0
    %109 = vmatpush1.msra.mxu0 0.0
    %110 = vmatprep.subr.mxu0 0.0
    %111 = vmatpush1.msra.mxu0 0.0
    %112 = vmatprep.subr.mxu0 0.0
    %113 = vmatpush1.msra.mxu0 0.0
    %114 = vmatprep.subr.mxu0 0.0
    %115 = vmatpush1.msra.mxu0 0.0
    %116 = vmatprep.subr.mxu0 0.0
    %117 = vmatpush1.msra.mxu0 0.0
    %118 = vmatprep.subr.mxu0 0.0
    %119 = vmatpush1.msra.mxu0 0.0
    %120 = vmatprep.subr.mxu0 0.0
    %121 = vmatpush1.msra.mxu0 0.0
    %122 = vmatprep.subr.mxu0 0.0
    %123 = vmatpush1.msra.mxu0 0.0
    %124 = vmatprep.subr.mxu0 0.0
    %125 = vmatpush1.msra.mxu0 0.0
    %126 = vmatprep.subr.mxu0 0.0
    %127 = vmatpush1.msra.mxu0 0.0
    %128 = vmatprep.subr.mxu0 0.0
    %129 = vmatpush1.msra.mxu0 0.0
    %130 = vmatprep.subr.mxu0 0.0
    %131 = vmatpush1.msra.mxu0 0.0
    %132 = vmatprep.subr.mxu0 0.0
    %133 = vmatpush1.msra.mxu0 0.0
    %134 = vmatprep.subr.mxu0 0.0
    %135 = vmatpush1.msra.mxu0 0.0
    %136 = vmatprep.subr.mxu0 0.0
    %137 = vmatpush1.msra.mxu0 0.0
    %138 = vmatprep.subr.mxu0 0.0
    %139 = vmatpush1.msra.mxu0 0.0
    %140 = vmatprep.subr.mxu0 0.0
    %141 = vmatpush1.msra.mxu0 0.0
    %142 = vmatprep.subr.mxu0 0.0
    %143 = vmatpush1.msra.mxu0 0.0
    %144 = vmatprep.subr.mxu0 0.0
    %145 = vmatpush1.msra.mxu0 0.0
    %146 = vmatprep.subr.mxu0 0.0
    %147 = vmatpush1.msra.mxu0 0.0
    %148 = vmatprep.subr.mxu0 0.0
    %149 = vmatpush1.msra.mxu0 0.0
    %150 = vmatprep.subr.mxu0 0.0
    %151 = vmatpush1.msra.mxu0 0.0
    %152 = vmatprep.subr.mxu0 0.0
    %153 = vmatpush1.msra.mxu0 0.0
    %154 = vmatprep.subr.mxu0 0.0
    %155 = vmatpush1.msra.mxu0 0.0
    %156 = vmatprep.mubr.f32.mxu0 0.0
    %157 = vmatmul.mubr.f32.gmra.mrb[0].mxu0 %v69
    %v158 = vpop.f32.mrb[0].mxu0
    %v159 = vadd.f32 %v60, %v158
    %v160 = vpop.f32.mrb[0].mxu0
    %v161 = vadd.f32 %v64, %v160
    %162 = vmatprep.mubr.f32.mxu0 0.0
    %163 = vmatmul.mubr.f32.gmra.mrb[0].mxu0 %v72
    %v164 = vpop.f32.mrb[0].mxu0
    %v165 = vadd.f32 %v60, %v164
    %v166 = vpop.f32.mrb[0].mxu0
    %v167 = vadd.f32 %v64, %v166
    %168 = vmatprep.mubr.f32.mxu0 0.0
    %169 = vmatmul.mubr.f32.gmra.mrb[0].mxu0 %v75
    %v170 = vpop.f32.mrb[0].mxu0
    %v171 = vadd.f32 %v60, %v170
    %v172 = vpop.f32.mrb[0].mxu0
    %v173 = vadd.f32 %v64, %v172
    %174 = vmatprep.mubr.f32.mxu0 0.0
    %175 = vmatmul.mubr.f32.gmra.mrb[0].mxu0 %v78
    %v176 = vpop.f32.mrb[0].mxu0
    %v177 = vadd.f32 %v60, %v176
    %v178 = vpop.f32.mrb[0].mxu0
    %v179 = vadd.f32 %v64, %v178
    %180 = vmatprep.mubr.f32.mxu0 0.0
    %181 = vmatmul.mubr.f32.gmra.mrb[0].mxu0 %v81
    %v182 = vpop.f32.mrb[0].mxu0
    %v183 = vadd.f32 %v60, %v182
    %v184 = vpop.f32.mrb[0].mxu0
    %v185 = vadd.f32 %v64, %v184
    %186 = vmatprep.mubr.f32.mxu0 0.0
    %187 = vmatmul.mubr.f32.gmra.mrb[0].mxu0 %v84
    %v188 = vpop.f32.mrb[0].mxu0
    %v189 = vadd.f32 %v60, %v188
    %v190 = vpop.f32.mrb[0].mxu0
    %v191 = vadd.f32 %v64, %v190
    %192 = vmatprep.mubr.f32.mxu0 0.0
    %193 = vmatmul.mubr.f32.gmra.mrb[0].mxu0 %v87
    %v194 = vpop.f32.mrb[0].mxu0
    %v195 = vadd.f32 %v60, %v194
    %v196 = vpop.f32.mrb[0].mxu0
    %v197 = vadd.f32 %v64, %v196
    %198 = vmatprep.mubr.f32.mxu0 0.0
    %199 = vmatmul.mubr.f32.gmra.mrb[0].mxu0 %v90
    %v200 = vpop.f32.mrb[0].mxu0
    %v201 = vadd.f32 %v60, %v200
    %v202 = vpop.f32.mrb[0].mxu0
    %v203 = vadd.f32 %v64, %v202
    %204 = vdwg.mxu0
    %v205 = vld [vmem:[%s3] sm:$0xff]
    %v206 = vld [vmem:[%s3 + $0x8] sm:$0xff]
    %v207 = vld [vmem:[%s3 + $0x10] sm:$0xff]
    %v208 = vld [vmem:[%s3 + $0x18] sm:$0xff]
    %v209 = vld [vmem:[%s3 + $0x20] sm:$0xff]
    %v210 = vld [vmem:[%s3 + $0x28] sm:$0xff]
    %v211 = vld [vmem:[%s3 + $0x30] sm:$0xff]
    %v212 = vld [vmem:[%s3 + $0x38] sm:$0xff]
    %v213 = vld [vmem:[%s3 + $0x40] sm:$0xff]
    %v214 = vld [vmem:[%s3 + $0x48] sm:$0xff]
    %v215 = vld [vmem:[%s3 + $0x50] sm:$0xff]
    %v216 = vld [vmem:[%s3 + $0x58] sm:$0xff]
    %v217 = vld [vmem:[%s3 + $0x60] sm:$0xff]
    %v218 = vld [vmem:[%s3 + $0x68] sm:$0xff]
    %v219 = vld [vmem:[%s3 + $0x70] sm:$0xff]
    %v220 = vld [vmem:[%s3 + $0x78] sm:$0xff]
    %vm221 = vcmask 523264
    %v223 = vsel %vm221, 0.0, 0
    %225 = vmatprep.subr.mxu0 %v206
    %226 = vmatpush1.msra.mxu0 %v205
    %227 = vmatprep.subr.mxu0 %v208
    %228 = vmatpush1.msra.mxu0 %v207
    %229 = vmatprep.subr.mxu0 %v210
    %230 = vmatpush1.msra.mxu0 %v209
    %231 = vmatprep.subr.mxu0 %v212
    %232 = vmatpush1.msra.mxu0 %v211
    %233 = vmatprep.subr.mxu0 %v214
    %234 = vmatpush1.msra.mxu0 %v213
    %235 = vmatprep.subr.mxu0 %v216
    %236 = vmatpush1.msra.mxu0 %v215
    %237 = vmatprep.subr.mxu0 %v218
    %238 = vmatpush1.msra.mxu0 %v217
    %239 = vmatprep.subr.mxu0 %v220
    %240 = vmatpush1.msra.mxu0 %v219
    %241 = vmatprep.subr.mxu0 0.0
    %242 = vmatpush1.msra.mxu0 0.0
    %243 = vmatprep.subr.mxu0 0.0
    %244 = vmatpush1.msra.mxu0 0.0
    %245 = vmatprep.subr.mxu0 0.0
    %246 = vmatpush1.msra.mxu0 0.0
    %247 = vmatprep.subr.mxu0 0.0
    %248 = vmatpush1.msra.mxu0 0.0
    %249 = vmatprep.subr.mxu0 0.0
    %250 = vmatpush1.msra.mxu0 0.0
    %251 = vmatprep.subr.mxu0 0.0
    %252 = vmatpush1.msra.mxu0 0.0
    %253 = vmatprep.subr.mxu0 0.0
    %254 = vmatpush1.msra.mxu0 0.0
    %255 = vmatprep.subr.mxu0 0.0
    %256 = vmatpush1.msra.mxu0 0.0
    %257 = vmatprep.subr.mxu0 0.0
    %258 = vmatpush1.msra.mxu0 0.0
    %259 = vmatprep.subr.mxu0 0.0
    %260 = vmatpush1.msra.mxu0 0.0
    %261 = vmatprep.subr.mxu0 0.0
    %262 = vmatpush1.msra.mxu0 0.0
    %263 = vmatprep.subr.mxu0 0.0
    %264 = vmatpush1.msra.mxu0 0.0
    %265 = vmatprep.subr.mxu0 0.0
    %266 = vmatpush1.msra.mxu0 0.0
    %267 = vmatprep.subr.mxu0 0.0
    %268 = vmatpush1.msra.mxu0 0.0
    %269 = vmatprep.subr.mxu0 0.0
    %270 = vmatpush1.msra.mxu0 0.0
    %271 = vmatprep.subr.mxu0 0.0
    %272 = vmatpush1.msra.mxu0 0.0
    %273 = vmatprep.subr.mxu0 0.0
    %274 = vmatpush1.msra.mxu0 0.0
    %275 = vmatprep.subr.mxu0 0.0
    %276 = vmatpush1.msra.mxu0 0.0
    %277 = vmatprep.subr.mxu0 0.0
    %278 = vmatpush1.msra.mxu0 0.0
    %279 = vmatprep.subr.mxu0 0.0
    %280 = vmatpush1.msra.mxu0 0.0
    %281 = vmatprep.subr.mxu0 0.0
    %282 = vmatpush1.msra.mxu0 0.0
    %283 = vmatprep.subr.mxu0 0.0
    %284 = vmatpush1.msra.mxu0 0.0
    %285 = vmatprep.subr.mxu0 0.0
    %286 = vmatpush1.msra.mxu0 0.0
    %287 = vmatprep.subr.mxu0 0.0
    %288 = vmatpush1.msra.mxu0 0.0
    %289 = vmatprep.mubr.f32.mxu0 0.0
    %290 = vmatmul.mubr.f32.gmra.mrb[0].mxu0 %v223
    %v291 = vpop.f32.mrb[0].mxu0
    %v292 = vadd.f32 0.0, %v291
    %v293 = vpop.f32.mrb[0].mxu0
    %v294 = vadd.f32 0.0, %v293
    %295 = vdwg.mxu0
    %v296 = vadd.f32 %v159, %v292
    %v297 = vadd.f32 %v203, %v294
    %v298 = vxor.u32 %v296, 2147483648
    %v299 = vmul.f32 %v298, 1.442695
    %v300 = vpow.pop %v299
    %v301 = vadd.f32 %v300, 1.0
    %v302 = vrcp.pop %v301
    %v303 = vmul.f32 1.0, %v302
    %v304 = vtanh.pop %v296
    %v305 = vmul.f32 %v303, 0.0
    %307 = vrot.lane.b32.xlu0 %v304, 64
    %v308 = vpop.permute.xlu0 %307
    %v310 = vmul.f32 %v303, %v308
    %312 = vrot.lane.b32.xlu0 %v310, 32
    %v313 = vpop.permute.xlu0 %312
    %v315 = vadd.f32 %v305, %v313
    %v316 = vtanh.pop %v315
    %318 = vrot.lane.b32.xlu0 %v316, 64
    %v319 = vpop.permute.xlu0 %318
    %v321 = vmul.f32 %v303, %v319
    %v322 = vxor.u32 %v297, 2147483648
    %v323 = vmul.f32 %v322, 1.442695
    %v324 = vpow.pop %v323
    %v325 = vadd.f32 %v324, 1.0
    %v326 = vrcp.pop %v325
    %v327 = vmul.f32 1.0, %v326
    %v328 = vtanh.pop %v297
    %v329 = vmul.f32 %v327, 0.0
    %331 = vrot.lane.b32.xlu0 %v328, 64
    %v332 = vpop.permute.xlu0 %331
    %v334 = vmul.f32 %v327, %v332
    %336 = vrot.lane.b32.xlu0 %v334, 32
    %v337 = vpop.permute.xlu0 %336
    %v339 = vadd.f32 %v329, %v337
    %v340 = vtanh.pop %v339
    %342 = vrot.lane.b32.xlu0 %v340, 64
    %v343 = vpop.permute.xlu0 %342
    %v345 = vmul.f32 %v327, %v343
    %347 = vrot.lane.b32.xlu0 %v321, 32
    %v348 = vpop.permute.xlu0 %347
    %351 = vrot.lane.b32.xlu0 %v345, 64
    %v352 = vpop.permute.xlu0 %351
    %v354 = vsel %vm67, %v348, %v352
    %v356 = vsel %vm221, %v354, 0
    %358 = vmatprep.subr.mxu0 %v206
    %359 = vmatpush1.msra.mxu0 %v205
    %360 = vmatprep.subr.mxu0 %v208
    %361 = vmatpush1.msra.mxu0 %v207
    %362 = vmatprep.subr.mxu0 %v210
    %363 = vmatpush1.msra.mxu0 %v209
    %364 = vmatprep.subr.mxu0 %v212
    %365 = vmatpush1.msra.mxu0 %v211
    %366 = vmatprep.subr.mxu0 %v214
    %367 = vmatpush1.msra.mxu0 %v213
    %368 = vmatprep.subr.mxu0 %v216
    %369 = vmatpush1.msra.mxu0 %v215
    %370 = vmatprep.subr.mxu0 %v218
    %371 = vmatpush1.msra.mxu0 %v217
    %372 = vmatprep.subr.mxu0 %v220
    %373 = vmatpush1.msra.mxu0 %v219
    %374 = vmatprep.subr.mxu0 0.0
    %375 = vmatpush1.msra.mxu0 0.0
    %376 = vmatprep.subr.mxu0 0.0
    %377 = vmatpush1.msra.mxu0 0.0
    %378 = vmatprep.subr.mxu0 0.0
    %379 = vmatpush1.msra.mxu0 0.0
    %380 = vmatprep.subr.mxu0 0.0
    %381 = vmatpush1.msra.mxu0 0.0
    %382 = vmatprep.subr.mxu0 0.0
    %383 = vmatpush1.msra.mxu0 0.0
    %384 = vmatprep.subr.mxu0 0.0
    %385 = vmatpush1.msra.mxu0 0.0
    %386 = vmatprep.subr.mxu0 0.0
    %387 = vmatpush1.msra.mxu0 0.0
    %388 = vmatprep.subr.mxu0 0.0
    %389 = vmatpush1.msra.mxu0 0.0
    %390 = vmatprep.subr.mxu0 0.0
    %391 = vmatpush1.msra.mxu0 0.0
    %392 = vmatprep.subr.mxu0 0.0
    %393 = vmatpush1.msra.mxu0 0.0
    %394 = vmatprep.subr.mxu0 0.0
    %395 = vmatpush1.msra.mxu0 0.0
    %396 = vmatprep.subr.mxu0 0.0
    %397 = vmatpush1.msra.mxu0 0.0
    %398 = vmatprep.subr.mxu0 0.0
    %399 = vmatpush1.msra.mxu0 0.0
    %400 = vmatprep.subr.mxu0 0.0
    %401 = vmatpush1.msra.mxu0 0.0
    %402 = vmatprep.subr.mxu0 0.0
    %403 = vmatpush1.msra.mxu0 0.0
    %404 = vmatprep.subr.mxu0 0.0
    %405 = vmatpush1.msra.mxu0 0.0
    %406 = vmatprep.subr.mxu0 0.0
    %407 = vmatpush1.msra.mxu0 0.0
    %408 = vmatprep.subr.mxu0 0.0
    %409 = vmatpush1.msra.mxu0 0.0
    %410 = vmatprep.subr.mxu0 0.0
    %411 = vmatpush1.msra.mxu0 0.0
    %412 = vmatprep.subr.mxu0 0.0
    %413 = vmatpush1.msra.mxu0 0.0
    %414 = vmatprep.subr.mxu0 0.0
    %415 = vmatpush1.msra.mxu0 0.0
    %416 = vmatprep.subr.mxu0 0.0
    %417 = vmatpush1.msra.mxu0 0.0
    %418 = vmatprep.subr.mxu0 0.0
    %419 = vmatpush1.msra.mxu0 0.0
    %420 = vmatprep.subr.mxu0 0.0
    %421 = vmatpush1.msra.mxu0 0.0
    %422 = vmatprep.mubr.f32.mxu0 0.0
    %423 = vmatmul.mubr.f32.gmra.mrb[0].mxu0 %v356
    %v424 = vpop.f32.mrb[0].mxu0
    %v425 = vadd.f32 0.0, %v424
    %v426 = vpop.f32.mrb[0].mxu0
    %v427 = vadd.f32 0.0, %v426
    %428 = vdwg.mxu0
    %v429 = vadd.f32 %v165, %v425
    %v430 = vadd.f32 %v197, %v427
    %v431 = vxor.u32 %v429, 2147483648
    %v432 = vmul.f32 %v431, 1.442695
    %v433 = vpow.pop %v432
    %v434 = vadd.f32 %v433, 1.0
    %v435 = vrcp.pop %v434
    %v436 = vmul.f32 1.0, %v435
    %v437 = vtanh.pop %v429
    %v438 = vmul.f32 %v436, %v315
    %440 = vrot.lane.b32.xlu0 %v437, 64
    %v441 = vpop.permute.xlu0 %440
    %v443 = vmul.f32 %v436, %v441
    %445 = vrot.lane.b32.xlu0 %v443, 32
    %v446 = vpop.permute.xlu0 %445
    %v448 = vadd.f32 %v438, %v446
    %v449 = vtanh.pop %v448
    %451 = vrot.lane.b32.xlu0 %v449, 64
    %v452 = vpop.permute.xlu0 %451
    %v454 = vmul.f32 %v436, %v452
    %v455 = vxor.u32 %v430, 2147483648
    %v456 = vmul.f32 %v455, 1.442695
    %v457 = vpow.pop %v456
    %v458 = vadd.f32 %v457, 1.0
    %v459 = vrcp.pop %v458
    %v460 = vmul.f32 1.0, %v459
    %v461 = vtanh.pop %v430
    %v462 = vmul.f32 %v460, %v339
    %464 = vrot.lane.b32.xlu0 %v461, 64
    %v465 = vpop.permute.xlu0 %464
    %v467 = vmul.f32 %v460, %v465
    %469 = vrot.lane.b32.xlu0 %v467, 32
    %v470 = vpop.permute.xlu0 %469
    %v472 = vadd.f32 %v462, %v470
    %v473 = vtanh.pop %v472
    %475 = vrot.lane.b32.xlu0 %v473, 64
    %v476 = vpop.permute.xlu0 %475
    %v478 = vmul.f32 %v460, %v476
    %480 = vrot.lane.b32.xlu0 %v454, 32
    %v481 = vpop.permute.xlu0 %480
    %484 = vrot.lane.b32.xlu0 %v478, 64
    %v485 = vpop.permute.xlu0 %484
    %v487 = vsel %vm67, %v481, %v485
    %v489 = vsel %vm221, %v487, 0
    %491 = vmatprep.subr.mxu0 %v206
    %492 = vmatpush1.msra.mxu0 %v205
    %493 = vmatprep.subr.mxu0 %v208
    %494 = vmatpush1.msra.mxu0 %v207
    %495 = vmatprep.subr.mxu0 %v210
    %496 = vmatpush1.msra.mxu0 %v209
    %497 = vmatprep.subr.mxu0 %v212
    %498 = vmatpush1.msra.mxu0 %v211
    %499 = vmatprep.subr.mxu0 %v214
    %500 = vmatpush1.msra.mxu0 %v213
    %501 = vmatprep.subr.mxu0 %v216
    %502 = vmatpush1.msra.mxu0 %v215
    %503 = vmatprep.subr.mxu0 %v218
    %504 = vmatpush1.msra.mxu0 %v217
    %505 = vmatprep.subr.mxu0 %v220
    %506 = vmatpush1.msra.mxu0 %v219
    %507 = vmatprep.subr.mxu0 0.0
    %508 = vmatpush1.msra.mxu0 0.0
    %509 = vmatprep.subr.mxu0 0.0
    %510 = vmatpush1.msra.mxu0 0.0
    %511 = vmatprep.subr.mxu0 0.0
    %512 = vmatpush1.msra.mxu0 0.0
    %513 = vmatprep.subr.mxu0 0.0
    %514 = vmatpush1.msra.mxu0 0.0
    %515 = vmatprep.subr.mxu0 0.0
    %516 = vmatpush1.msra.mxu0 0.0
    %517 = vmatprep.subr.mxu0 0.0
    %518 = vmatpush1.msra.mxu0 0.0
    %519 = vmatprep.subr.mxu0 0.0
    %520 = vmatpush1.msra.mxu0 0.0
    %521 = vmatprep.subr.mxu0 0.0
    %522 = vmatpush1.msra.mxu0 0.0
    %523 = vmatprep.subr.mxu0 0.0
    %524 = vmatpush1.msra.mxu0 0.0
    %525 = vmatprep.subr.mxu0 0.0
    %526 = vmatpush1.msra.mxu0 0.0
    %527 = vmatprep.subr.mxu0 0.0
    %528 = vmatpush1.msra.mxu0 0.0
    %529 = vmatprep.subr.mxu0 0.0
    %530 = vmatpush1.msra.mxu0 0.0
    %531 = vmatprep.subr.mxu0 0.0
    %532 = vmatpush1.msra.mxu0 0.0
    %533 = vmatprep.subr.mxu0 0.0
    %534 = vmatpush1.msra.mxu0 0.0
    %535 = vmatprep.subr.mxu0 0.0
    %536 = vmatpush1.msra.mxu0 0.0
    %537 = vmatprep.subr.mxu0 0.0
    %538 = vmatpush1.msra.mxu0 0.0
    %539 = vmatprep.subr.mxu0 0.0
    %540 = vmatpush1.msra.mxu0 0.0
    %541 = vmatprep.subr.mxu0 0.0
    %542 = vmatpush1.msra.mxu0 0.0
    %543 = vmatprep.subr.mxu0 0.0
    %544 = vmatpush1.msra.mxu0 0.0
    %545 = vmatprep.subr.mxu0 0.0
    %546 = vmatpush1.msra.mxu0 0.0
    %547 = vmatprep.subr.mxu0 0.0
    %548 = vmatpush1.msra.mxu0 0.0
    %549 = vmatprep.subr.mxu0 0.0
    %550 = vmatpush1.msra.mxu0 0.0
    %551 = vmatprep.subr.mxu0 0.0
    %552 = vmatpush1.msra.mxu0 0.0
    %553 = vmatprep.subr.mxu0 0.0
    %554 = vmatpush1.msra.mxu0 0.0
    %555 = vmatprep.mubr.f32.mxu0 0.0
    %556 = vmatmul.mubr.f32.gmra.mrb[0].mxu0 %v489
    %v557 = vpop.f32.mrb[0].mxu0
    %v558 = vadd.f32 0.0, %v557
    %v559 = vpop.f32.mrb[0].mxu0
    %v560 = vadd.f32 0.0, %v559
    %561 = vdwg.mxu0
    %v562 = vadd.f32 %v171, %v558
    %v563 = vadd.f32 %v191, %v560
    %v564 = vxor.u32 %v562, 2147483648
    %v565 = vmul.f32 %v564, 1.442695
    %v566 = vpow.pop %v565
    %v567 = vadd.f32 %v566, 1.0
    %v568 = vrcp.pop %v567
    %v569 = vmul.f32 1.0, %v568
    %v570 = vtanh.pop %v562
    %v571 = vmul.f32 %v569, %v448
    %573 = vrot.lane.b32.xlu0 %v570, 64
    %v574 = vpop.permute.xlu0 %573
    %v576 = vmul.f32 %v569, %v574
    %578 = vrot.lane.b32.xlu0 %v576, 32
    %v579 = vpop.permute.xlu0 %578
    %v581 = vadd.f32 %v571, %v579
    %v582 = vtanh.pop %v581
    %584 = vrot.lane.b32.xlu0 %v582, 64
    %v585 = vpop.permute.xlu0 %584
    %v587 = vmul.f32 %v569, %v585
    %v588 = vxor.u32 %v563, 2147483648
    %v589 = vmul.f32 %v588, 1.442695
    %v590 = vpow.pop %v589
    %v591 = vadd.f32 %v590, 1.0
    %v592 = vrcp.pop %v591
    %v593 = vmul.f32 1.0, %v592
    %v594 = vtanh.pop %v563
    %v595 = vmul.f32 %v593, %v472
    %597 = vrot.lane.b32.xlu0 %v594, 64
    %v598 = vpop.permute.xlu0 %597
    %v600 = vmul.f32 %v593, %v598
    %602 = vrot.lane.b32.xlu0 %v600, 32
    %v603 = vpop.permute.xlu0 %602
    %v605 = vadd.f32 %v595, %v603
    %v606 = vtanh.pop %v605
    %608 = vrot.lane.b32.xlu0 %v606, 64
    %v609 = vpop.permute.xlu0 %608
    %v611 = vmul.f32 %v593, %v609
    %613 = vrot.lane.b32.xlu0 %v587, 32
    %v614 = vpop.permute.xlu0 %613
    %617 = vrot.lane.b32.xlu0 %v611, 64
    %v618 = vpop.permute.xlu0 %617
    %v620 = vsel %vm67, %v614, %v618
    %v622 = vsel %vm221, %v620, 0
    %624 = vmatprep.subr.mxu0 %v206
    %625 = vmatpush1.msra.mxu0 %v205
    %626 = vmatprep.subr.mxu0 %v208
    %627 = vmatpush1.msra.mxu0 %v207
    %628 = vmatprep.subr.mxu0 %v210
    %629 = vmatpush1.msra.mxu0 %v209
    %630 = vmatprep.subr.mxu0 %v212
    %631 = vmatpush1.msra.mxu0 %v211
    %632 = vmatprep.subr.mxu0 %v214
    %633 = vmatpush1.msra.mxu0 %v213
    %634 = vmatprep.subr.mxu0 %v216
    %635 = vmatpush1.msra.mxu0 %v215
    %636 = vmatprep.subr.mxu0 %v218
    %637 = vmatpush1.msra.mxu0 %v217
    %638 = vmatprep.subr.mxu0 %v220
    %639 = vmatpush1.msra.mxu0 %v219
    %640 = vmatprep.subr.mxu0 0.0
    %641 = vmatpush1.msra.mxu0 0.0
    %642 = vmatprep.subr.mxu0 0.0
    %643 = vmatpush1.msra.mxu0 0.0
    %644 = vmatprep.subr.mxu0 0.0
    %645 = vmatpush1.msra.mxu0 0.0
    %646 = vmatprep.subr.mxu0 0.0
    %647 = vmatpush1.msra.mxu0 0.0
    %648 = vmatprep.subr.mxu0 0.0
    %649 = vmatpush1.msra.mxu0 0.0
    %650 = vmatprep.subr.mxu0 0.0
    %651 = vmatpush1.msra.mxu0 0.0
    %652 = vmatprep.subr.mxu0 0.0
    %653 = vmatpush1.msra.mxu0 0.0
    %654 = vmatprep.subr.mxu0 0.0
    %655 = vmatpush1.msra.mxu0 0.0
    %656 = vmatprep.subr.mxu0 0.0
    %657 = vmatpush1.msra.mxu0 0.0
    %658 = vmatprep.subr.mxu0 0.0
    %659 = vmatpush1.msra.mxu0 0.0
    %660 = vmatprep.subr.mxu0 0.0
    %661 = vmatpush1.msra.mxu0 0.0
    %662 = vmatprep.subr.mxu0 0.0
    %663 = vmatpush1.msra.mxu0 0.0
    %664 = vmatprep.subr.mxu0 0.0
    %665 = vmatpush1.msra.mxu0 0.0
    %666 = vmatprep.subr.mxu0 0.0
    %667 = vmatpush1.msra.mxu0 0.0
    %668 = vmatprep.subr.mxu0 0.0
    %669 = vmatpush1.msra.mxu0 0.0
    %670 = vmatprep.subr.mxu0 0.0
    %671 = vmatpush1.msra.mxu0 0.0
    %672 = vmatprep.subr.mxu0 0.0
    %673 = vmatpush1.msra.mxu0 0.0
    %674 = vmatprep.subr.mxu0 0.0
    %675 = vmatpush1.msra.mxu0 0.0
    %676 = vmatprep.subr.mxu0 0.0
    %677 = vmatpush1.msra.mxu0 0.0
    %678 = vmatprep.subr.mxu0 0.0
    %679 = vmatpush1.msra.mxu0 0.0
    %680 = vmatprep.subr.mxu0 0.0
    %681 = vmatpush1.msra.mxu0 0.0
    %682 = vmatprep.subr.mxu0 0.0
    %683 = vmatpush1.msra.mxu0 0.0
    %684 = vmatprep.subr.mxu0 0.0
    %685 = vmatpush1.msra.mxu0 0.0
    %686 = vmatprep.subr.mxu0 0.0
    %687 = vmatpush1.msra.mxu0 0.0
    %688 = vmatprep.mubr.f32.mxu0 0.0
    %689 = vmatmul.mubr.f32.gmra.mrb[0].mxu0 %v622
    %v690 = vpop.f32.mrb[0].mxu0
    %v691 = vadd.f32 0.0, %v690
    %v692 = vpop.f32.mrb[0].mxu0
    %v693 = vadd.f32 0.0, %v692
    %694 = vdwg.mxu0
    %v695 = vadd.f32 %v177, %v691
    %v696 = vadd.f32 %v185, %v693
    %v697 = vxor.u32 %v695, 2147483648
    %v698 = vmul.f32 %v697, 1.442695
    %v699 = vpow.pop %v698
    %v700 = vadd.f32 %v699, 1.0
    %v701 = vrcp.pop %v700
    %v702 = vmul.f32 1.0, %v701
    %v703 = vtanh.pop %v695
    %v704 = vmul.f32 %v702, %v581
    %706 = vrot.lane.b32.xlu0 %v703, 64
    %v707 = vpop.permute.xlu0 %706
    %v709 = vmul.f32 %v702, %v707
    %711 = vrot.lane.b32.xlu0 %v709, 32
    %v712 = vpop.permute.xlu0 %711
    %v714 = vadd.f32 %v704, %v712
    %v715 = vtanh.pop %v714
    %717 = vrot.lane.b32.xlu0 %v715, 64
    %v718 = vpop.permute.xlu0 %717
    %v720 = vmul.f32 %v702, %v718
    %v721 = vxor.u32 %v696, 2147483648
    %v722 = vmul.f32 %v721, 1.442695
    %v723 = vpow.pop %v722
    %v724 = vadd.f32 %v723, 1.0
    %v725 = vrcp.pop %v724
    %v726 = vmul.f32 1.0, %v725
    %v727 = vtanh.pop %v696
    %v728 = vmul.f32 %v726, %v605
    %730 = vrot.lane.b32.xlu0 %v727, 64
    %v731 = vpop.permute.xlu0 %730
    %v733 = vmul.f32 %v726, %v731
    %735 = vrot.lane.b32.xlu0 %v733, 32
    %v736 = vpop.permute.xlu0 %735
    %v738 = vadd.f32 %v728, %v736
    %v739 = vtanh.pop %v738
    %741 = vrot.lane.b32.xlu0 %v739, 64
    %v742 = vpop.permute.xlu0 %741
    %v744 = vmul.f32 %v726, %v742
    %746 = vrot.lane.b32.xlu0 %v720, 32
    %v747 = vpop.permute.xlu0 %746
    %750 = vrot.lane.b32.xlu0 %v744, 64
    %v751 = vpop.permute.xlu0 %750
    %v753 = vsel %vm67, %v747, %v751
    %v755 = vsel %vm221, %v753, 0
    %757 = vmatprep.subr.mxu0 %v206
    %758 = vmatpush1.msra.mxu0 %v205
    %759 = vmatprep.subr.mxu0 %v208
    %760 = vmatpush1.msra.mxu0 %v207
    %761 = vmatprep.subr.mxu0 %v210
    %762 = vmatpush1.msra.mxu0 %v209
    %763 = vmatprep.subr.mxu0 %v212
    %764 = vmatpush1.msra.mxu0 %v211
    %765 = vmatprep.subr.mxu0 %v214
    %766 = vmatpush1.msra.mxu0 %v213
    %767 = vmatprep.subr.mxu0 %v216
    %768 = vmatpush1.msra.mxu0 %v215
    %769 = vmatprep.subr.mxu0 %v218
    %770 = vmatpush1.msra.mxu0 %v217
    %771 = vmatprep.subr.mxu0 %v220
    %772 = vmatpush1.msra.mxu0 %v219
    %773 = vmatprep.subr.mxu0 0.0
    %774 = vmatpush1.msra.mxu0 0.0
    %775 = vmatprep.subr.mxu0 0.0
    %776 = vmatpush1.msra.mxu0 0.0
    %777 = vmatprep.subr.mxu0 0.0
    %778 = vmatpush1.msra.mxu0 0.0
    %779 = vmatprep.subr.mxu0 0.0
    %780 = vmatpush1.msra.mxu0 0.0
    %781 = vmatprep.subr.mxu0 0.0
    %782 = vmatpush1.msra.mxu0 0.0
    %783 = vmatprep.subr.mxu0 0.0
    %784 = vmatpush1.msra.mxu0 0.0
    %785 = vmatprep.subr.mxu0 0.0
    %786 = vmatpush1.msra.mxu0 0.0
    %787 = vmatprep.subr.mxu0 0.0
    %788 = vmatpush1.msra.mxu0 0.0
    %789 = vmatprep.subr.mxu0 0.0
    %790 = vmatpush1.msra.mxu0 0.0
    %791 = vmatprep.subr.mxu0 0.0
    %792 = vmatpush1.msra.mxu0 0.0
    %793 = vmatprep.subr.mxu0 0.0
    %794 = vmatpush1.msra.mxu0 0.0
    %795 = vmatprep.subr.mxu0 0.0
    %796 = vmatpush1.msra.mxu0 0.0
    %797 = vmatprep.subr.mxu0 0.0
    %798 = vmatpush1.msra.mxu0 0.0
    %799 = vmatprep.subr.mxu0 0.0
    %800 = vmatpush1.msra.mxu0 0.0
    %801 = vmatprep.subr.mxu0 0.0
    %802 = vmatpush1.msra.mxu0 0.0
    %803 = vmatprep.subr.mxu0 0.0
    %804 = vmatpush1.msra.mxu0 0.0
    %805 = vmatprep.subr.mxu0 0.0
    %806 = vmatpush1.msra.mxu0 0.0
    %807 = vmatprep.subr.mxu0 0.0
    %808 = vmatpush1.msra.mxu0 0.0
    %809 = vmatprep.subr.mxu0 0.0
    %810 = vmatpush1.msra.mxu0 0.0
    %811 = vmatprep.subr.mxu0 0.0
    %812 = vmatpush1.msra.mxu0 0.0
    %813 = vmatprep.subr.mxu0 0.0
    %814 = vmatpush1.msra.mxu0 0.0
    %815 = vmatprep.subr.mxu0 0.0
    %816 = vmatpush1.msra.mxu0 0.0
    %817 = vmatprep.subr.mxu0 0.0
    %818 = vmatpush1.msra.mxu0 0.0
    %819 = vmatprep.subr.mxu0 0.0
    %820 = vmatpush1.msra.mxu0 0.0
    %821 = vmatprep.mubr.f32.mxu0 0.0
    %822 = vmatmul.mubr.f32.gmra.mrb[0].mxu0 %v755
    %v823 = vpop.f32.mrb[0].mxu0
    %v824 = vadd.f32 0.0, %v823
    %v825 = vpop.f32.mrb[0].mxu0
    %v826 = vadd.f32 0.0, %v825
    %827 = vdwg.mxu0
    %v828 = vadd.f32 %v183, %v824
    %v829 = vadd.f32 %v179, %v826
    %v830 = vxor.u32 %v828, 2147483648
    %v831 = vmul.f32 %v830, 1.442695
    %v832 = vpow.pop %v831
    %v833 = vadd.f32 %v832, 1.0
    %v834 = vrcp.pop %v833
    %v835 = vmul.f32 1.0, %v834
    %v836 = vtanh.pop %v828
    %v837 = vmul.f32 %v835, %v714
    %839 = vrot.lane.b32.xlu0 %v836, 64
    %v840 = vpop.permute.xlu0 %839
    %v842 = vmul.f32 %v835, %v840
    %844 = vrot.lane.b32.xlu0 %v842, 32
    %v845 = vpop.permute.xlu0 %844
    %v847 = vadd.f32 %v837, %v845
    %v848 = vtanh.pop %v847
    %850 = vrot.lane.b32.xlu0 %v848, 64
    %v851 = vpop.permute.xlu0 %850
    %v853 = vmul.f32 %v835, %v851
    %v854 = vxor.u32 %v829, 2147483648
    %v855 = vmul.f32 %v854, 1.442695
    %v856 = vpow.pop %v855
    %v857 = vadd.f32 %v856, 1.0
    %v858 = vrcp.pop %v857
    %v859 = vmul.f32 1.0, %v858
    %v860 = vtanh.pop %v829
    %v861 = vmul.f32 %v859, %v738
    %863 = vrot.lane.b32.xlu0 %v860, 64
    %v864 = vpop.permute.xlu0 %863
    %v866 = vmul.f32 %v859, %v864
    %868 = vrot.lane.b32.xlu0 %v866, 32
    %v869 = vpop.permute.xlu0 %868
    %v871 = vadd.f32 %v861, %v869
    %v872 = vtanh.pop %v871
    %874 = vrot.lane.b32.xlu0 %v872, 64
    %v875 = vpop.permute.xlu0 %874
    %v877 = vmul.f32 %v859, %v875
    %879 = vrot.lane.b32.xlu0 %v853, 32
    %v880 = vpop.permute.xlu0 %879
    %883 = vrot.lane.b32.xlu0 %v877, 64
    %v884 = vpop.permute.xlu0 %883
    %v886 = vsel %vm67, %v880, %v884
    %v888 = vsel %vm221, %v886, 0
    %890 = vmatprep.subr.mxu0 %v206
    %891 = vmatpush1.msra.mxu0 %v205
    %892 = vmatprep.subr.mxu0 %v208
    %893 = vmatpush1.msra.mxu0 %v207
    %894 = vmatprep.subr.mxu0 %v210
    %895 = vmatpush1.msra.mxu0 %v209
    %896 = vmatprep.subr.mxu0 %v212
    %897 = vmatpush1.msra.mxu0 %v211
    %898 = vmatprep.subr.mxu0 %v214
    %899 = vmatpush1.msra.mxu0 %v213
    %900 = vmatprep.subr.mxu0 %v216
    %901 = vmatpush1.msra.mxu0 %v215
    %902 = vmatprep.subr.mxu0 %v218
    %903 = vmatpush1.msra.mxu0 %v217
    %904 = vmatprep.subr.mxu0 %v220
    %905 = vmatpush1.msra.mxu0 %v219
    %906 = vmatprep.subr.mxu0 0.0
    %907 = vmatpush1.msra.mxu0 0.0
    %908 = vmatprep.subr.mxu0 0.0
    %909 = vmatpush1.msra.mxu0 0.0
    %910 = vmatprep.subr.mxu0 0.0
    %911 = vmatpush1.msra.mxu0 0.0
    %912 = vmatprep.subr.mxu0 0.0
    %913 = vmatpush1.msra.mxu0 0.0
    %914 = vmatprep.subr.mxu0 0.0
    %915 = vmatpush1.msra.mxu0 0.0
    %916 = vmatprep.subr.mxu0 0.0
    %917 = vmatpush1.msra.mxu0 0.0
    %918 = vmatprep.subr.mxu0 0.0
    %919 = vmatpush1.msra.mxu0 0.0
    %920 = vmatprep.subr.mxu0 0.0
    %921 = vmatpush1.msra.mxu0 0.0
    %922 = vmatprep.subr.mxu0 0.0
    %923 = vmatpush1.msra.mxu0 0.0
    %924 = vmatprep.subr.mxu0 0.0
    %925 = vmatpush1.msra.mxu0 0.0
    %926 = vmatprep.subr.mxu0 0.0
    %927 = vmatpush1.msra.mxu0 0.0
    %928 = vmatprep.subr.mxu0 0.0
    %929 = vmatpush1.msra.mxu0 0.0
    %930 = vmatprep.subr.mxu0 0.0
    %931 = vmatpush1.msra.mxu0 0.0
    %932 = vmatprep.subr.mxu0 0.0
    %933 = vmatpush1.msra.mxu0 0.0
    %934 = vmatprep.subr.mxu0 0.0
    %935 = vmatpush1.msra.mxu0 0.0
    %936 = vmatprep.subr.mxu0 0.0
    %937 = vmatpush1.msra.mxu0 0.0
    %938 = vmatprep.subr.mxu0 0.0
    %939 = vmatpush1.msra.mxu0 0.0
    %940 = vmatprep.subr.mxu0 0.0
    %941 = vmatpush1.msra.mxu0 0.0
    %942 = vmatprep.subr.mxu0 0.0
    %943 = vmatpush1.msra.mxu0 0.0
    %944 = vmatprep.subr.mxu0 0.0
    %945 = vmatpush1.msra.mxu0 0.0
    %946 = vmatprep.subr.mxu0 0.0
    %947 = vmatpush1.msra.mxu0 0.0
    %948 = vmatprep.subr.mxu0 0.0
    %949 = vmatpush1.msra.mxu0 0.0
    %950 = vmatprep.subr.mxu0 0.0
    %951 = vmatpush1.msra.mxu0 0.0
    %952 = vmatprep.subr.mxu0 0.0
    %953 = vmatpush1.msra.mxu0 0.0
    %954 = vmatprep.mubr.f32.mxu0 0.0
    %955 = vmatmul.mubr.f32.gmra.mrb[0].mxu0 %v888
    %v956 = vpop.f32.mrb[0].mxu0
    %v957 = vadd.f32 0.0, %v956
    %v958 = vpop.f32.mrb[0].mxu0
    %v959 = vadd.f32 0.0, %v958
    %960 = vdwg.mxu0
    %v961 = vadd.f32 %v189, %v957
    %v962 = vadd.f32 %v173, %v959
    %v963 = vxor.u32 %v961, 2147483648
    %v964 = vmul.f32 %v963, 1.442695
    %v965 = vpow.pop %v964
    %v966 = vadd.f32 %v965, 1.0
    %v967 = vrcp.pop %v966
    %v968 = vmul.f32 1.0, %v967
    %v969 = vtanh.pop %v961
    %v970 = vmul.f32 %v968, %v847
    %972 = vrot.lane.b32.xlu0 %v969, 64
    %v973 = vpop.permute.xlu0 %972
    %v975 = vmul.f32 %v968, %v973
    %977 = vrot.lane.b32.xlu0 %v975, 32
    %v978 = vpop.permute.xlu0 %977
    %v980 = vadd.f32 %v970, %v978
    %v981 = vtanh.pop %v980
    %983 = vrot.lane.b32.xlu0 %v981, 64
    %v984 = vpop.permute.xlu0 %983
    %v986 = vmul.f32 %v968, %v984
    %v987 = vxor.u32 %v962, 2147483648
    %v988 = vmul.f32 %v987, 1.442695
    %v989 = vpow.pop %v988
    %v990 = vadd.f32 %v989, 1.0
    %v991 = vrcp.pop %v990
    %v992 = vmul.f32 1.0, %v991
    %v993 = vtanh.pop %v962
    %v994 = vmul.f32 %v992, %v871
    %996 = vrot.lane.b32.xlu0 %v993, 64
    %v997 = vpop.permute.xlu0 %996
    %v999 = vmul.f32 %v992, %v997
    %1001 = vrot.lane.b32.xlu0 %v999, 32
    %v1002 = vpop.permute.xlu0 %1001
    %v1004 = vadd.f32 %v994, %v1002
    %v1005 = vtanh.pop %v1004
    %1007 = vrot.lane.b32.xlu0 %v1005, 64
    %v1008 = vpop.permute.xlu0 %1007
    %v1010 = vmul.f32 %v992, %v1008
    %1012 = vrot.lane.b32.xlu0 %v986, 32
    %v1013 = vpop.permute.xlu0 %1012
    %1016 = vrot.lane.b32.xlu0 %v1010, 64
    %v1017 = vpop.permute.xlu0 %1016
    %v1019 = vsel %vm67, %v1013, %v1017
    %v1021 = vsel %vm221, %v1019, 0
    %1023 = vmatprep.subr.mxu0 %v206
    %1024 = vmatpush1.msra.mxu0 %v205
    %1025 = vmatprep.subr.mxu0 %v208
    %1026 = vmatpush1.msra.mxu0 %v207
    %1027 = vmatprep.subr.mxu0 %v210
    %1028 = vmatpush1.msra.mxu0 %v209
    %1029 = vmatprep.subr.mxu0 %v212
    %1030 = vmatpush1.msra.mxu0 %v211
    %1031 = vmatprep.subr.mxu0 %v214
    %1032 = vmatpush1.msra.mxu0 %v213
    %1033 = vmatprep.subr.mxu0 %v216
    %1034 = vmatpush1.msra.mxu0 %v215
    %1035 = vmatprep.subr.mxu0 %v218
    %1036 = vmatpush1.msra.mxu0 %v217
    %1037 = vmatprep.subr.mxu0 %v220
    %1038 = vmatpush1.msra.mxu0 %v219
    %1039 = vmatprep.subr.mxu0 0.0
    %1040 = vmatpush1.msra.mxu0 0.0
    %1041 = vmatprep.subr.mxu0 0.0
    %1042 = vmatpush1.msra.mxu0 0.0
    %1043 = vmatprep.subr.mxu0 0.0
    %1044 = vmatpush1.msra.mxu0 0.0
    %1045 = vmatprep.subr.mxu0 0.0
    %1046 = vmatpush1.msra.mxu0 0.0
    %1047 = vmatprep.subr.mxu0 0.0
    %1048 = vmatpush1.msra.mxu0 0.0
    %1049 = vmatprep.subr.mxu0 0.0
    %1050 = vmatpush1.msra.mxu0 0.0
    %1051 = vmatprep.subr.mxu0 0.0
    %1052 = vmatpush1.msra.mxu0 0.0
    %1053 = vmatprep.subr.mxu0 0.0
    %1054 = vmatpush1.msra.mxu0 0.0
    %1055 = vmatprep.subr.mxu0 0.0
    %1056 = vmatpush1.msra.mxu0 0.0
    %1057 = vmatprep.subr.mxu0 0.0
    %1058 = vmatpush1.msra.mxu0 0.0
    %1059 = vmatprep.subr.mxu0 0.0
    %1060 = vmatpush1.msra.mxu0 0.0
    %1061 = vmatprep.subr.mxu0 0.0
    %1062 = vmatpush1.msra.mxu0 0.0
    %1063 = vmatprep.subr.mxu0 0.0
    %1064 = vmatpush1.msra.mxu0 0.0
    %1065 = vmatprep.subr.mxu0 0.0
    %1066 = vmatpush1.msra.mxu0 0.0
    %1067 = vmatprep.subr.mxu0 0.0
    %1068 = vmatpush1.msra.mxu0 0.0
    %1069 = vmatprep.subr.mxu0 0.0
    %1070 = vmatpush1.msra.mxu0 0.0
    %1071 = vmatprep.subr.mxu0 0.0
    %1072 = vmatpush1.msra.mxu0 0.0
    %1073 = vmatprep.subr.mxu0 0.0
    %1074 = vmatpush1.msra.mxu0 0.0
    %1075 = vmatprep.subr.mxu0 0.0
    %1076 = vmatpush1.msra.mxu0 0.0
    %1077 = vmatprep.subr.mxu0 0.0
    %1078 = vmatpush1.msra.mxu0 0.0
    %1079 = vmatprep.subr.mxu0 0.0
    %1080 = vmatpush1.msra.mxu0 0.0
    %1081 = vmatprep.subr.mxu0 0.0
    %1082 = vmatpush1.msra.mxu0 0.0
    %1083 = vmatprep.subr.mxu0 0.0
    %1084 = vmatpush1.msra.mxu0 0.0
    %1085 = vmatprep.subr.mxu0 0.0
    %1086 = vmatpush1.msra.mxu0 0.0
    %1087 = vmatprep.mubr.f32.mxu0 0.0
    %1088 = vmatmul.mubr.f32.gmra.mrb[0].mxu0 %v1021
    %v1089 = vpop.f32.mrb[0].mxu0
    %v1090 = vadd.f32 0.0, %v1089
    %v1091 = vpop.f32.mrb[0].mxu0
    %v1092 = vadd.f32 0.0, %v1091
    %1093 = vdwg.mxu0
    %v1094 = vadd.f32 %v195, %v1090
    %v1095 = vadd.f32 %v167, %v1092
    %v1096 = vxor.u32 %v1094, 2147483648
    %v1097 = vmul.f32 %v1096, 1.442695
    %v1098 = vpow.pop %v1097
    %v1099 = vadd.f32 %v1098, 1.0
    %v1100 = vrcp.pop %v1099
    %v1101 = vmul.f32 1.0, %v1100
    %v1102 = vtanh.pop %v1094
    %v1103 = vmul.f32 %v1101, %v980
    %1105 = vrot.lane.b32.xlu0 %v1102, 64
    %v1106 = vpop.permute.xlu0 %1105
    %v1108 = vmul.f32 %v1101, %v1106
    %1110 = vrot.lane.b32.xlu0 %v1108, 32
    %v1111 = vpop.permute.xlu0 %1110
    %v1113 = vadd.f32 %v1103, %v1111
    %v1114 = vtanh.pop %v1113
    %1116 = vrot.lane.b32.xlu0 %v1114, 64
    %v1117 = vpop.permute.xlu0 %1116
    %v1119 = vmul.f32 %v1101, %v1117
    %v1120 = vxor.u32 %v1095, 2147483648
    %v1121 = vmul.f32 %v1120, 1.442695
    %v1122 = vpow.pop %v1121
    %v1123 = vadd.f32 %v1122, 1.0
    %v1124 = vrcp.pop %v1123
    %v1125 = vmul.f32 1.0, %v1124
    %v1126 = vtanh.pop %v1095
    %v1127 = vmul.f32 %v1125, %v1004
    %1129 = vrot.lane.b32.xlu0 %v1126, 64
    %v1130 = vpop.permute.xlu0 %1129
    %v1132 = vmul.f32 %v1125, %v1130
    %1134 = vrot.lane.b32.xlu0 %v1132, 32
    %v1135 = vpop.permute.xlu0 %1134
    %v1137 = vadd.f32 %v1127, %v1135
    %v1138 = vtanh.pop %v1137
    %1140 = vrot.lane.b32.xlu0 %v1138, 64
    %v1141 = vpop.permute.xlu0 %1140
    %v1143 = vmul.f32 %v1125, %v1141
    %1145 = vrot.lane.b32.xlu0 %v1119, 32
    %v1146 = vpop.permute.xlu0 %1145
    %1149 = vrot.lane.b32.xlu0 %v1143, 64
    %v1150 = vpop.permute.xlu0 %1149
    %v1152 = vsel %vm67, %v1146, %v1150
    %v1154 = vsel %vm221, %v1152, 0
    %1156 = vmatprep.subr.mxu0 %v206
    %1157 = vmatpush1.msra.mxu0 %v205
    %1158 = vmatprep.subr.mxu0 %v208
    %1159 = vmatpush1.msra.mxu0 %v207
    %1160 = vmatprep.subr.mxu0 %v210
    %1161 = vmatpush1.msra.mxu0 %v209
    %1162 = vmatprep.subr.mxu0 %v212
    %1163 = vmatpush1.msra.mxu0 %v211
    %1164 = vmatprep.subr.mxu0 %v214
    %1165 = vmatpush1.msra.mxu0 %v213
    %1166 = vmatprep.subr.mxu0 %v216
    %1167 = vmatpush1.msra.mxu0 %v215
    %1168 = vmatprep.subr.mxu0 %v218
    %1169 = vmatpush1.msra.mxu0 %v217
    %1170 = vmatprep.subr.mxu0 %v220
    %1171 = vmatpush1.msra.mxu0 %v219
    %1172 = vmatprep.subr.mxu0 0.0
    %1173 = vmatpush1.msra.mxu0 0.0
    %1174 = vmatprep.subr.mxu0 0.0
    %1175 = vmatpush1.msra.mxu0 0.0
    %1176 = vmatprep.subr.mxu0 0.0
    %1177 = vmatpush1.msra.mxu0 0.0
    %1178 = vmatprep.subr.mxu0 0.0
    %1179 = vmatpush1.msra.mxu0 0.0
    %1180 = vmatprep.subr.mxu0 0.0
    %1181 = vmatpush1.msra.mxu0 0.0
    %1182 = vmatprep.subr.mxu0 0.0
    %1183 = vmatpush1.msra.mxu0 0.0
    %1184 = vmatprep.subr.mxu0 0.0
    %1185 = vmatpush1.msra.mxu0 0.0
    %1186 = vmatprep.subr.mxu0 0.0
    %1187 = vmatpush1.msra.mxu0 0.0
    %1188 = vmatprep.subr.mxu0 0.0
    %1189 = vmatpush1.msra.mxu0 0.0
    %1190 = vmatprep.subr.mxu0 0.0
    %1191 = vmatpush1.msra.mxu0 0.0
    %1192 = vmatprep.subr.mxu0 0.0
    %1193 = vmatpush1.msra.mxu0 0.0
    %1194 = vmatprep.subr.mxu0 0.0
    %1195 = vmatpush1.msra.mxu0 0.0
    %1196 = vmatprep.subr.mxu0 0.0
    %1197 = vmatpush1.msra.mxu0 0.0
    %1198 = vmatprep.subr.mxu0 0.0
    %1199 = vmatpush1.msra.mxu0 0.0
    %1200 = vmatprep.subr.mxu0 0.0
    %1201 = vmatpush1.msra.mxu0 0.0
    %1202 = vmatprep.subr.mxu0 0.0
    %1203 = vmatpush1.msra.mxu0 0.0
    %1204 = vmatprep.subr.mxu0 0.0
    %1205 = vmatpush1.msra.mxu0 0.0
    %1206 = vmatprep.subr.mxu0 0.0
    %1207 = vmatpush1.msra.mxu0 0.0
    %1208 = vmatprep.subr.mxu0 0.0
    %1209 = vmatpush1.msra.mxu0 0.0
    %1210 = vmatprep.subr.mxu0 0.0
    %1211 = vmatpush1.msra.mxu0 0.0
    %1212 = vmatprep.subr.mxu0 0.0
    %1213 = vmatpush1.msra.mxu0 0.0
    %1214 = vmatprep.subr.mxu0 0.0
    %1215 = vmatpush1.msra.mxu0 0.0
    %1216 = vmatprep.subr.mxu0 0.0
    %1217 = vmatpush1.msra.mxu0 0.0
    %1218 = vmatprep.subr.mxu0 0.0
    %1219 = vmatpush1.msra.mxu0 0.0
    %1220 = vmatprep.mubr.f32.mxu0 0.0
    %1221 = vmatmul.mubr.f32.gmra.mrb[0].mxu0 %v1154
    %v1222 = vpop.f32.mrb[0].mxu0
    %v1223 = vadd.f32 0.0, %v1222
    %v1224 = vpop.f32.mrb[0].mxu0
    %v1225 = vadd.f32 0.0, %v1224
    %1226 = vdwg.mxu0
    %v1227 = vadd.f32 %v201, %v1223
    %v1228 = vadd.f32 %v161, %v1225
    %v1229 = vxor.u32 %v1227, 2147483648
    %v1230 = vmul.f32 %v1229, 1.442695
    %v1231 = vpow.pop %v1230
    %v1232 = vadd.f32 %v1231, 1.0
    %v1233 = vrcp.pop %v1232
    %v1234 = vmul.f32 1.0, %v1233
    %v1235 = vtanh.pop %v1227
    %v1236 = vmul.f32 %v1234, %v1113
    %1238 = vrot.lane.b32.xlu0 %v1235, 64
    %v1239 = vpop.permute.xlu0 %1238
    %v1241 = vmul.f32 %v1234, %v1239
    %1243 = vrot.lane.b32.xlu0 %v1241, 32
    %v1244 = vpop.permute.xlu0 %1243
    %v1246 = vadd.f32 %v1236, %v1244
    %v1247 = vtanh.pop %v1246
    %1249 = vrot.lane.b32.xlu0 %v1247, 64
    %v1250 = vpop.permute.xlu0 %1249
    %v1252 = vmul.f32 %v1234, %v1250
    %v1253 = vxor.u32 %v1228, 2147483648
    %v1254 = vmul.f32 %v1253, 1.442695
    %v1255 = vpow.pop %v1254
    %v1256 = vadd.f32 %v1255, 1.0
    %v1257 = vrcp.pop %v1256
    %v1258 = vmul.f32 1.0, %v1257
    %v1259 = vtanh.pop %v1228
    %v1260 = vmul.f32 %v1258, %v1137
    %1262 = vrot.lane.b32.xlu0 %v1259, 64
    %v1263 = vpop.permute.xlu0 %1262
    %v1265 = vmul.f32 %v1258, %v1263
    %1267 = vrot.lane.b32.xlu0 %v1265, 32
    %v1268 = vpop.permute.xlu0 %1267
    %v1270 = vadd.f32 %v1260, %v1268
    %v1271 = vtanh.pop %v1270
    %1273 = vrot.lane.b32.xlu0 %v1271, 64
    %v1274 = vpop.permute.xlu0 %1273
    %v1276 = vmul.f32 %v1258, %v1274
    %1278 = vrot.lane.b32.xlu0 %v1276, 64
    %v1279 = vpop.permute.xlu0 %1278
    %v1281 = vsel %vm67, %v348, %v1279
    %v1282 = vsel %vm67, %v481, %v1150
    %v1283 = vsel %vm67, %v614, %v1017
    %v1284 = vsel %vm67, %v747, %v884
    %v1285 = vsel %vm67, %v880, %v751
    %v1286 = vsel %vm67, %v1013, %v618
    %v1287 = vsel %vm67, %v1146, %v485
    %1289 = vrot.lane.b32.xlu0 %v1252, 32
    %v1290 = vpop.permute.xlu0 %1289
    %v1292 = vsel %vm67, %v1290, %v352
    %v1293 = vld [vmem:[%s4] sm:$0xff]
    %v1294 = vld [vmem:[%s4 + $0x8] sm:$0xff]
    %v1295 = vld [vmem:[%s4 + $0x10] sm:$0xff]
    %v1296 = vld [vmem:[%s4 + $0x18] sm:$0xff]
    %v1297 = vld [vmem:[%s4 + $0x20] sm:$0xff]
    %v1298 = vld [vmem:[%s4 + $0x28] sm:$0xff]
    %v1299 = vld [vmem:[%s4 + $0x30] sm:$0xff]
    %v1300 = vld [vmem:[%s4 + $0x38] sm:$0xff]
    %v1301 = vld [vmem:[%s4 + $0x40] sm:$0xff]
    %v1302 = vld [vmem:[%s4 + $0x48] sm:$0xff]
    %v1303 = vld [vmem:[%s4 + $0x50] sm:$0xff]
    %v1304 = vld [vmem:[%s4 + $0x58] sm:$0xff]
    %v1305 = vld [vmem:[%s4 + $0x60] sm:$0xff]
    %v1306 = vld [vmem:[%s4 + $0x68] sm:$0xff]
    %v1307 = vld [vmem:[%s4 + $0x70] sm:$0xff]
    %v1308 = vld [vmem:[%s4 + $0x78] sm:$0xff]
    %v1309 = vld [vmem:[%s5] sm:$0x3]
    %v1311 = vlaneseq
    %v1312 = vshrl.u32 %v1311, 7
    %v1313 = vsub.s32 0, %v1312
    %v1314 = vrot.slane %v1309, %v1313
    %v1315 = vlaneseq
    %v1316 = vshrl.u32 %v1315, 7
    %v1317 = vsub.s32 1, %v1316
    %v1318 = vrot.slane %v1309, %v1317
    %v1322 = vsel %vm221, %v1281, 0
    %v1325 = vsel %vm221, %v1282, 0
    %v1328 = vsel %vm221, %v1283, 0
    %v1331 = vsel %vm221, %v1284, 0
    %v1334 = vsel %vm221, %v1285, 0
    %v1337 = vsel %vm221, %v1286, 0
    %v1340 = vsel %vm221, %v1287, 0
    %v1343 = vsel %vm221, %v1292, 0
    %1345 = vmatprep.subr.mxu0 %v1294
    %1346 = vmatpush1.msra.mxu0 %v1293
    %1347 = vmatprep.subr.mxu0 %v1296
    %1348 = vmatpush1.msra.mxu0 %v1295
    %1349 = vmatprep.subr.mxu0 %v1298
    %1350 = vmatpush1.msra.mxu0 %v1297
    %1351 = vmatprep.subr.mxu0 %v1300
    %1352 = vmatpush1.msra.mxu0 %v1299
    %1353 = vmatprep.subr.mxu0 %v1302
    %1354 = vmatpush1.msra.mxu0 %v1301
    %1355 = vmatprep.subr.mxu0 %v1304
    %1356 = vmatpush1.msra.mxu0 %v1303
    %1357 = vmatprep.subr.mxu0 %v1306
    %1358 = vmatpush1.msra.mxu0 %v1305
    %1359 = vmatprep.subr.mxu0 %v1308
    %1360 = vmatpush1.msra.mxu0 %v1307
    %1361 = vmatprep.subr.mxu0 0.0
    %1362 = vmatpush1.msra.mxu0 0.0
    %1363 = vmatprep.subr.mxu0 0.0
    %1364 = vmatpush1.msra.mxu0 0.0
    %1365 = vmatprep.subr.mxu0 0.0
    %1366 = vmatpush1.msra.mxu0 0.0
    %1367 = vmatprep.subr.mxu0 0.0
    %1368 = vmatpush1.msra.mxu0 0.0
    %1369 = vmatprep.subr.mxu0 0.0
    %1370 = vmatpush1.msra.mxu0 0.0
    %1371 = vmatprep.subr.mxu0 0.0
    %1372 = vmatpush1.msra.mxu0 0.0
    %1373 = vmatprep.subr.mxu0 0.0
    %1374 = vmatpush1.msra.mxu0 0.0
    %1375 = vmatprep.subr.mxu0 0.0
    %1376 = vmatpush1.msra.mxu0 0.0
    %1377 = vmatprep.subr.mxu0 0.0
    %1378 = vmatpush1.msra.mxu0 0.0
    %1379 = vmatprep.subr.mxu0 0.0
    %1380 = vmatpush1.msra.mxu0 0.0
    %1381 = vmatprep.subr.mxu0 0.0
    %1382 = vmatpush1.msra.mxu0 0.0
    %1383 = vmatprep.subr.mxu0 0.0
    %1384 = vmatpush1.msra.mxu0 0.0
    %1385 = vmatprep.subr.mxu0 0.0
    %1386 = vmatpush1.msra.mxu0 0.0
    %1387 = vmatprep.subr.mxu0 0.0
    %1388 = vmatpush1.msra.mxu0 0.0
    %1389 = vmatprep.subr.mxu0 0.0
    %1390 = vmatpush1.msra.mxu0 0.0
    %1391 = vmatprep.subr.mxu0 0.0
    %1392 = vmatpush1.msra.mxu0 0.0
    %1393 = vmatprep.subr.mxu0 0.0
    %1394 = vmatpush1.msra.mxu0 0.0
    %1395 = vmatprep.subr.mxu0 0.0
    %1396 = vmatpush1.msra.mxu0 0.0
    %1397 = vmatprep.subr.mxu0 0.0
    %1398 = vmatpush1.msra.mxu0 0.0
    %1399 = vmatprep.subr.mxu0 0.0
    %1400 = vmatpush1.msra.mxu0 0.0
    %1401 = vmatprep.subr.mxu0 0.0
    %1402 = vmatpush1.msra.mxu0 0.0
    %1403 = vmatprep.subr.mxu0 0.0
    %1404 = vmatpush1.msra.mxu0 0.0
    %1405 = vmatprep.subr.mxu0 0.0
    %1406 = vmatpush1.msra.mxu0 0.0
    %1407 = vmatprep.subr.mxu0 0.0
    %1408 = vmatpush1.msra.mxu0 0.0
    %1409 = vmatprep.mubr.f32.mxu0 0.0
    %1410 = vmatmul.mubr.f32.gmra.mrb[0].mxu0 %v1322
    %v1411 = vpop.f32.mrb[0].mxu0
    %v1412 = vadd.f32 %v1314, %v1411
    %v1413 = vpop.f32.mrb[0].mxu0
    %v1414 = vadd.f32 %v1318, %v1413
    %1415 = vmatprep.mubr.f32.mxu0 0.0
    %1416 = vmatmul.mubr.f32.gmra.mrb[0].mxu0 %v1325
    %v1417 = vpop.f32.mrb[0].mxu0
    %v1418 = vadd.f32 %v1314, %v1417
    %v1419 = vpop.f32.mrb[0].mxu0
    %v1420 = vadd.f32 %v1318, %v1419
    %1421 = vmatprep.mubr.f32.mxu0 0.0
    %1422 = vmatmul.mubr.f32.gmra.mrb[0].mxu0 %v1328
    %v1423 = vpop.f32.mrb[0].mxu0
    %v1424 = vadd.f32 %v1314, %v1423
    %v1425 = vpop.f32.mrb[0].mxu0
    %v1426 = vadd.f32 %v1318, %v1425
    %1427 = vmatprep.mubr.f32.mxu0 0.0
    %1428 = vmatmul.mubr.f32.gmra.mrb[0].mxu0 %v1331
    %v1429 = vpop.f32.mrb[0].mxu0
    %v1430 = vadd.f32 %v1314, %v1429
    %v1431 = vpop.f32.mrb[0].mxu0
    %v1432 = vadd.f32 %v1318, %v1431
    %1433 = vmatprep.mubr.f32.mxu0 0.0
    %1434 = vmatmul.mubr.f32.gmra.mrb[0].mxu0 %v1334
    %v1435 = vpop.f32.mrb[0].mxu0
    %v1436 = vadd.f32 %v1314, %v1435
    %v1437 = vpop.f32.mrb[0].mxu0
    %v1438 = vadd.f32 %v1318, %v1437
    %1439 = vmatprep.mubr.f32.mxu0 0.0
    %1440 = vmatmul.mubr.f32.gmra.mrb[0].mxu0 %v1337
    %v1441 = vpop.f32.mrb[0].mxu0
    %v1442 = vadd.f32 %v1314, %v1441
    %v1443 = vpop.f32.mrb[0].mxu0
    %v1444 = vadd.f32 %v1318, %v1443
    %1445 = vmatprep.mubr.f32.mxu0 0.0
    %1446 = vmatmul.mubr.f32.gmra.mrb[0].mxu0 %v1340
    %v1447 = vpop.f32.mrb[0].mxu0
    %v1448 = vadd.f32 %v1314, %v1447
    %v1449 = vpop.f32.mrb[0].mxu0
    %v1450 = vadd.f32 %v1318, %v1449
    %1451 = vmatprep.mubr.f32.mxu0 0.0
    %1452 = vmatmul.mubr.f32.gmra.mrb[0].mxu0 %v1343
    %v1453 = vpop.f32.mrb[0].mxu0
    %v1454 = vadd.f32 %v1314, %v1453
    %v1455 = vpop.f32.mrb[0].mxu0
    %v1456 = vadd.f32 %v1318, %v1455
    %1457 = vdwg.mxu0
    %v1458 = vld [vmem:[%s6] sm:$0xff]
    %v1459 = vld [vmem:[%s6 + $0x8] sm:$0xff]
    %v1460 = vld [vmem:[%s6 + $0x10] sm:$0xff]
    %v1461 = vld [vmem:[%s6 + $0x18] sm:$0xff]
    %v1462 = vld [vmem:[%s6 + $0x20] sm:$0xff]
    %v1463 = vld [vmem:[%s6 + $0x28] sm:$0xff]
    %v1464 = vld [vmem:[%s6 + $0x30] sm:$0xff]
    %v1465 = vld [vmem:[%s6 + $0x38] sm:$0xff]
    %v1466 = vld [vmem:[%s6 + $0x40] sm:$0xff]
    %v1467 = vld [vmem:[%s6 + $0x48] sm:$0xff]
    %v1468 = vld [vmem:[%s6 + $0x50] sm:$0xff]
    %v1469 = vld [vmem:[%s6 + $0x58] sm:$0xff]
    %v1470 = vld [vmem:[%s6 + $0x60] sm:$0xff]
    %v1471 = vld [vmem:[%s6 + $0x68] sm:$0xff]
    %v1472 = vld [vmem:[%s6 + $0x70] sm:$0xff]
    %v1473 = vld [vmem:[%s6 + $0x78] sm:$0xff]
    %1474 = vmatprep.subr.mxu0 %v1459
    %1475 = vmatpush1.msra.mxu0 %v1458
    %1476 = vmatprep.subr.mxu0 %v1461
    %1477 = vmatpush1.msra.mxu0 %v1460
    %1478 = vmatprep.subr.mxu0 %v1463
    %1479 = vmatpush1.msra.mxu0 %v1462
    %1480 = vmatprep.subr.mxu0 %v1465
    %1481 = vmatpush1.msra.mxu0 %v1464
    %1482 = vmatprep.subr.mxu0 %v1467
    %1483 = vmatpush1.msra.mxu0 %v1466
    %1484 = vmatprep.subr.mxu0 %v1469
    %1485 = vmatpush1.msra.mxu0 %v1468
    %1486 = vmatprep.subr.mxu0 %v1471
    %1487 = vmatpush1.msra.mxu0 %v1470
    %1488 = vmatprep.subr.mxu0 %v1473
    %1489 = vmatpush1.msra.mxu0 %v1472
    %1490 = vmatprep.subr.mxu0 0.0
    %1491 = vmatpush1.msra.mxu0 0.0
    %1492 = vmatprep.subr.mxu0 0.0
    %1493 = vmatpush1.msra.mxu0 0.0
    %1494 = vmatprep.subr.mxu0 0.0
    %1495 = vmatpush1.msra.mxu0 0.0
    %1496 = vmatprep.subr.mxu0 0.0
    %1497 = vmatpush1.msra.mxu0 0.0
    %1498 = vmatprep.subr.mxu0 0.0
    %1499 = vmatpush1.msra.mxu0 0.0
    %1500 = vmatprep.subr.mxu0 0.0
    %1501 = vmatpush1.msra.mxu0 0.0
    %1502 = vmatprep.subr.mxu0 0.0
    %1503 = vmatpush1.msra.mxu0 0.0
    %1504 = vmatprep.subr.mxu0 0.0
    %1505 = vmatpush1.msra.mxu0 0.0
    %1506 = vmatprep.subr.mxu0 0.0
    %1507 = vmatpush1.msra.mxu0 0.0
    %1508 = vmatprep.subr.mxu0 0.0
    %1509 = vmatpush1.msra.mxu0 0.0
    %1510 = vmatprep.subr.mxu0 0.0
    %1511 = vmatpush1.msra.mxu0 0.0
    %1512 = vmatprep.subr.mxu0 0.0
    %1513 = vmatpush1.msra.mxu0 0.0
    %1514 = vmatprep.subr.mxu0 0.0
    %1515 = vmatpush1.msra.mxu0 0.0
    %1516 = vmatprep.subr.mxu0 0.0
    %1517 = vmatpush1.msra.mxu0 0.0
    %1518 = vmatprep.subr.mxu0 0.0
    %1519 = vmatpush1.msra.mxu0 0.0
    %1520 = vmatprep.subr.mxu0 0.0
    %1521 = vmatpush1.msra.mxu0 0.0
    %1522 = vmatprep.subr.mxu0 0.0
    %1523 = vmatpush1.msra.mxu0 0.0
    %1524 = vmatprep.subr.mxu0 0.0
    %1525 = vmatpush1.msra.mxu0 0.0
    %1526 = vmatprep.subr.mxu0 0.0
    %1527 = vmatpush1.msra.mxu0 0.0
    %1528 = vmatprep.subr.mxu0 0.0
    %1529 = vmatpush1.msra.mxu0 0.0
    %1530 = vmatprep.subr.mxu0 0.0
    %1531 = vmatpush1.msra.mxu0 0.0
    %1532 = vmatprep.subr.mxu0 0.0
    %1533 = vmatpush1.msra.mxu0 0.0
    %1534 = vmatprep.subr.mxu0 0.0
    %1535 = vmatpush1.msra.mxu0 0.0
    %1536 = vmatprep.subr.mxu0 0.0
    %1537 = vmatpush1.msra.mxu0 0.0
    %1538 = vmatprep.mubr.f32.mxu0 0.0
    %1539 = vmatmul.mubr.f32.gmra.mrb[0].mxu0 %v223
    %v1540 = vpop.f32.mrb[0].mxu0
    %v1541 = vadd.f32 0.0, %v1540
    %v1542 = vpop.f32.mrb[0].mxu0
    %v1543 = vadd.f32 0.0, %v1542
    %1544 = vdwg.mxu0
    %v1545 = vadd.f32 %v1412, %v1541
    %v1546 = vadd.f32 %v1456, %v1543
    %v1547 = vxor.u32 %v1545, 2147483648
    %v1548 = vmul.f32 %v1547, 1.442695
    %v1549 = vpow.pop %v1548
    %v1550 = vadd.f32 %v1549, 1.0
    %v1551 = vrcp.pop %v1550
    %v1552 = vmul.f32 1.0, %v1551
    %v1553 = vtanh.pop %v1545
    %v1554 = vmul.f32 %v1552, 0.0
    %1556 = vrot.lane.b32.xlu0 %v1553, 64
    %v1557 = vpop.permute.xlu0 %1556
    %v1559 = vmul.f32 %v1552, %v1557
    %1561 = vrot.lane.b32.xlu0 %v1559, 32
    %v1562 = vpop.permute.xlu0 %1561
    %v1564 = vadd.f32 %v1554, %v1562
    %v1565 = vtanh.pop %v1564
    %1567 = vrot.lane.b32.xlu0 %v1565, 64
    %v1568 = vpop.permute.xlu0 %1567
    %v1570 = vmul.f32 %v1552, %v1568
    %v1571 = vxor.u32 %v1546, 2147483648
    %v1572 = vmul.f32 %v1571, 1.442695
    %v1573 = vpow.pop %v1572
    %v1574 = vadd.f32 %v1573, 1.0
    %v1575 = vrcp.pop %v1574
    %v1576 = vmul.f32 1.0, %v1575
    %v1577 = vtanh.pop %v1546
    %v1578 = vmul.f32 %v1576, 0.0
    %1580 = vrot.lane.b32.xlu0 %v1577, 64
    %v1581 = vpop.permute.xlu0 %1580
    %v1583 = vmul.f32 %v1576, %v1581
    %1585 = vrot.lane.b32.xlu0 %v1583, 32
    %v1586 = vpop.permute.xlu0 %1585
    %v1588 = vadd.f32 %v1578, %v1586
    %v1589 = vtanh.pop %v1588
    %1591 = vrot.lane.b32.xlu0 %v1589, 64
    %v1592 = vpop.permute.xlu0 %1591
    %v1594 = vmul.f32 %v1576, %v1592
    %1596 = vrot.lane.b32.xlu0 %v1570, 32
    %v1597 = vpop.permute.xlu0 %1596
    %1600 = vrot.lane.b32.xlu0 %v1594, 64
    %v1601 = vpop.permute.xlu0 %1600
    %v1603 = vsel %vm67, %v1597, %v1601
    %v1605 = vsel %vm221, %v1603, 0
    %1607 = vmatprep.subr.mxu0 %v1459
    %1608 = vmatpush1.msra.mxu0 %v1458
    %1609 = vmatprep.subr.mxu0 %v1461
    %1610 = vmatpush1.msra.mxu0 %v1460
    %1611 = vmatprep.subr.mxu0 %v1463
    %1612 = vmatpush1.msra.mxu0 %v1462
    %1613 = vmatprep.subr.mxu0 %v1465
    %1614 = vmatpush1.msra.mxu0 %v1464
    %1615 = vmatprep.subr.mxu0 %v1467
    %1616 = vmatpush1.msra.mxu0 %v1466
    %1617 = vmatprep.subr.mxu0 %v1469
    %1618 = vmatpush1.msra.mxu0 %v1468
    %1619 = vmatprep.subr.mxu0 %v1471
    %1620 = vmatpush1.msra.mxu0 %v1470
    %1621 = vmatprep.subr.mxu0 %v1473
    %1622 = vmatpush1.msra.mxu0 %v1472
    %1623 = vmatprep.subr.mxu0 0.0
    %1624 = vmatpush1.msra.mxu0 0.0
    %1625 = vmatprep.subr.mxu0 0.0
    %1626 = vmatpush1.msra.mxu0 0.0
    %1627 = vmatprep.subr.mxu0 0.0
    %1628 = vmatpush1.msra.mxu0 0.0
    %1629 = vmatprep.subr.mxu0 0.0
    %1630 = vmatpush1.msra.mxu0 0.0
    %1631 = vmatprep.subr.mxu0 0.0
    %1632 = vmatpush1.msra.mxu0 0.0
    %1633 = vmatprep.subr.mxu0 0.0
    %1634 = vmatpush1.msra.mxu0 0.0
    %1635 = vmatprep.subr.mxu0 0.0
    %1636 = vmatpush1.msra.mxu0 0.0
    %1637 = vmatprep.subr.mxu0 0.0
    %1638 = vmatpush1.msra.mxu0 0.0
    %1639 = vmatprep.subr.mxu0 0.0
    %1640 = vmatpush1.msra.mxu0 0.0
    %1641 = vmatprep.subr.mxu0 0.0
    %1642 = vmatpush1.msra.mxu0 0.0
    %1643 = vmatprep.subr.mxu0 0.0
    %1644 = vmatpush1.msra.mxu0 0.0
    %1645 = vmatprep.subr.mxu0 0.0
    %1646 = vmatpush1.msra.mxu0 0.0
    %1647 = vmatprep.subr.mxu0 0.0
    %1648 = vmatpush1.msra.mxu0 0.0
    %1649 = vmatprep.subr.mxu0 0.0
    %1650 = vmatpush1.msra.mxu0 0.0
    %1651 = vmatprep.subr.mxu0 0.0
    %1652 = vmatpush1.msra.mxu0 0.0
    %1653 = vmatprep.subr.mxu0 0.0
    %1654 = vmatpush1.msra.mxu0 0.0
    %1655 = vmatprep.subr.mxu0 0.0
    %1656 = vmatpush1.msra.mxu0 0.0
    %1657 = vmatprep.subr.mxu0 0.0
    %1658 = vmatpush1.msra.mxu0 0.0
    %1659 = vmatprep.subr.mxu0 0.0
    %1660 = vmatpush1.msra.mxu0 0.0
    %1661 = vmatprep.subr.mxu0 0.0
    %1662 = vmatpush1.msra.mxu0 0.0
    %1663 = vmatprep.subr.mxu0 0.0
    %1664 = vmatpush1.msra.mxu0 0.0
    %1665 = vmatprep.subr.mxu0 0.0
    %1666 = vmatpush1.msra.mxu0 0.0
    %1667 = vmatprep.subr.mxu0 0.0
    %1668 = vmatpush1.msra.mxu0 0.0
    %1669 = vmatprep.subr.mxu0 0.0
    %1670 = vmatpush1.msra.mxu0 0.0
    %1671 = vmatprep.mubr.f32.mxu0 0.0
    %1672 = vmatmul.mubr.f32.gmra.mrb[0].mxu0 %v1605
    %v1673 = vpop.f32.mrb[0].mxu0
    %v1674 = vadd.f32 0.0, %v1673
    %v1675 = vpop.f32.mrb[0].mxu0
    %v1676 = vadd.f32 0.0, %v1675
    %1677 = vdwg.mxu0
    %v1678 = vadd.f32 %v1418, %v1674
    %v1679 = vadd.f32 %v1450, %v1676
    %v1680 = vxor.u32 %v1678, 2147483648
    %v1681 = vmul.f32 %v1680, 1.442695
    %v1682 = vpow.pop %v1681
    %v1683 = vadd.f32 %v1682, 1.0
    %v1684 = vrcp.pop %v1683
    %v1685 = vmul.f32 1.0, %v1684
    %v1686 = vtanh.pop %v1678
    %v1687 = vmul.f32 %v1685, %v1564
    %1689 = vrot.lane.b32.xlu0 %v1686, 64
    %v1690 = vpop.permute.xlu0 %1689
    %v1692 = vmul.f32 %v1685, %v1690
    %1694 = vrot.lane.b32.xlu0 %v1692, 32
    %v1695 = vpop.permute.xlu0 %1694
    %v1697 = vadd.f32 %v1687, %v1695
    %v1698 = vtanh.pop %v1697
    %1700 = vrot.lane.b32.xlu0 %v1698, 64
    %v1701 = vpop.permute.xlu0 %1700
    %v1703 = vmul.f32 %v1685, %v1701
    %v1704 = vxor.u32 %v1679, 2147483648
    %v1705 = vmul.f32 %v1704, 1.442695
    %v1706 = vpow.pop %v1705
    %v1707 = vadd.f32 %v1706, 1.0
    %v1708 = vrcp.pop %v1707
    %v1709 = vmul.f32 1.0, %v1708
    %v1710 = vtanh.pop %v1679
    %v1711 = vmul.f32 %v1709, %v1588
    %1713 = vrot.lane.b32.xlu0 %v1710, 64
    %v1714 = vpop.permute.xlu0 %1713
    %v1716 = vmul.f32 %v1709, %v1714
    %1718 = vrot.lane.b32.xlu0 %v1716, 32
    %v1719 = vpop.permute.xlu0 %1718
    %v1721 = vadd.f32 %v1711, %v1719
    %v1722 = vtanh.pop %v1721
    %1724 = vrot.lane.b32.xlu0 %v1722, 64
    %v1725 = vpop.permute.xlu0 %1724
    %v1727 = vmul.f32 %v1709, %v1725
    %1729 = vrot.lane.b32.xlu0 %v1703, 32
    %v1730 = vpop.permute.xlu0 %1729
    %1733 = vrot.lane.b32.xlu0 %v1727, 64
    %v1734 = vpop.permute.xlu0 %1733
    %v1736 = vsel %vm67, %v1730, %v1734
    %v1738 = vsel %vm221, %v1736, 0
    %1740 = vmatprep.subr.mxu0 %v1459
    %1741 = vmatpush1.msra.mxu0 %v1458
    %1742 = vmatprep.subr.mxu0 %v1461
    %1743 = vmatpush1.msra.mxu0 %v1460
    %1744 = vmatprep.subr.mxu0 %v1463
    %1745 = vmatpush1.msra.mxu0 %v1462
    %1746 = vmatprep.subr.mxu0 %v1465
    %1747 = vmatpush1.msra.mxu0 %v1464
    %1748 = vmatprep.subr.mxu0 %v1467
    %1749 = vmatpush1.msra.mxu0 %v1466
    %1750 = vmatprep.subr.mxu0 %v1469
    %1751 = vmatpush1.msra.mxu0 %v1468
    %1752 = vmatprep.subr.mxu0 %v1471
    %1753 = vmatpush1.msra.mxu0 %v1470
    %1754 = vmatprep.subr.mxu0 %v1473
    %1755 = vmatpush1.msra.mxu0 %v1472
    %1756 = vmatprep.subr.mxu0 0.0
    %1757 = vmatpush1.msra.mxu0 0.0
    %1758 = vmatprep.subr.mxu0 0.0
    %1759 = vmatpush1.msra.mxu0 0.0
    %1760 = vmatprep.subr.mxu0 0.0
    %1761 = vmatpush1.msra.mxu0 0.0
    %1762 = vmatprep.subr.mxu0 0.0
    %1763 = vmatpush1.msra.mxu0 0.0
    %1764 = vmatprep.subr.mxu0 0.0
    %1765 = vmatpush1.msra.mxu0 0.0
    %1766 = vmatprep.subr.mxu0 0.0
    %1767 = vmatpush1.msra.mxu0 0.0
    %1768 = vmatprep.subr.mxu0 0.0
    %1769 = vmatpush1.msra.mxu0 0.0
    %1770 = vmatprep.subr.mxu0 0.0
    %1771 = vmatpush1.msra.mxu0 0.0
    %1772 = vmatprep.subr.mxu0 0.0
    %1773 = vmatpush1.msra.mxu0 0.0
    %1774 = vmatprep.subr.mxu0 0.0
    %1775 = vmatpush1.msra.mxu0 0.0
    %1776 = vmatprep.subr.mxu0 0.0
    %1777 = vmatpush1.msra.mxu0 0.0
    %1778 = vmatprep.subr.mxu0 0.0
    %1779 = vmatpush1.msra.mxu0 0.0
    %1780 = vmatprep.subr.mxu0 0.0
    %1781 = vmatpush1.msra.mxu0 0.0
    %1782 = vmatprep.subr.mxu0 0.0
    %1783 = vmatpush1.msra.mxu0 0.0
    %1784 = vmatprep.subr.mxu0 0.0
    %1785 = vmatpush1.msra.mxu0 0.0
    %1786 = vmatprep.subr.mxu0 0.0
    %1787 = vmatpush1.msra.mxu0 0.0
    %1788 = vmatprep.subr.mxu0 0.0
    %1789 = vmatpush1.msra.mxu0 0.0
    %1790 = vmatprep.subr.mxu0 0.0
    %1791 = vmatpush1.msra.mxu0 0.0
    %1792 = vmatprep.subr.mxu0 0.0
    %1793 = vmatpush1.msra.mxu0 0.0
    %1794 = vmatprep.subr.mxu0 0.0
    %1795 = vmatpush1.msra.mxu0 0.0
    %1796 = vmatprep.subr.mxu0 0.0
    %1797 = vmatpush1.msra.mxu0 0.0
    %1798 = vmatprep.subr.mxu0 0.0
    %1799 = vmatpush1.msra.mxu0 0.0
    %1800 = vmatprep.subr.mxu0 0.0
    %1801 = vmatpush1.msra.mxu0 0.0
    %1802 = vmatprep.subr.mxu0 0.0
    %1803 = vmatpush1.msra.mxu0 0.0
    %1804 = vmatprep.mubr.f32.mxu0 0.0
    %1805 = vmatmul.mubr.f32.gmra.mrb[0].mxu0 %v1738
    %v1806 = vpop.f32.mrb[0].mxu0
    %v1807 = vadd.f32 0.0, %v1806
    %v1808 = vpop.f32.mrb[0].mxu0
    %v1809 = vadd.f32 0.0, %v1808
    %1810 = vdwg.mxu0
    %v1811 = vadd.f32 %v1424, %v1807
    %v1812 = vadd.f32 %v1444, %v1809
    %v1813 = vxor.u32 %v1811, 2147483648
    %v1814 = vmul.f32 %v1813, 1.442695
    %v1815 = vpow.pop %v1814
    %v1816 = vadd.f32 %v1815, 1.0
    %v1817 = vrcp.pop %v1816
    %v1818 = vmul.f32 1.0, %v1817
    %v1819 = vtanh.pop %v1811
    %v1820 = vmul.f32 %v1818, %v1697
    %1822 = vrot.lane.b32.xlu0 %v1819, 64
    %v1823 = vpop.permute.xlu0 %1822
    %v1825 = vmul.f32 %v1818, %v1823
    %1827 = vrot.lane.b32.xlu0 %v1825, 32
    %v1828 = vpop.permute.xlu0 %1827
    %v1830 = vadd.f32 %v1820, %v1828
    %v1831 = vtanh.pop %v1830
    %1833 = vrot.lane.b32.xlu0 %v1831, 64
    %v1834 = vpop.permute.xlu0 %1833
    %v1836 = vmul.f32 %v1818, %v1834
    %v1837 = vxor.u32 %v1812, 2147483648
    %v1838 = vmul.f32 %v1837, 1.442695
    %v1839 = vpow.pop %v1838
    %v1840 = vadd.f32 %v1839, 1.0
    %v1841 = vrcp.pop %v1840
    %v1842 = vmul.f32 1.0, %v1841
    %v1843 = vtanh.pop %v1812
    %v1844 = vmul.f32 %v1842, %v1721
    %1846 = vrot.lane.b32.xlu0 %v1843, 64
    %v1847 = vpop.permute.xlu0 %1846
    %v1849 = vmul.f32 %v1842, %v1847
    %1851 = vrot.lane.b32.xlu0 %v1849, 32
    %v1852 = vpop.permute.xlu0 %1851
    %v1854 = vadd.f32 %v1844, %v1852
    %v1855 = vtanh.pop %v1854
    %1857 = vrot.lane.b32.xlu0 %v1855, 64
    %v1858 = vpop.permute.xlu0 %1857
    %v1860 = vmul.f32 %v1842, %v1858
    %1862 = vrot.lane.b32.xlu0 %v1836, 32
    %v1863 = vpop.permute.xlu0 %1862
    %1866 = vrot.lane.b32.xlu0 %v1860, 64
    %v1867 = vpop.permute.xlu0 %1866
    %v1869 = vsel %vm67, %v1863, %v1867
    %v1871 = vsel %vm221, %v1869, 0
    %1873 = vmatprep.subr.mxu0 %v1459
    %1874 = vmatpush1.msra.mxu0 %v1458
    %1875 = vmatprep.subr.mxu0 %v1461
    %1876 = vmatpush1.msra.mxu0 %v1460
    %1877 = vmatprep.subr.mxu0 %v1463
    %1878 = vmatpush1.msra.mxu0 %v1462
    %1879 = vmatprep.subr.mxu0 %v1465
    %1880 = vmatpush1.msra.mxu0 %v1464
    %1881 = vmatprep.subr.mxu0 %v1467
    %1882 = vmatpush1.msra.mxu0 %v1466
    %1883 = vmatprep.subr.mxu0 %v1469
    %1884 = vmatpush1.msra.mxu0 %v1468
    %1885 = vmatprep.subr.mxu0 %v1471
    %1886 = vmatpush1.msra.mxu0 %v1470
    %1887 = vmatprep.subr.mxu0 %v1473
    %1888 = vmatpush1.msra.mxu0 %v1472
    %1889 = vmatprep.subr.mxu0 0.0
    %1890 = vmatpush1.msra.mxu0 0.0
    %1891 = vmatprep.subr.mxu0 0.0
    %1892 = vmatpush1.msra.mxu0 0.0
    %1893 = vmatprep.subr.mxu0 0.0
    %1894 = vmatpush1.msra.mxu0 0.0
    %1895 = vmatprep.subr.mxu0 0.0
    %1896 = vmatpush1.msra.mxu0 0.0
    %1897 = vmatprep.subr.mxu0 0.0
    %1898 = vmatpush1.msra.mxu0 0.0
    %1899 = vmatprep.subr.mxu0 0.0
    %1900 = vmatpush1.msra.mxu0 0.0
    %1901 = vmatprep.subr.mxu0 0.0
    %1902 = vmatpush1.msra.mxu0 0.0
    %1903 = vmatprep.subr.mxu0 0.0
    %1904 = vmatpush1.msra.mxu0 0.0
    %1905 = vmatprep.subr.mxu0 0.0
    %1906 = vmatpush1.msra.mxu0 0.0
    %1907 = vmatprep.subr.mxu0 0.0
    %1908 = vmatpush1.msra.mxu0 0.0
    %1909 = vmatprep.subr.mxu0 0.0
    %1910 = vmatpush1.msra.mxu0 0.0
    %1911 = vmatprep.subr.mxu0 0.0
    %1912 = vmatpush1.msra.mxu0 0.0
    %1913 = vmatprep.subr.mxu0 0.0
    %1914 = vmatpush1.msra.mxu0 0.0
    %1915 = vmatprep.subr.mxu0 0.0
    %1916 = vmatpush1.msra.mxu0 0.0
    %1917 = vmatprep.subr.mxu0 0.0
    %1918 = vmatpush1.msra.mxu0 0.0
    %1919 = vmatprep.subr.mxu0 0.0
    %1920 = vmatpush1.msra.mxu0 0.0
    %1921 = vmatprep.subr.mxu0 0.0
    %1922 = vmatpush1.msra.mxu0 0.0
    %1923 = vmatprep.subr.mxu0 0.0
    %1924 = vmatpush1.msra.mxu0 0.0
    %1925 = vmatprep.subr.mxu0 0.0
    %1926 = vmatpush1.msra.mxu0 0.0
    %1927 = vmatprep.subr.mxu0 0.0
    %1928 = vmatpush1.msra.mxu0 0.0
    %1929 = vmatprep.subr.mxu0 0.0
    %1930 = vmatpush1.msra.mxu0 0.0
    %1931 = vmatprep.subr.mxu0 0.0
    %1932 = vmatpush1.msra.mxu0 0.0
    %1933 = vmatprep.subr.mxu0 0.0
    %1934 = vmatpush1.msra.mxu0 0.0
    %1935 = vmatprep.subr.mxu0 0.0
    %1936 = vmatpush1.msra.mxu0 0.0
    %1937 = vmatprep.mubr.f32.mxu0 0.0
    %1938 = vmatmul.mubr.f32.gmra.mrb[0].mxu0 %v1871
    %v1939 = vpop.f32.mrb[0].mxu0
    %v1940 = vadd.f32 0.0, %v1939
    %v1941 = vpop.f32.mrb[0].mxu0
    %v1942 = vadd.f32 0.0, %v1941
    %1943 = vdwg.mxu0
    %v1944 = vadd.f32 %v1430, %v1940
    %v1945 = vadd.f32 %v1438, %v1942
    %v1946 = vxor.u32 %v1944, 2147483648
    %v1947 = vmul.f32 %v1946, 1.442695
    %v1948 = vpow.pop %v1947
    %v1949 = vadd.f32 %v1948, 1.0
    %v1950 = vrcp.pop %v1949
    %v1951 = vmul.f32 1.0, %v1950
    %v1952 = vtanh.pop %v1944
    %v1953 = vmul.f32 %v1951, %v1830
    %1955 = vrot.lane.b32.xlu0 %v1952, 64
    %v1956 = vpop.permute.xlu0 %1955
    %v1958 = vmul.f32 %v1951, %v1956
    %1960 = vrot.lane.b32.xlu0 %v1958, 32
    %v1961 = vpop.permute.xlu0 %1960
    %v1963 = vadd.f32 %v1953, %v1961
    %v1964 = vtanh.pop %v1963
    %1966 = vrot.lane.b32.xlu0 %v1964, 64
    %v1967 = vpop.permute.xlu0 %1966
    %v1969 = vmul.f32 %v1951, %v1967
    %v1970 = vxor.u32 %v1945, 2147483648
    %v1971 = vmul.f32 %v1970, 1.442695
    %v1972 = vpow.pop %v1971
    %v1973 = vadd.f32 %v1972, 1.0
    %v1974 = vrcp.pop %v1973
    %v1975 = vmul.f32 1.0, %v1974
    %v1976 = vtanh.pop %v1945
    %v1977 = vmul.f32 %v1975, %v1854
    %1979 = vrot.lane.b32.xlu0 %v1976, 64
    %v1980 = vpop.permute.xlu0 %1979
    %v1982 = vmul.f32 %v1975, %v1980
    %1984 = vrot.lane.b32.xlu0 %v1982, 32
    %v1985 = vpop.permute.xlu0 %1984
    %v1987 = vadd.f32 %v1977, %v1985
    %v1988 = vtanh.pop %v1987
    %1990 = vrot.lane.b32.xlu0 %v1988, 64
    %v1991 = vpop.permute.xlu0 %1990
    %v1993 = vmul.f32 %v1975, %v1991
    %1995 = vrot.lane.b32.xlu0 %v1969, 32
    %v1996 = vpop.permute.xlu0 %1995
    %1999 = vrot.lane.b32.xlu0 %v1993, 64
    %v2000 = vpop.permute.xlu0 %1999
    %v2002 = vsel %vm67, %v1996, %v2000
    %v2004 = vsel %vm221, %v2002, 0
    %2006 = vmatprep.subr.mxu0 %v1459
    %2007 = vmatpush1.msra.mxu0 %v1458
    %2008 = vmatprep.subr.mxu0 %v1461
    %2009 = vmatpush1.msra.mxu0 %v1460
    %2010 = vmatprep.subr.mxu0 %v1463
    %2011 = vmatpush1.msra.mxu0 %v1462
    %2012 = vmatprep.subr.mxu0 %v1465
    %2013 = vmatpush1.msra.mxu0 %v1464
    %2014 = vmatprep.subr.mxu0 %v1467
    %2015 = vmatpush1.msra.mxu0 %v1466
    %2016 = vmatprep.subr.mxu0 %v1469
    %2017 = vmatpush1.msra.mxu0 %v1468
    %2018 = vmatprep.subr.mxu0 %v1471
    %2019 = vmatpush1.msra.mxu0 %v1470
    %2020 = vmatprep.subr.mxu0 %v1473
    %2021 = vmatpush1.msra.mxu0 %v1472
    %2022 = vmatprep.subr.mxu0 0.0
    %2023 = vmatpush1.msra.mxu0 0.0
    %2024 = vmatprep.subr.mxu0 0.0
    %2025 = vmatpush1.msra.mxu0 0.0
    %2026 = vmatprep.subr.mxu0 0.0
    %2027 = vmatpush1.msra.mxu0 0.0
    %2028 = vmatprep.subr.mxu0 0.0
    %2029 = vmatpush1.msra.mxu0 0.0
    %2030 = vmatprep.subr.mxu0 0.0
    %2031 = vmatpush1.msra.mxu0 0.0
    %2032 = vmatprep.subr.mxu0 0.0
    %2033 = vmatpush1.msra.mxu0 0.0
    %2034 = vmatprep.subr.mxu0 0.0
    %2035 = vmatpush1.msra.mxu0 0.0
    %2036 = vmatprep.subr.mxu0 0.0
    %2037 = vmatpush1.msra.mxu0 0.0
    %2038 = vmatprep.subr.mxu0 0.0
    %2039 = vmatpush1.msra.mxu0 0.0
    %2040 = vmatprep.subr.mxu0 0.0
    %2041 = vmatpush1.msra.mxu0 0.0
    %2042 = vmatprep.subr.mxu0 0.0
    %2043 = vmatpush1.msra.mxu0 0.0
    %2044 = vmatprep.subr.mxu0 0.0
    %2045 = vmatpush1.msra.mxu0 0.0
    %2046 = vmatprep.subr.mxu0 0.0
    %2047 = vmatpush1.msra.mxu0 0.0
    %2048 = vmatprep.subr.mxu0 0.0
    %2049 = vmatpush1.msra.mxu0 0.0
    %2050 = vmatprep.subr.mxu0 0.0
    %2051 = vmatpush1.msra.mxu0 0.0
    %2052 = vmatprep.subr.mxu0 0.0
    %2053 = vmatpush1.msra.mxu0 0.0
    %2054 = vmatprep.subr.mxu0 0.0
    %2055 = vmatpush1.msra.mxu0 0.0
    %2056 = vmatprep.subr.mxu0 0.0
    %2057 = vmatpush1.msra.mxu0 0.0
    %2058 = vmatprep.subr.mxu0 0.0
    %2059 = vmatpush1.msra.mxu0 0.0
    %2060 = vmatprep.subr.mxu0 0.0
    %2061 = vmatpush1.msra.mxu0 0.0
    %2062 = vmatprep.subr.mxu0 0.0
    %2063 = vmatpush1.msra.mxu0 0.0
    %2064 = vmatprep.subr.mxu0 0.0
    %2065 = vmatpush1.msra.mxu0 0.0
    %2066 = vmatprep.subr.mxu0 0.0
    %2067 = vmatpush1.msra.mxu0 0.0
    %2068 = vmatprep.subr.mxu0 0.0
    %2069 = vmatpush1.msra.mxu0 0.0
    %2070 = vmatprep.mubr.f32.mxu0 0.0
    %2071 = vmatmul.mubr.f32.gmra.mrb[0].mxu0 %v2004
    %v2072 = vpop.f32.mrb[0].mxu0
    %v2073 = vadd.f32 0.0, %v2072
    %v2074 = vpop.f32.mrb[0].mxu0
    %v2075 = vadd.f32 0.0, %v2074
    %2076 = vdwg.mxu0
    %v2077 = vadd.f32 %v1436, %v2073
    %v2078 = vadd.f32 %v1432, %v2075
    %v2079 = vxor.u32 %v2077, 2147483648
    %v2080 = vmul.f32 %v2079, 1.442695
    %v2081 = vpow.pop %v2080
    %v2082 = vadd.f32 %v2081, 1.0
    %v2083 = vrcp.pop %v2082
    %v2084 = vmul.f32 1.0, %v2083
    %v2085 = vtanh.pop %v2077
    %v2086 = vmul.f32 %v2084, %v1963
    %2088 = vrot.lane.b32.xlu0 %v2085, 64
    %v2089 = vpop.permute.xlu0 %2088
    %v2091 = vmul.f32 %v2084, %v2089
    %2093 = vrot.lane.b32.xlu0 %v2091, 32
    %v2094 = vpop.permute.xlu0 %2093
    %v2096 = vadd.f32 %v2086, %v2094
    %v2097 = vtanh.pop %v2096
    %2099 = vrot.lane.b32.xlu0 %v2097, 64
    %v2100 = vpop.permute.xlu0 %2099
    %v2102 = vmul.f32 %v2084, %v2100
    %v2103 = vxor.u32 %v2078, 2147483648
    %v2104 = vmul.f32 %v2103, 1.442695
    %v2105 = vpow.pop %v2104
    %v2106 = vadd.f32 %v2105, 1.0
    %v2107 = vrcp.pop %v2106
    %v2108 = vmul.f32 1.0, %v2107
    %v2109 = vtanh.pop %v2078
    %v2110 = vmul.f32 %v2108, %v1987
    %2112 = vrot.lane.b32.xlu0 %v2109, 64
    %v2113 = vpop.permute.xlu0 %2112
    %v2115 = vmul.f32 %v2108, %v2113
    %2117 = vrot.lane.b32.xlu0 %v2115, 32
    %v2118 = vpop.permute.xlu0 %2117
    %v2120 = vadd.f32 %v2110, %v2118
    %v2121 = vtanh.pop %v2120
    %2123 = vrot.lane.b32.xlu0 %v2121, 64
    %v2124 = vpop.permute.xlu0 %2123
    %v2126 = vmul.f32 %v2108, %v2124
    %2128 = vrot.lane.b32.xlu0 %v2102, 32
    %v2129 = vpop.permute.xlu0 %2128
    %2132 = vrot.lane.b32.xlu0 %v2126, 64
    %v2133 = vpop.permute.xlu0 %2132
    %v2135 = vsel %vm67, %v2129, %v2133
    %v2137 = vsel %vm221, %v2135, 0
    %2139 = vmatprep.subr.mxu0 %v1459
    %2140 = vmatpush1.msra.mxu0 %v1458
    %2141 = vmatprep.subr.mxu0 %v1461
    %2142 = vmatpush1.msra.mxu0 %v1460
    %2143 = vmatprep.subr.mxu0 %v1463
    %2144 = vmatpush1.msra.mxu0 %v1462
    %2145 = vmatprep.subr.mxu0 %v1465
    %2146 = vmatpush1.msra.mxu0 %v1464
    %2147 = vmatprep.subr.mxu0 %v1467
    %2148 = vmatpush1.msra.mxu0 %v1466
    %2149 = vmatprep.subr.mxu0 %v1469
    %2150 = vmatpush1.msra.mxu0 %v1468
    %2151 = vmatprep.subr.mxu0 %v1471
    %2152 = vmatpush1.msra.mxu0 %v1470
    %2153 = vmatprep.subr.mxu0 %v1473
    %2154 = vmatpush1.msra.mxu0 %v1472
    %2155 = vmatprep.subr.mxu0 0.0
    %2156 = vmatpush1.msra.mxu0 0.0
    %2157 = vmatprep.subr.mxu0 0.0
    %2158 = vmatpush1.msra.mxu0 0.0
    %2159 = vmatprep.subr.mxu0 0.0
    %2160 = vmatpush1.msra.mxu0 0.0
    %2161 = vmatprep.subr.mxu0 0.0
    %2162 = vmatpush1.msra.mxu0 0.0
    %2163 = vmatprep.subr.mxu0 0.0
    %2164 = vmatpush1.msra.mxu0 0.0
    %2165 = vmatprep.subr.mxu0 0.0
    %2166 = vmatpush1.msra.mxu0 0.0
    %2167 = vmatprep.subr.mxu0 0.0
    %2168 = vmatpush1.msra.mxu0 0.0
    %2169 = vmatprep.subr.mxu0 0.0
    %2170 = vmatpush1.msra.mxu0 0.0
    %2171 = vmatprep.subr.mxu0 0.0
    %2172 = vmatpush1.msra.mxu0 0.0
    %2173 = vmatprep.subr.mxu0 0.0
    %2174 = vmatpush1.msra.mxu0 0.0
    %2175 = vmatprep.subr.mxu0 0.0
    %2176 = vmatpush1.msra.mxu0 0.0
    %2177 = vmatprep.subr.mxu0 0.0
    %2178 = vmatpush1.msra.mxu0 0.0
    %2179 = vmatprep.subr.mxu0 0.0
    %2180 = vmatpush1.msra.mxu0 0.0
    %2181 = vmatprep.subr.mxu0 0.0
    %2182 = vmatpush1.msra.mxu0 0.0
    %2183 = vmatprep.subr.mxu0 0.0
    %2184 = vmatpush1.msra.mxu0 0.0
    %2185 = vmatprep.subr.mxu0 0.0
    %2186 = vmatpush1.msra.mxu0 0.0
    %2187 = vmatprep.subr.mxu0 0.0
    %2188 = vmatpush1.msra.mxu0 0.0
    %2189 = vmatprep.subr.mxu0 0.0
    %2190 = vmatpush1.msra.mxu0 0.0
    %2191 = vmatprep.subr.mxu0 0.0
    %2192 = vmatpush1.msra.mxu0 0.0
    %2193 = vmatprep.subr.mxu0 0.0
    %2194 = vmatpush1.msra.mxu0 0.0
    %2195 = vmatprep.subr.mxu0 0.0
    %2196 = vmatpush1.msra.mxu0 0.0
    %2197 = vmatprep.subr.mxu0 0.0
    %2198 = vmatpush1.msra.mxu0 0.0
    %2199 = vmatprep.subr.mxu0 0.0
    %2200 = vmatpush1.msra.mxu0 0.0
    %2201 = vmatprep.subr.mxu0 0.0
    %2202 = vmatpush1.msra.mxu0 0.0
    %2203 = vmatprep.mubr.f32.mxu0 0.0
    %2204 = vmatmul.mubr.f32.gmra.mrb[0].mxu0 %v2137
    %v2205 = vpop.f32.mrb[0].mxu0
    %v2206 = vadd.f32 0.0, %v2205
    %v2207 = vpop.f32.mrb[0].mxu0
    %v2208 = vadd.f32 0.0, %v2207
    %2209 = vdwg.mxu0
    %v2210 = vadd.f32 %v1442, %v2206
    %v2211 = vadd.f32 %v1426, %v2208
    %v2212 = vxor.u32 %v2210, 2147483648
    %v2213 = vmul.f32 %v2212, 1.442695
    %v2214 = vpow.pop %v2213
    %v2215 = vadd.f32 %v2214, 1.0
    %v2216 = vrcp.pop %v2215
    %v2217 = vmul.f32 1.0, %v2216
    %v2218 = vtanh.pop %v2210
    %v2219 = vmul.f32 %v2217, %v2096
    %2221 = vrot.lane.b32.xlu0 %v2218, 64
    %v2222 = vpop.permute.xlu0 %2221
    %v2224 = vmul.f32 %v2217, %v2222
    %2226 = vrot.lane.b32.xlu0 %v2224, 32
    %v2227 = vpop.permute.xlu0 %2226
    %v2229 = vadd.f32 %v2219, %v2227
    %v2230 = vtanh.pop %v2229
    %2232 = vrot.lane.b32.xlu0 %v2230, 64
    %v2233 = vpop.permute.xlu0 %2232
    %v2235 = vmul.f32 %v2217, %v2233
    %v2236 = vxor.u32 %v2211, 2147483648
    %v2237 = vmul.f32 %v2236, 1.442695
    %v2238 = vpow.pop %v2237
    %v2239 = vadd.f32 %v2238, 1.0
    %v2240 = vrcp.pop %v2239
    %v2241 = vmul.f32 1.0, %v2240
    %v2242 = vtanh.pop %v2211
    %v2243 = vmul.f32 %v2241, %v2120
    %2245 = vrot.lane.b32.xlu0 %v2242, 64
    %v2246 = vpop.permute.xlu0 %2245
    %v2248 = vmul.f32 %v2241, %v2246
    %2250 = vrot.lane.b32.xlu0 %v2248, 32
    %v2251 = vpop.permute.xlu0 %2250
    %v2253 = vadd.f32 %v2243, %v2251
    %v2254 = vtanh.pop %v2253
    %2256 = vrot.lane.b32.xlu0 %v2254, 64
    %v2257 = vpop.permute.xlu0 %2256
    %v2259 = vmul.f32 %v2241, %v2257
    %2261 = vrot.lane.b32.xlu0 %v2235, 32
    %v2262 = vpop.permute.xlu0 %2261
    %2265 = vrot.lane.b32.xlu0 %v2259, 64
    %v2266 = vpop.permute.xlu0 %2265
    %v2268 = vsel %vm67, %v2262, %v2266
    %v2270 = vsel %vm221, %v2268, 0
    %2272 = vmatprep.subr.mxu0 %v1459
    %2273 = vmatpush1.msra.mxu0 %v1458
    %2274 = vmatprep.subr.mxu0 %v1461
    %2275 = vmatpush1.msra.mxu0 %v1460
    %2276 = vmatprep.subr.mxu0 %v1463
    %2277 = vmatpush1.msra.mxu0 %v1462
    %2278 = vmatprep.subr.mxu0 %v1465
    %2279 = vmatpush1.msra.mxu0 %v1464
    %2280 = vmatprep.subr.mxu0 %v1467
    %2281 = vmatpush1.msra.mxu0 %v1466
    %2282 = vmatprep.subr.mxu0 %v1469
    %2283 = vmatpush1.msra.mxu0 %v1468
    %2284 = vmatprep.subr.mxu0 %v1471
    %2285 = vmatpush1.msra.mxu0 %v1470
    %2286 = vmatprep.subr.mxu0 %v1473
    %2287 = vmatpush1.msra.mxu0 %v1472
    %2288 = vmatprep.subr.mxu0 0.0
    %2289 = vmatpush1.msra.mxu0 0.0
    %2290 = vmatprep.subr.mxu0 0.0
    %2291 = vmatpush1.msra.mxu0 0.0
    %2292 = vmatprep.subr.mxu0 0.0
    %2293 = vmatpush1.msra.mxu0 0.0
    %2294 = vmatprep.subr.mxu0 0.0
    %2295 = vmatpush1.msra.mxu0 0.0
    %2296 = vmatprep.subr.mxu0 0.0
    %2297 = vmatpush1.msra.mxu0 0.0
    %2298 = vmatprep.subr.mxu0 0.0
    %2299 = vmatpush1.msra.mxu0 0.0
    %2300 = vmatprep.subr.mxu0 0.0
    %2301 = vmatpush1.msra.mxu0 0.0
    %2302 = vmatprep.subr.mxu0 0.0
    %2303 = vmatpush1.msra.mxu0 0.0
    %2304 = vmatprep.subr.mxu0 0.0
    %2305 = vmatpush1.msra.mxu0 0.0
    %2306 = vmatprep.subr.mxu0 0.0
    %2307 = vmatpush1.msra.mxu0 0.0
    %2308 = vmatprep.subr.mxu0 0.0
    %2309 = vmatpush1.msra.mxu0 0.0
    %2310 = vmatprep.subr.mxu0 0.0
    %2311 = vmatpush1.msra.mxu0 0.0
    %2312 = vmatprep.subr.mxu0 0.0
    %2313 = vmatpush1.msra.mxu0 0.0
    %2314 = vmatprep.subr.mxu0 0.0
    %2315 = vmatpush1.msra.mxu0 0.0
    %2316 = vmatprep.subr.mxu0 0.0
    %2317 = vmatpush1.msra.mxu0 0.0
    %2318 = vmatprep.subr.mxu0 0.0
    %2319 = vmatpush1.msra.mxu0 0.0
    %2320 = vmatprep.subr.mxu0 0.0
    %2321 = vmatpush1.msra.mxu0 0.0
    %2322 = vmatprep.subr.mxu0 0.0
    %2323 = vmatpush1.msra.mxu0 0.0
    %2324 = vmatprep.subr.mxu0 0.0
    %2325 = vmatpush1.msra.mxu0 0.0
    %2326 = vmatprep.subr.mxu0 0.0
    %2327 = vmatpush1.msra.mxu0 0.0
    %2328 = vmatprep.subr.mxu0 0.0
    %2329 = vmatpush1.msra.mxu0 0.0
    %2330 = vmatprep.subr.mxu0 0.0
    %2331 = vmatpush1.msra.mxu0 0.0
    %2332 = vmatprep.subr.mxu0 0.0
    %2333 = vmatpush1.msra.mxu0 0.0
    %2334 = vmatprep.subr.mxu0 0.0
    %2335 = vmatpush1.msra.mxu0 0.0
    %2336 = vmatprep.mubr.f32.mxu0 0.0
    %2337 = vmatmul.mubr.f32.gmra.mrb[0].mxu0 %v2270
    %v2338 = vpop.f32.mrb[0].mxu0
    %v2339 = vadd.f32 0.0, %v2338
    %v2340 = vpop.f32.mrb[0].mxu0
    %v2341 = vadd.f32 0.0, %v2340
    %2342 = vdwg.mxu0
    %v2343 = vadd.f32 %v1448, %v2339
    %v2344 = vadd.f32 %v1420, %v2341
    %v2345 = vxor.u32 %v2343, 2147483648
    %v2346 = vmul.f32 %v2345, 1.442695
    %v2347 = vpow.pop %v2346
    %v2348 = vadd.f32 %v2347, 1.0
    %v2349 = vrcp.pop %v2348
    %v2350 = vmul.f32 1.0, %v2349
    %v2351 = vtanh.pop %v2343
    %v2352 = vmul.f32 %v2350, %v2229
    %2354 = vrot.lane.b32.xlu0 %v2351, 64
    %v2355 = vpop.permute.xlu0 %2354
    %v2357 = vmul.f32 %v2350, %v2355
    %2359 = vrot.lane.b32.xlu0 %v2357, 32
    %v2360 = vpop.permute.xlu0 %2359
    %v2362 = vadd.f32 %v2352, %v2360
    %v2363 = vtanh.pop %v2362
    %2365 = vrot.lane.b32.xlu0 %v2363, 64
    %v2366 = vpop.permute.xlu0 %2365
    %v2368 = vmul.f32 %v2350, %v2366
    %v2369 = vxor.u32 %v2344, 2147483648
    %v2370 = vmul.f32 %v2369, 1.442695
    %v2371 = vpow.pop %v2370
    %v2372 = vadd.f32 %v2371, 1.0
    %v2373 = vrcp.pop %v2372
    %v2374 = vmul.f32 1.0, %v2373
    %v2375 = vtanh.pop %v2344
    %v2376 = vmul.f32 %v2374, %v2253
    %2378 = vrot.lane.b32.xlu0 %v2375, 64
    %v2379 = vpop.permute.xlu0 %2378
    %v2381 = vmul.f32 %v2374, %v2379
    %2383 = vrot.lane.b32.xlu0 %v2381, 32
    %v2384 = vpop.permute.xlu0 %2383
    %v2386 = vadd.f32 %v2376, %v2384
    %v2387 = vtanh.pop %v2386
    %2389 = vrot.lane.b32.xlu0 %v2387, 64
    %v2390 = vpop.permute.xlu0 %2389
    %v2392 = vmul.f32 %v2374, %v2390
    %2394 = vrot.lane.b32.xlu0 %v2368, 32
    %v2395 = vpop.permute.xlu0 %2394
    %2398 = vrot.lane.b32.xlu0 %v2392, 64
    %v2399 = vpop.permute.xlu0 %2398
    %v2401 = vsel %vm67, %v2395, %v2399
    %v2403 = vsel %vm221, %v2401, 0
    %2405 = vmatprep.subr.mxu0 %v1459
    %2406 = vmatpush1.msra.mxu0 %v1458
    %2407 = vmatprep.subr.mxu0 %v1461
    %2408 = vmatpush1.msra.mxu0 %v1460
    %2409 = vmatprep.subr.mxu0 %v1463
    %2410 = vmatpush1.msra.mxu0 %v1462
    %2411 = vmatprep.subr.mxu0 %v1465
    %2412 = vmatpush1.msra.mxu0 %v1464
    %2413 = vmatprep.subr.mxu0 %v1467
    %2414 = vmatpush1.msra.mxu0 %v1466
    %2415 = vmatprep.subr.mxu0 %v1469
    %2416 = vmatpush1.msra.mxu0 %v1468
    %2417 = vmatprep.subr.mxu0 %v1471
    %2418 = vmatpush1.msra.mxu0 %v1470
    %2419 = vmatprep.subr.mxu0 %v1473
    %2420 = vmatpush1.msra.mxu0 %v1472
    %2421 = vmatprep.subr.mxu0 0.0
    %2422 = vmatpush1.msra.mxu0 0.0
    %2423 = vmatprep.subr.mxu0 0.0
    %2424 = vmatpush1.msra.mxu0 0.0
    %2425 = vmatprep.subr.mxu0 0.0
    %2426 = vmatpush1.msra.mxu0 0.0
    %2427 = vmatprep.subr.mxu0 0.0
    %2428 = vmatpush1.msra.mxu0 0.0
    %2429 = vmatprep.subr.mxu0 0.0
    %2430 = vmatpush1.msra.mxu0 0.0
    %2431 = vmatprep.subr.mxu0 0.0
    %2432 = vmatpush1.msra.mxu0 0.0
    %2433 = vmatprep.subr.mxu0 0.0
    %2434 = vmatpush1.msra.mxu0 0.0
    %2435 = vmatprep.subr.mxu0 0.0
    %2436 = vmatpush1.msra.mxu0 0.0
    %2437 = vmatprep.subr.mxu0 0.0
    %2438 = vmatpush1.msra.mxu0 0.0
    %2439 = vmatprep.subr.mxu0 0.0
    %2440 = vmatpush1.msra.mxu0 0.0
    %2441 = vmatprep.subr.mxu0 0.0
    %2442 = vmatpush1.msra.mxu0 0.0
    %2443 = vmatprep.subr.mxu0 0.0
    %2444 = vmatpush1.msra.mxu0 0.0
    %2445 = vmatprep.subr.mxu0 0.0
    %2446 = vmatpush1.msra.mxu0 0.0
    %2447 = vmatprep.subr.mxu0 0.0
    %2448 = vmatpush1.msra.mxu0 0.0
    %2449 = vmatprep.subr.mxu0 0.0
    %2450 = vmatpush1.msra.mxu0 0.0
    %2451 = vmatprep.subr.mxu0 0.0
    %2452 = vmatpush1.msra.mxu0 0.0
    %2453 = vmatprep.subr.mxu0 0.0
    %2454 = vmatpush1.msra.mxu0 0.0
    %2455 = vmatprep.subr.mxu0 0.0
    %2456 = vmatpush1.msra.mxu0 0.0
    %2457 = vmatprep.subr.mxu0 0.0
    %2458 = vmatpush1.msra.mxu0 0.0
    %2459 = vmatprep.subr.mxu0 0.0
    %2460 = vmatpush1.msra.mxu0 0.0
    %2461 = vmatprep.subr.mxu0 0.0
    %2462 = vmatpush1.msra.mxu0 0.0
    %2463 = vmatprep.subr.mxu0 0.0
    %2464 = vmatpush1.msra.mxu0 0.0
    %2465 = vmatprep.subr.mxu0 0.0
    %2466 = vmatpush1.msra.mxu0 0.0
    %2467 = vmatprep.subr.mxu0 0.0
    %2468 = vmatpush1.msra.mxu0 0.0
    %2469 = vmatprep.mubr.f32.mxu0 0.0
    %2470 = vmatmul.mubr.f32.gmra.mrb[0].mxu0 %v2403
    %v2471 = vpop.f32.mrb[0].mxu0
    %v2472 = vadd.f32 0.0, %v2471
    %v2473 = vpop.f32.mrb[0].mxu0
    %v2474 = vadd.f32 0.0, %v2473
    %2475 = vdwg.mxu0
    %v2476 = vadd.f32 %v1454, %v2472
    %v2477 = vadd.f32 %v1414, %v2474
    %v2478 = vxor.u32 %v2476, 2147483648
    %v2479 = vmul.f32 %v2478, 1.442695
    %v2480 = vpow.pop %v2479
    %v2481 = vadd.f32 %v2480, 1.0
    %v2482 = vrcp.pop %v2481
    %v2483 = vmul.f32 1.0, %v2482
    %v2484 = vtanh.pop %v2476
    %v2485 = vmul.f32 %v2483, %v2362
    %2487 = vrot.lane.b32.xlu0 %v2484, 64
    %v2488 = vpop.permute.xlu0 %2487
    %v2490 = vmul.f32 %v2483, %v2488
    %2492 = vrot.lane.b32.xlu0 %v2490, 32
    %v2493 = vpop.permute.xlu0 %2492
    %v2495 = vadd.f32 %v2485, %v2493
    %v2496 = vtanh.pop %v2495
    %2498 = vrot.lane.b32.xlu0 %v2496, 64
    %v2499 = vpop.permute.xlu0 %2498
    %v2501 = vmul.f32 %v2483, %v2499
    %v2502 = vxor.u32 %v2477, 2147483648
    %v2503 = vmul.f32 %v2502, 1.442695
    %v2504 = vpow.pop %v2503
    %v2505 = vadd.f32 %v2504, 1.0
    %v2506 = vrcp.pop %v2505
    %v2507 = vmul.f32 1.0, %v2506
    %v2508 = vtanh.pop %v2477
    %v2509 = vmul.f32 %v2507, %v2386
    %2511 = vrot.lane.b32.xlu0 %v2508, 64
    %v2512 = vpop.permute.xlu0 %2511
    %v2514 = vmul.f32 %v2507, %v2512
    %2516 = vrot.lane.b32.xlu0 %v2514, 32
    %v2517 = vpop.permute.xlu0 %2516
    %v2519 = vadd.f32 %v2509, %v2517
    %v2520 = vtanh.pop %v2519
    %2522 = vrot.lane.b32.xlu0 %v2520, 64
    %v2523 = vpop.permute.xlu0 %2522
    %v2525 = vmul.f32 %v2507, %v2523
    %2527 = vrot.lane.b32.xlu0 %v2525, 64
    %v2528 = vpop.permute.xlu0 %2527
    %v2530 = vsel %vm67, %v1597, %v2528
    %v2531 = vsel %vm67, %v1730, %v2399
    %v2532 = vsel %vm67, %v1863, %v2266
    %v2533 = vsel %vm67, %v1996, %v2133
    %v2534 = vsel %vm67, %v2129, %v2000
    %v2535 = vsel %vm67, %v2262, %v1867
    %v2536 = vsel %vm67, %v2395, %v1734
    %2538 = vrot.lane.b32.xlu0 %v2501, 32
    %v2539 = vpop.permute.xlu0 %2538
    %v2541 = vsel %vm67, %v2539, %v1601
    %v2543 = vrot.slane %v2530, 2
    %v2545 = vmul.f32 %v2530, %v2543
    %v2546 = vadd.f32 %v2530, 0.0
    %v2547 = vadd.f32 %v2545, 0.0
    %v2548 = vsub.f32 %v2530, %v2543
    %v2550 = vrot.slane %v2531, 2
    %v2552 = vmul.f32 %v2531, %v2550
    %v2553 = vadd.f32 %v2546, %v2531
    %v2554 = vadd.f32 %v2547, %v2552
    %v2555 = vmax.f32 %v2530, %v2531
    %v2556 = vsub.f32 %v2531, %v2550
    %v2557 = vmax.f32 %v2548, %v2556
    %v2558 = vmax.f32 %v2545, %v2552
    %v2560 = vrot.slane %v2532, 2
    %v2562 = vmul.f32 %v2532, %v2560
    %v2563 = vadd.f32 %v2553, %v2532
    %v2564 = vadd.f32 %v2554, %v2562
    %v2565 = vmax.f32 %v2555, %v2532
    %v2566 = vsub.f32 %v2532, %v2560
    %v2567 = vmax.f32 %v2557, %v2566
    %v2568 = vmax.f32 %v2558, %v2562
    %v2570 = vrot.slane %v2533, 2
    %v2572 = vmul.f32 %v2533, %v2570
    %v2573 = vadd.f32 %v2563, %v2533
    %v2574 = vadd.f32 %v2564, %v2572
    %v2575 = vmax.f32 %v2565, %v2533
    %v2576 = vsub.f32 %v2533, %v2570
    %v2577 = vmax.f32 %v2567, %v2576
    %v2578 = vmax.f32 %v2568, %v2572
    %v2580 = vrot.slane %v2534, 2
    %v2582 = vmul.f32 %v2534, %v2580
    %v2583 = vadd.f32 %v2573, %v2534
    %v2584 = vadd.f32 %v2574, %v2582
    %v2585 = vmax.f32 %v2575, %v2534
    %v2586 = vsub.f32 %v2534, %v2580
    %v2587 = vmax.f32 %v2577, %v2586
    %v2588 = vmax.f32 %v2578, %v2582
    %v2590 = vrot.slane %v2535, 2
    %v2592 = vmul.f32 %v2535, %v2590
    %v2593 = vadd.f32 %v2583, %v2535
    %v2594 = vadd.f32 %v2584, %v2592
    %v2595 = vmax.f32 %v2585, %v2535
    %v2596 = vsub.f32 %v2535, %v2590
    %v2597 = vmax.f32 %v2587, %v2596
    %v2598 = vmax.f32 %v2588, %v2592
    %v2600 = vrot.slane %v2536, 2
    %v2602 = vmul.f32 %v2536, %v2600
    %v2603 = vadd.f32 %v2593, %v2536
    %v2604 = vadd.f32 %v2594, %v2602
    %v2605 = vmax.f32 %v2595, %v2536
    %v2606 = vsub.f32 %v2536, %v2600
    %v2607 = vmax.f32 %v2597, %v2606
    %v2608 = vmax.f32 %v2598, %v2602
    %v2610 = vrot.slane %v2541, 2
    %v2612 = vmul.f32 %v2541, %v2610
    %v2613 = vadd.f32 %v2603, %v2541
    %v2614 = vadd.f32 %v2604, %v2612
    %v2615 = vmax.f32 %v2605, %v2541
    %v2616 = vsub.f32 %v2541, %v2610
    %v2617 = vmax.f32 %v2607, %v2616
    %v2618 = vmax.f32 %v2608, %v2612
    %v2619 = vmul.f32 %v2613, 0.125
    %v2621 = vrot.slane %v2619, 2
    %v2623 = vsub.f32 %v2619, %v2621
    %v2624 = vmul.f32 %v2614, 0.125
    %2625 = vrot.lane.b32.xlu0 %v2621, 64
    %v2626 = vpop.permute.xlu0 %2625
    %2629 = vrot.lane.b32.xlu0 %v2624, 64
    %v2630 = vpop.permute.xlu0 %2629
    %v2633 = vrot.slane %v2615, 2
    %2634 = vrot.lane.b32.xlu0 %v2633, 64
    %v2635 = vpop.permute.xlu0 %2634
    %2638 = vrot.lane.b32.xlu0 %v2618, 64
    %v2639 = vpop.permute.xlu0 %2638
    %v2641 = vsel %vm221, %v2619, %v2626
    %v2642 = vsel %vm221, %v2623, %v2630
    %v2643 = vsel %vm221, %v2615, %v2635
    %v2644 = vsel %vm221, %v2617, %v2639
    %v2645 = vld [vmem:[%s7] sm:$0xff]
    %v2646 = vld [vmem:[%s7 + $0x8] sm:$0xff]
    %v2647 = vld [vmem:[%s7 + $0x10] sm:$0xff]
    %v2648 = vld [vmem:[%s7 + $0x18] sm:$0xff]
    %v2649 = vld [vmem:[%s7 + $0x20] sm:$0xff]
    %v2650 = vld [vmem:[%s7 + $0x28] sm:$0xff]
    %v2651 = vld [vmem:[%s7 + $0x30] sm:$0xff]
    %v2652 = vld [vmem:[%s7 + $0x38] sm:$0xff]
    %v2653 = vld [vmem:[%s7 + $0x40] sm:$0xff]
    %v2654 = vld [vmem:[%s7 + $0x48] sm:$0xff]
    %v2655 = vld [vmem:[%s7 + $0x50] sm:$0xff]
    %v2656 = vld [vmem:[%s7 + $0x58] sm:$0xff]
    %v2657 = vld [vmem:[%s7 + $0x60] sm:$0xff]
    %v2658 = vld [vmem:[%s7 + $0x68] sm:$0xff]
    %v2659 = vld [vmem:[%s7 + $0x70] sm:$0xff]
    %v2660 = vld [vmem:[%s7 + $0x78] sm:$0xff]
    %v2661 = vld [vmem:[%s7 + $0x80] sm:$0xff]
    %v2662 = vld [vmem:[%s7 + $0x88] sm:$0xff]
    %v2663 = vld [vmem:[%s7 + $0x90] sm:$0xff]
    %v2664 = vld [vmem:[%s7 + $0x98] sm:$0xff]
    %v2665 = vld [vmem:[%s7 + $0xa0] sm:$0xff]
    %v2666 = vld [vmem:[%s7 + $0xa8] sm:$0xff]
    %v2667 = vld [vmem:[%s7 + $0xb0] sm:$0xff]
    %v2668 = vld [vmem:[%s7 + $0xb8] sm:$0xff]
    %v2669 = vld [vmem:[%s7 + $0xc0] sm:$0xff]
    %v2670 = vld [vmem:[%s7 + $0xc8] sm:$0xff]
    %v2671 = vld [vmem:[%s7 + $0xd0] sm:$0xff]
    %v2672 = vld [vmem:[%s7 + $0xd8] sm:$0xff]
    %v2673 = vld [vmem:[%s7 + $0xe0] sm:$0xff]
    %v2674 = vld [vmem:[%s7 + $0xe8] sm:$0xff]
    %v2675 = vld [vmem:[%s7 + $0xf0] sm:$0xff]
    %v2676 = vld [vmem:[%s7 + $0xf8] sm:$0xff]
    %v2677 = vld [vmem:[%s7 + $0x100] sm:$0xff]
    %v2678 = vld [vmem:[%s7 + $0x108] sm:$0xff]
    %v2679 = vld [vmem:[%s7 + $0x110] sm:$0xff]
    %v2680 = vld [vmem:[%s7 + $0x118] sm:$0xff]
    %v2681 = vld [vmem:[%s7 + $0x120] sm:$0xff]
    %v2682 = vld [vmem:[%s7 + $0x128] sm:$0xff]
    %v2683 = vld [vmem:[%s7 + $0x130] sm:$0xff]
    %v2684 = vld [vmem:[%s7 + $0x138] sm:$0xff]
    %v2685 = vld [vmem:[%s7 + $0x140] sm:$0xff]
    %v2686 = vld [vmem:[%s7 + $0x148] sm:$0xff]
    %v2687 = vld [vmem:[%s7 + $0x150] sm:$0xff]
    %v2688 = vld [vmem:[%s7 + $0x158] sm:$0xff]
    %v2689 = vld [vmem:[%s7 + $0x160] sm:$0xff]
    %v2690 = vld [vmem:[%s7 + $0x168] sm:$0xff]
    %v2691 = vld [vmem:[%s7 + $0x170] sm:$0xff]
    %v2692 = vld [vmem:[%s7 + $0x178] sm:$0xff]
    %v2693 = vld [vmem:[%s7 + $0x180] sm:$0xff]
    %v2694 = vld [vmem:[%s7 + $0x188] sm:$0xff]
    %v2695 = vld [vmem:[%s7 + $0x190] sm:$0xff]
    %v2696 = vld [vmem:[%s7 + $0x198] sm:$0xff]
    %v2697 = vld [vmem:[%s7 + $0x1a0] sm:$0xff]
    %v2698 = vld [vmem:[%s7 + $0x1a8] sm:$0xff]
    %v2699 = vld [vmem:[%s7 + $0x1b0] sm:$0xff]
    %v2700 = vld [vmem:[%s7 + $0x1b8] sm:$0xff]
    %v2701 = vld [vmem:[%s7 + $0x1c0] sm:$0xff]
    %v2702 = vld [vmem:[%s7 + $0x1c8] sm:$0xff]
    %v2703 = vld [vmem:[%s7 + $0x1d0] sm:$0xff]
    %v2704 = vld [vmem:[%s7 + $0x1d8] sm:$0xff]
    %v2705 = vld [vmem:[%s7 + $0x1e0] sm:$0xff]
    %v2706 = vld [vmem:[%s7 + $0x1e8] sm:$0xff]
    %v2707 = vld [vmem:[%s7 + $0x1f0] sm:$0xff]
    %v2708 = vld [vmem:[%s7 + $0x1f8] sm:$0xff]
    %v2709 = vld [vmem:[%s8] sm:$0x1]
    %v2711 = vlaneseq
    %v2712 = vshrl.u32 %v2711, 7
    %v2713 = vsub.s32 0, %v2712
    %v2714 = vrot.slane %v2709, %v2713
    %2716 = vmatprep.subr.mxu0 0.0
    %2717 = vmatpush1.msra.mxu0 %v2645
    %2718 = vmatprep.subr.mxu0 0.0
    %2719 = vmatpush1.msra.mxu0 %v2646
    %2720 = vmatprep.subr.mxu0 0.0
    %2721 = vmatpush1.msra.mxu0 %v2647
    %2722 = vmatprep.subr.mxu0 0.0
    %2723 = vmatpush1.msra.mxu0 %v2648
    %2724 = vmatprep.subr.mxu0 0.0
    %2725 = vmatpush1.msra.mxu0 %v2649
    %2726 = vmatprep.subr.mxu0 0.0
    %2727 = vmatpush1.msra.mxu0 %v2650
    %2728 = vmatprep.subr.mxu0 0.0
    %2729 = vmatpush1.msra.mxu0 %v2651
    %2730 = vmatprep.subr.mxu0 0.0
    %2731 = vmatpush1.msra.mxu0 %v2652
    %2732 = vmatprep.subr.mxu0 0.0
    %2733 = vmatpush1.msra.mxu0 %v2653
    %2734 = vmatprep.subr.mxu0 0.0
    %2735 = vmatpush1.msra.mxu0 %v2654
    %2736 = vmatprep.subr.mxu0 0.0
    %2737 = vmatpush1.msra.mxu0 %v2655
    %2738 = vmatprep.subr.mxu0 0.0
    %2739 = vmatpush1.msra.mxu0 %v2656
    %2740 = vmatprep.subr.mxu0 0.0
    %2741 = vmatpush1.msra.mxu0 %v2657
    %2742 = vmatprep.subr.mxu0 0.0
    %2743 = vmatpush1.msra.mxu0 %v2658
    %2744 = vmatprep.subr.mxu0 0.0
    %2745 = vmatpush1.msra.mxu0 %v2659
    %2746 = vmatprep.subr.mxu0 0.0
    %2747 = vmatpush1.msra.mxu0 %v2660
    %2748 = vmatprep.subr.mxu0 0.0
    %2749 = vmatpush1.msra.mxu0 %v2661
    %2750 = vmatprep.subr.mxu0 0.0
    %2751 = vmatpush1.msra.mxu0 %v2662
    %2752 = vmatprep.subr.mxu0 0.0
    %2753 = vmatpush1.msra.mxu0 %v2663
    %2754 = vmatprep.subr.mxu0 0.0
    %2755 = vmatpush1.msra.mxu0 %v2664
    %2756 = vmatprep.subr.mxu0 0.0
    %2757 = vmatpush1.msra.mxu0 %v2665
    %2758 = vmatprep.subr.mxu0 0.0
    %2759 = vmatpush1.msra.mxu0 %v2666
    %2760 = vmatprep.subr.mxu0 0.0
    %2761 = vmatpush1.msra.mxu0 %v2667
    %2762 = vmatprep.subr.mxu0 0.0
    %2763 = vmatpush1.msra.mxu0 %v2668
    %2764 = vmatprep.subr.mxu0 0.0
    %2765 = vmatpush1.msra.mxu0 %v2669
    %2766 = vmatprep.subr.mxu0 0.0
    %2767 = vmatpush1.msra.mxu0 %v2670
    %2768 = vmatprep.subr.mxu0 0.0
    %2769 = vmatpush1.msra.mxu0 %v2671
    %2770 = vmatprep.subr.mxu0 0.0
    %2771 = vmatpush1.msra.mxu0 %v2672
    %2772 = vmatprep.subr.mxu0 0.0
    %2773 = vmatpush1.msra.mxu0 %v2673
    %2774 = vmatprep.subr.mxu0 0.0
    %2775 = vmatpush1.msra.mxu0 %v2674
    %2776 = vmatprep.subr.mxu0 0.0
    %2777 = vmatpush1.msra.mxu0 %v2675
    %2778 = vmatprep.subr.mxu0 0.0
    %2779 = vmatpush1.msra.mxu0 %v2676
    %2780 = vmatprep.mubr.f32.mxu0 %v2642
    %2781 = vmatmul.mubr.f32.gmra.mrb[0].mxu0 %v2641
    %v2782 = vpop.f32.mrb[0].mxu0
    %v2783 = vadd.f32 %v2714, %v2782
    %v2784 = vpop.f32.mrb[0].mxu0
    %2785 = vdwg.mxu0
    %2786 = vmatprep.subr.mxu0 0.0
    %2787 = vmatpush1.msra.mxu0 %v2677
    %2788 = vmatprep.subr.mxu0 0.0
    %2789 = vmatpush1.msra.mxu0 %v2678
    %2790 = vmatprep.subr.mxu0 0.0
    %2791 = vmatpush1.msra.mxu0 %v2679
    %2792 = vmatprep.subr.mxu0 0.0
    %2793 = vmatpush1.msra.mxu0 %v2680
    %2794 = vmatprep.subr.mxu0 0.0
    %2795 = vmatpush1.msra.mxu0 %v2681
    %2796 = vmatprep.subr.mxu0 0.0
    %2797 = vmatpush1.msra.mxu0 %v2682
    %2798 = vmatprep.subr.mxu0 0.0
    %2799 = vmatpush1.msra.mxu0 %v2683
    %2800 = vmatprep.subr.mxu0 0.0
    %2801 = vmatpush1.msra.mxu0 %v2684
    %2802 = vmatprep.subr.mxu0 0.0
    %2803 = vmatpush1.msra.mxu0 %v2685
    %2804 = vmatprep.subr.mxu0 0.0
    %2805 = vmatpush1.msra.mxu0 %v2686
    %2806 = vmatprep.subr.mxu0 0.0
    %2807 = vmatpush1.msra.mxu0 %v2687
    %2808 = vmatprep.subr.mxu0 0.0
    %2809 = vmatpush1.msra.mxu0 %v2688
    %2810 = vmatprep.subr.mxu0 0.0
    %2811 = vmatpush1.msra.mxu0 %v2689
    %2812 = vmatprep.subr.mxu0 0.0
    %2813 = vmatpush1.msra.mxu0 %v2690
    %2814 = vmatprep.subr.mxu0 0.0
    %2815 = vmatpush1.msra.mxu0 %v2691
    %2816 = vmatprep.subr.mxu0 0.0
    %2817 = vmatpush1.msra.mxu0 %v2692
    %2818 = vmatprep.subr.mxu0 0.0
    %2819 = vmatpush1.msra.mxu0 %v2693
    %2820 = vmatprep.subr.mxu0 0.0
    %2821 = vmatpush1.msra.mxu0 %v2694
    %2822 = vmatprep.subr.mxu0 0.0
    %2823 = vmatpush1.msra.mxu0 %v2695
    %2824 = vmatprep.subr.mxu0 0.0
    %2825 = vmatpush1.msra.mxu0 %v2696
    %2826 = vmatprep.subr.mxu0 0.0
    %2827 = vmatpush1.msra.mxu0 %v2697
    %2828 = vmatprep.subr.mxu0 0.0
    %2829 = vmatpush1.msra.mxu0 %v2698
    %2830 = vmatprep.subr.mxu0 0.0
    %2831 = vmatpush1.msra.mxu0 %v2699
    %2832 = vmatprep.subr.mxu0 0.0
    %2833 = vmatpush1.msra.mxu0 %v2700
    %2834 = vmatprep.subr.mxu0 0.0
    %2835 = vmatpush1.msra.mxu0 %v2701
    %2836 = vmatprep.subr.mxu0 0.0
    %2837 = vmatpush1.msra.mxu0 %v2702
    %2838 = vmatprep.subr.mxu0 0.0
    %2839 = vmatpush1.msra.mxu0 %v2703
    %2840 = vmatprep.subr.mxu0 0.0
    %2841 = vmatpush1.msra.mxu0 %v2704
    %2842 = vmatprep.subr.mxu0 0.0
    %2843 = vmatpush1.msra.mxu0 %v2705
    %2844 = vmatprep.subr.mxu0 0.0
    %2845 = vmatpush1.msra.mxu0 %v2706
    %2846 = vmatprep.subr.mxu0 0.0
    %2847 = vmatpush1.msra.mxu0 %v2707
    %2848 = vmatprep.subr.mxu0 0.0
    %2849 = vmatpush1.msra.mxu0 %v2708
    %2850 = vmatprep.mubr.f32.mxu0 %v2644
    %2851 = vmatmul.mubr.f32.gmra.mrb[0].mxu0 %v2643
    %v2852 = vpop.f32.mrb[0].mxu0
    %v2853 = vadd.f32 %v2783, %v2852
    %v2854 = vpop.f32.mrb[0].mxu0
    %2855 = vdwg.mxu0
    %v2856 = vtanh.pop %v2853
    %v2857 = vld [vmem:[%s9] sm:$0xff]
    %v2858 = vld [vmem:[%s9 + $0x8] sm:$0xff]
    %v2859 = vld [vmem:[%s9 + $0x10] sm:$0xff]
    %v2860 = vld [vmem:[%s9 + $0x18] sm:$0xff]
    %v2861 = vld [vmem:[%s10] sm:$0x1]
    %v2863 = vlaneseq
    %v2864 = vshrl.u32 %v2863, 7
    %v2865 = vsub.s32 0, %v2864
    %v2866 = vrot.slane %v2861, %v2865
    %v2869 = vsel %vm67, %v2856, 0
    %2871 = vmatprep.subr.mxu0 0.0
    %2872 = vmatpush1.msra.mxu0 %v2857
    %2873 = vmatprep.subr.mxu0 0.0
    %2874 = vmatpush1.msra.mxu0 %v2858
    %2875 = vmatprep.subr.mxu0 0.0
    %2876 = vmatpush1.msra.mxu0 %v2859
    %2877 = vmatprep.subr.mxu0 0.0
    %2878 = vmatpush1.msra.mxu0 %v2860
    %2879 = vmatprep.subr.mxu0 0.0
    %2880 = vmatpush1.msra.mxu0 0.0
    %2881 = vmatprep.subr.mxu0 0.0
    %2882 = vmatpush1.msra.mxu0 0.0
    %2883 = vmatprep.subr.mxu0 0.0
    %2884 = vmatpush1.msra.mxu0 0.0
    %2885 = vmatprep.subr.mxu0 0.0
    %2886 = vmatpush1.msra.mxu0 0.0
    %2887 = vmatprep.subr.mxu0 0.0
    %2888 = vmatpush1.msra.mxu0 0.0
    %2889 = vmatprep.subr.mxu0 0.0
    %2890 = vmatpush1.msra.mxu0 0.0
    %2891 = vmatprep.subr.mxu0 0.0
    %2892 = vmatpush1.msra.mxu0 0.0
    %2893 = vmatprep.subr.mxu0 0.0
    %2894 = vmatpush1.msra.mxu0 0.0
    %2895 = vmatprep.subr.mxu0 0.0
    %2896 = vmatpush1.msra.mxu0 0.0
    %2897 = vmatprep.subr.mxu0 0.0
    %2898 = vmatpush1.msra.mxu0 0.0
    %2899 = vmatprep.subr.mxu0 0.0
    %2900 = vmatpush1.msra.mxu0 0.0
    %2901 = vmatprep.subr.mxu0 0.0
    %2902 = vmatpush1.msra.mxu0 0.0
    %2903 = vmatprep.subr.mxu0 0.0
    %2904 = vmatpush1.msra.mxu0 0.0
    %2905 = vmatprep.subr.mxu0 0.0
    %2906 = vmatpush1.msra.mxu0 0.0
    %2907 = vmatprep.subr.mxu0 0.0
    %2908 = vmatpush1.msra.mxu0 0.0
    %2909 = vmatprep.subr.mxu0 0.0
    %2910 = vmatpush1.msra.mxu0 0.0
    %2911 = vmatprep.subr.mxu0 0.0
    %2912 = vmatpush1.msra.mxu0 0.0
    %2913 = vmatprep.subr.mxu0 0.0
    %2914 = vmatpush1.msra.mxu0 0.0
    %2915 = vmatprep.subr.mxu0 0.0
    %2916 = vmatpush1.msra.mxu0 0.0
    %2917 = vmatprep.subr.mxu0 0.0
    %2918 = vmatpush1.msra.mxu0 0.0
    %2919 = vmatprep.subr.mxu0 0.0
    %2920 = vmatpush1.msra.mxu0 0.0
    %2921 = vmatprep.subr.mxu0 0.0
    %2922 = vmatpush1.msra.mxu0 0.0
    %2923 = vmatprep.subr.mxu0 0.0
    %2924 = vmatpush1.msra.mxu0 0.0
    %2925 = vmatprep.subr.mxu0 0.0
    %2926 = vmatpush1.msra.mxu0 0.0
    %2927 = vmatprep.subr.mxu0 0.0
    %2928 = vmatpush1.msra.mxu0 0.0
    %2929 = vmatprep.subr.mxu0 0.0
    %2930 = vmatpush1.msra.mxu0 0.0
    %2931 = vmatprep.subr.mxu0 0.0
    %2932 = vmatpush1.msra.mxu0 0.0
    %2933 = vmatprep.subr.mxu0 0.0
    %2934 = vmatpush1.msra.mxu0 0.0
    %2935 = vmatprep.mubr.f32.mxu0 0.0
    %2936 = vmatmul.mubr.f32.gmra.mrb[0].mxu0 %v2869
    %v2937 = vpop.f32.mrb[0].mxu0
    %v2938 = vadd.f32 %v2866, %v2937
    %v2939 = vpop.f32.mrb[0].mxu0
    %2940 = vdwg.mxu0
    %vm2941 = vcmask 17408
    %v2942 = vsel %vm2941, %v2938, -inf
    %2943 = vmax.xlane.f32.xlu0 %v2942
    %v2944 = vpop.xlane.xlu0 %2943
    %v2945 = vsub.f32 %v2938, %v2944
    %v2946 = vmul.f32 %v2945, 1.442695
    %v2947 = vpow.pop %v2946
    %v2948 = vsel %vm2941, %v2947, 0.0
    %2949 = vadd.xlane.f32.xlu0 %v2948
    %v2950 = vpop.xlane.xlu0 %2949
    %v2951 = vrcp.pop %v2950
    %v2952 = vmul.f32 %v2947, %v2951
    %2953 = vst.msk [vmem:[#allocation2] sm:$0x3] %vm2941, %v2952
    // Predicated region
    $region46: #{sia_gru_forward.1} parent=1 // pred_check
      _
    $region47: #{sia_gru_forward.1} parent=1 // pred_check_branch
      %2955 = sbr.rel (0) target = $region49
    $region48: #{sia_gru_forward.1} parent=1 // pred_region
      %s2957 = ssub.s32 32, 32
      %2958 = vsyncadd [#allocation3], %s2957
      %s2960 = sshll.u32 [#allocation2], 4
      %s2961 = int_to_ptr.vmem [resolvable:$true] %s2960
      %2963 = dma.vmem_to_hbm [thread:$0]  %s2961, 32, %s11, [#allocation3]
    $region49: #{sia_gru_forward.1} parent=1 // pred_fallthru
      _
    // Predicated region
    $region50: #{sia_gru_forward.1} parent=1 // pred_check
      _
    $region51: #{sia_gru_forward.1} parent=1 // pred_check_branch
      %2965 = sbr.rel (0) target = $region53
    $region52: #{sia_gru_forward.1} parent=1 // pred_region
      %2966 = dma.done [#allocation3], 32
    $region53: #{sia_gru_forward.1} parent=1 // pred_fallthru
      _
    %2967 = vsyncpa [#allocation3], 1

</llo_original>
